<compile_context>
chip_gen: v6e
topology: v6e:2x2x1
jax: 0.10.0
libtpu: 0.0.40
codegen_flags: <defaults>
</compile_context>

<pallas_src>
import numpy as np
import jax
import jax.numpy as jnp
from jax.experimental import pallas as pl
from jax.experimental.pallas import tpu as pltpu

P = 9                     # 3x3 board positions, row-major flatten
OUT_W = 16                # output lanes: [0:9]=policy, [9]=value, [10:16]=pad
MAX_TILE_N = 256          # per-step batch tile: v5e-VMEM-safe, multi-step on v7x for N>=512
VMEM_LIMIT_BYTES = 32 * 1024 * 1024   # weights (~3.7 MiB dbl-buf) + acts (~4 MiB) + slack
HIGH = jax.lax.Precision.HIGHEST      # reference only


# ----------------------------- Pallas kernel -----------------------------

def net_kernel(x_ref,
               g1_ref, b1_ref,
               g2_ref, b2_ref,
               g3_ref, b3_ref,
               gh_ref, bh_ref,
               wo_ref, bo_ref,
               out_ref):
    """x_ref: (TN, 18) bf16.  g*/wo: bf16 weights.  b*: (1, K) f32 biases.
    out_ref: (TN, 16) f32 = [softmax(policy logits) | value | zeros]."""

    def mm(a, w_ref):
        # bf16 operands, f32 accumulation -> native MXU rate, no f32 emulation.
        return jnp.dot(a, w_ref[...], preferred_element_type=jnp.float32)

    bf16 = jnp.bfloat16

    # conv1/conv2/conv3 (3x3, pad=1) folded into dense matmuls; relu/bias in f32.
    h = jnp.maximum(mm(x_ref[...], g1_ref) + b1_ref[...], 0.0)          # (TN, 288)
    h = jnp.maximum(mm(h.astype(bf16), g2_ref) + b2_ref[...], 0.0)      # (TN, 576)
    h = jnp.maximum(mm(h.astype(bf16), g3_ref) + b3_ref[...], 0.0)      # (TN, 1152)

    # Fused policy+value 1x1 convs: one matmul, cols [0:36]=act, [36:72]=val.
    head = jnp.maximum(mm(h.astype(bf16), gh_ref) + bh_ref[...], 0.0)   # (TN, 72)

    # Fused fc layers: lanes [0:9]=policy logits, [9]=value, [10:16]=0.
    z = mm(head.astype(bf16), wo_ref) + bo_ref[...]                     # (TN, 16)

    # Masked 9-lane softmax. Masking happens BEFORE exp (exp(-inf)=0), so the
    # value lane can never produce inf/NaN; divide uses the EUP slot.
    lane = jax.lax.broadcasted_iota(jnp.int32, z.shape, 1)
    is_logit = lane < 9
    logits = jnp.where(is_logit, z, -jnp.inf)
    m = jnp.max(logits, axis=-1, keepdims=True)
    e = jnp.exp(logits - m)                                             # 0 on masked lanes
    denom = jnp.sum(e, axis=-1, keepdims=True)
    probs = e * pl.reciprocal(denom, approx=True)

    out_ref[...] = jnp.where(is_logit, probs, z)


# ----------------------------- parameter glue (one-time, host-side) -----------------------------

def make_shift_matrices():
    """S[k, p, q] = 1 if output position p reads input position q at kernel
    offset k = di*3 + dj (3x3 conv, padding=1)."""
    S = np.zeros((9, P, P), dtype=np.float32)
    for di in range(3):
        for dj in range(3):
            k = di * 3 + dj
            for i in range(3):
                for j in range(3):
                    si, sj = i + di - 1, j + dj - 1
                    if 0 <= si < 3 and 0 <= sj < 3:
                        S[k, i * 3 + j, si * 3 + sj] = 1.0
    return S


def fold_conv3x3(w_oihw, b_o, S):
    """Fold a 3x3 same-padding conv (torch OIHW) into a dense (P*Cin, P*Cout)
    matrix acting on position-major flattened activations."""
    w = np.asarray(w_oihw, dtype=np.float32)
    b = np.asarray(b_o, dtype=np.float32)
    cout, cin = w.shape[:2]
    W = np.transpose(w, (2, 3, 1, 0)).reshape(9, cin, cout)          # (k, Cin, Cout)
    G = np.einsum('kpq,kcd->qcpd', S, W).reshape(P * cin, P * cout)  # (9*Cin, 9*Cout)
    return G.astype(np.float32), np.tile(b, P).astype(np.float32)


def fold_conv1x1(w_oihw, b_o):
    """Fold a 1x1 conv into block-diagonal kron(I_9, W)."""
    w = np.asarray(w_oihw, dtype=np.float32)[:, :, 0, 0]   # (Cout, Cin)
    b = np.asarray(b_o, dtype=np.float32)
    G = np.kron(np.eye(P, dtype=np.float32), w.T)           # (9*Cin, 9*Cout)
    return G.astype(np.float32), np.tile(b, P).astype(np.float32)


def permute_fc(w_torch):
    """Torch flattens (N, 4, 3, 3) channel-major (index c*9+p); our layout is
    position-major (index p*4+c). Permute rows and transpose."""
    w = np.asarray(w_torch, dtype=np.float32)               # (out, 36)
    out = w.shape[0]
    return np.transpose(w.reshape(out, 4, 9), (2, 1, 0)).reshape(36, out)


def prepare_params(params):
    """One-time folding of torch-layout params into the kernel's matmul
    operands (pure glue; keep out of the inference hot path)."""
    S = make_shift_matrices()
    G1, b1 = fold_conv3x3(params['conv1_w'], params['conv1_b'], S)
    G2, b2 = fold_conv3x3(params['conv2_w'], params['conv2_b'], S)
    G3, b3 = fold_conv3x3(params['conv3_w'], params['conv3_b'], S)
    Ga, ba = fold_conv1x1(params['act_conv_w'], params['act_conv_b'])
    Gv, bv = fold_conv1x1(params['val_conv_w'], params['val_conv_b'])
    Wfa = permute_fc(params['act_fc_w'])                     # (36, 9)
    bfa = np.asarray(params['act_fc_b'], np.float32)         # (9,)
    Wfv = permute_fc(params['val_fc_w'])                     # (36, 1)
    bfv = np.asarray(params['val_fc_b'], np.float32)         # (1,)

    # Fuse the two 1x1 head convs into one matmul.
    Gh = np.concatenate([Ga, Gv], axis=1)                    # (1152, 72)
    bh = np.concatenate([ba, bv])                            # (72,)

    # Fuse the two fc layers into one lane-padded (72, 16) matmul.
    Wo = np.zeros((72, OUT_W), dtype=np.float32)
    Wo[:36, :9] = Wfa
    Wo[36:, 9] = Wfv[:, 0]
    bo = np.zeros((OUT_W,), dtype=np.float32)
    bo[:9] = bfa
    bo[9] = bfv[0]

    w = lambda a: jnp.asarray(a, dtype=jnp.bfloat16)                    # MXU operands
    r = lambda a: jnp.asarray(a, dtype=jnp.float32).reshape(1, -1)      # f32 biases
    return dict(G1=w(G1), b1=r(b1), G2=w(G2), b2=r(b2), G3=w(G3), b3=r(b3),
                Gh=w(Gh), bh=r(bh), Wo=w(Wo), bo=r(bo))


# ----------------------------- wrapper (jittable hot path) -----------------------------

def net_forward(x_nchw, fp):
    n = x_nchw.shape[0]
    # bf16 packs 16 rows per vreg sublane group: round small batches to 16.
    tile_n = MAX_TILE_N if n >= MAX_TILE_N else max(16, -(-n // 16) * 16)
    n_pad = -(-n // tile_n) * tile_n
    grid = (n_pad // tile_n,)

    # NCHW -> (N, 9*2) position-major / channel-innermost; pad batch; bf16 operands.
    x_flat = jnp.transpose(x_nchw, (0, 2, 3, 1)).reshape(n, P * 2)
    x_flat = jnp.pad(x_flat, ((0, n_pad - n), (0, 0))).astype(jnp.bfloat16)

    ins = [x_flat, fp['G1'], fp['b1'], fp['G2'], fp['b2'], fp['G3'], fp['b3'],
           fp['Gh'], fp['bh'], fp['Wo'], fp['bo']]

    resident = lambda a: pl.BlockSpec(a.shape, lambda i: (0, 0))   # stays in VMEM
    in_specs = ([pl.BlockSpec((tile_n, P * 2), lambda i: (i, 0))]
                + [resident(a) for a in ins[1:]])
    out_specs = pl.BlockSpec((tile_n, OUT_W), lambda i: (i, 0))

    weight_bytes = sum(int(np.prod(a.shape)) * a.dtype.itemsize for a in ins[1:])
    cost = pl.CostEstimate(
        flops=2 * n_pad * (18 * 288 + 288 * 576 + 576 * 1152 + 1152 * 72 + 72 * OUT_W),
        transcendentals=n_pad * OUT_W,
        bytes_accessed=int(x_flat.size) * 2 + weight_bytes + n_pad * OUT_W * 4)

    out = pl.pallas_call(
        net_kernel,
        out_shape=jax.ShapeDtypeStruct((n_pad, OUT_W), jnp.float32),
        grid=grid,
        in_specs=in_specs,
        out_specs=out_specs,
        compiler_params=pltpu.CompilerParams(
            dimension_semantics=("parallel",),
            vmem_limit_bytes=VMEM_LIMIT_BYTES),
        cost_estimate=cost,
    )(*ins)

    act = out[:n, :9]
    val = out[:n, 9:10]
    return act, val


# ----------------------------- pure-JAX reference -----------------------------

def reference_forward(x, p):
    def conv(h, w, b, pad):
        o = jax.lax.conv_general_dilated(
            h, w, (1, 1), [(pad, pad), (pad, pad)],
            dimension_numbers=('NCHW', 'OIHW', 'NCHW'), precision=HIGH)
        return o + b[None, :, None, None]

    h = jax.nn.relu(conv(x, p['conv1_w'], p['conv1_b'], 1))
    h = jax.nn.relu(conv(h, p['conv2_w'], p['conv2_b'], 1))
    h = jax.nn.relu(conv(h, p['conv3_w'], p['conv3_b'], 1))

    a = jax.nn.relu(conv(h, p['act_conv_w'], p['act_conv_b'], 0))
    a = a.reshape(a.shape[0], -1)                      # torch .view(-1, 36)
    logits = jnp.dot(a, p['act_fc_w'].T, precision=HIGH) + p['act_fc_b']
    act = jax.nn.softmax(logits, axis=-1)

    v = jax.nn.relu(conv(h, p['val_conv_w'], p['val_conv_b'], 0))
    v = v.reshape(v.shape[0], -1)
    val = jnp.dot(v, p['val_fc_w'].T, precision=HIGH) + p['val_fc_b']
    return act, val


def init_params(key):
    keys = jax.random.split(key, 14)
    r = lambda k, s: 0.1 * jax.random.normal(k, s, dtype=jnp.float32)
    return dict(
        conv1_w=r(keys[0], (32, 2, 3, 3)),   conv1_b=r(keys[1], (32,)),
        conv2_w=r(keys[2], (64, 32, 3, 3)),  conv2_b=r(keys[3], (64,)),
        conv3_w=r(keys[4], (128, 64, 3, 3)), conv3_b=r(keys[5], (128,)),
        act_conv_w=r(keys[6], (4, 128, 1, 1)), act_conv_b=r(keys[7], (4,)),
        act_fc_w=r(keys[8], (9, 36)),        act_fc_b=r(keys[9], (9,)),
        val_conv_w=r(keys[10], (4, 128, 1, 1)), val_conv_b=r(keys[11], (4,)),
        val_fc_w=r(keys[12], (1, 36)),       val_fc_b=r(keys[13], (1,)),
    )


# ----------------------------- main -----------------------------

if __name__ == "__main__":
    key = jax.random.PRNGKey(0)
    pkey, xkey1, xkey2 = jax.random.split(key, 3)
    params = init_params(pkey)
    folded = prepare_params(params)            # one-time, out of hot path

    forward = jax.jit(net_forward)

    def check(x):
        act, val = forward(x, folded)
        jax.block_until_ready((act, val))
        act_ref, val_ref = reference_forward(x, params)
        n = x.shape[0]
        assert act.shape == (n, 9) and val.shape == (n, 1)
        # bf16 MXU operands (f32 accumulation) vs f32-HIGHEST reference.
        assert np.allclose(np.asarray(act), np.asarray(act_ref), atol=2e-2, rtol=2e-2)
        assert np.allclose(np.asarray(val), np.asarray(val_ref), atol=2e-2, rtol=2e-2)

    # Small batch (tic-tac-toe: 2 planes, 3x3 board) -> single 16-row tile.
    check(jax.random.normal(xkey1, (2, 2, 3, 3), dtype=jnp.float32))
    # Larger batch exercising the multi-step "parallel" grid (grid=(2,)).
    check(jax.random.normal(xkey2, (300, 2, 3, 3), dtype=jnp.float32))

    print("KERNEL_OK")
</pallas_src>

<mosaic_0001>
module attributes {stable_mosaic.version = 11 : i64} {
  func.func @net_kernel(%arg0: i32, %arg1: memref<16x18xbf16, #tpu.memory_space<vmem>>, %arg2: memref<18x288xbf16, #tpu.memory_space<vmem>>, %arg3: memref<1x288xf32, #tpu.memory_space<vmem>>, %arg4: memref<288x576xbf16, #tpu.memory_space<vmem>>, %arg5: memref<1x576xf32, #tpu.memory_space<vmem>>, %arg6: memref<576x1152xbf16, #tpu.memory_space<vmem>>, %arg7: memref<1x1152xf32, #tpu.memory_space<vmem>>, %arg8: memref<1152x72xbf16, #tpu.memory_space<vmem>>, %arg9: memref<1x72xf32, #tpu.memory_space<vmem>>, %arg10: memref<72x16xbf16, #tpu.memory_space<vmem>>, %arg11: memref<1x16xf32, #tpu.memory_space<vmem>>, %arg12: memref<16x16xf32, #tpu.memory_space<vmem>>) attributes {dimension_semantics = [#tpu.dimension_semantics<parallel>], iteration_bounds = array<i64: 1>, scalar_prefetch = 0 : i64, scratch_operands = 0 : i64, tpu.core_type = #tpu.core_type<tc>, window_params = [{transform_indices = @transform_0, window_bounds = array<i64: 16, 18>}, {pipeline_mode = #tpu.pipeline_mode<synchronous>, transform_indices = @transform_1, window_bounds = array<i64: 18, 288>}, {pipeline_mode = #tpu.pipeline_mode<synchronous>, transform_indices = @transform_2, window_bounds = array<i64: 1, 288>}, {pipeline_mode = #tpu.pipeline_mode<synchronous>, transform_indices = @transform_3, window_bounds = array<i64: 288, 576>}, {pipeline_mode = #tpu.pipeline_mode<synchronous>, transform_indices = @transform_4, window_bounds = array<i64: 1, 576>}, {pipeline_mode = #tpu.pipeline_mode<synchronous>, transform_indices = @transform_5, window_bounds = array<i64: 576, 1152>}, {pipeline_mode = #tpu.pipeline_mode<synchronous>, transform_indices = @transform_6, window_bounds = array<i64: 1, 1152>}, {pipeline_mode = #tpu.pipeline_mode<synchronous>, transform_indices = @transform_7, window_bounds = array<i64: 1152, 72>}, {pipeline_mode = #tpu.pipeline_mode<synchronous>, transform_indices = @transform_8, window_bounds = array<i64: 1, 72>}, {pipeline_mode = #tpu.pipeline_mode<synchronous>, transform_indices = @transform_9, window_bounds = array<i64: 72, 16>}, {pipeline_mode = #tpu.pipeline_mode<synchronous>, transform_indices = @transform_10, window_bounds = array<i64: 1, 16>}, {transform_indices = @transform_11, window_bounds = array<i64: 16, 16>}]} {
    %c0 = arith.constant 0 : index
    %c0_0 = arith.constant 0 : index
    %0 = vector.load %arg1[%c0, %c0_0] : memref<16x18xbf16, #tpu.memory_space<vmem>>, vector<16x18xbf16>
    %c0_1 = arith.constant 0 : index
    %c0_2 = arith.constant 0 : index
    %1 = vector.load %arg2[%c0_1, %c0_2] : memref<18x288xbf16, #tpu.memory_space<vmem>>, vector<18x288xbf16>
    %cst = arith.constant dense<0.000000e+00> : vector<16x288xf32>
    %2 = tpu.matmul %0, %1, %cst {dimension_numbers = #tpu.dot_dimension_numbers<[1], [0], [0], [1], [0, 0, 1, 1], [], []>} : vector<16x18xbf16>, vector<18x288xbf16>, vector<16x288xf32> -> vector<16x288xf32>
    %c0_3 = arith.constant 0 : index
    %c0_4 = arith.constant 0 : index
    %3 = vector.load %arg3[%c0_3, %c0_4] : memref<1x288xf32, #tpu.memory_space<vmem>>, vector<1x288xf32>
    %4 = vector.broadcast %3 : vector<1x288xf32> to vector<16x288xf32>
    %5 = arith.addf %2, %4 : vector<16x288xf32>
    %cst_5 = arith.constant 0.000000e+00 : f32
    %6 = vector.broadcast %cst_5 : f32 to vector<16x288xf32>
    %7 = arith.maximumf %5, %6 : vector<16x288xf32>
    %8 = arith.truncf %7 : vector<16x288xf32> to vector<16x288xbf16>
    %c0_6 = arith.constant 0 : index
    %c0_7 = arith.constant 0 : index
    %9 = vector.load %arg4[%c0_6, %c0_7] : memref<288x576xbf16, #tpu.memory_space<vmem>>, vector<288x576xbf16>
    %cst_8 = arith.constant dense<0.000000e+00> : vector<16x576xf32>
    %10 = tpu.matmul %8, %9, %cst_8 {dimension_numbers = #tpu.dot_dimension_numbers<[1], [0], [0], [1], [0, 0, 1, 1], [], []>} : vector<16x288xbf16>, vector<288x576xbf16>, vector<16x576xf32> -> vector<16x576xf32>
    %c0_9 = arith.constant 0 : index
    %c0_10 = arith.constant 0 : index
    %11 = vector.load %arg5[%c0_9, %c0_10] : memref<1x576xf32, #tpu.memory_space<vmem>>, vector<1x576xf32>
    %12 = vector.broadcast %11 : vector<1x576xf32> to vector<16x576xf32>
    %13 = arith.addf %10, %12 : vector<16x576xf32>
    %cst_11 = arith.constant 0.000000e+00 : f32
    %14 = vector.broadcast %cst_11 : f32 to vector<16x576xf32>
    %15 = arith.maximumf %13, %14 : vector<16x576xf32>
    %16 = arith.truncf %15 : vector<16x576xf32> to vector<16x576xbf16>
    %c0_12 = arith.constant 0 : index
    %c0_13 = arith.constant 0 : index
    %17 = vector.load %arg6[%c0_12, %c0_13] : memref<576x1152xbf16, #tpu.memory_space<vmem>>, vector<576x1152xbf16>
    %cst_14 = arith.constant dense<0.000000e+00> : vector<16x1152xf32>
    %18 = tpu.matmul %16, %17, %cst_14 {dimension_numbers = #tpu.dot_dimension_numbers<[1], [0], [0], [1], [0, 0, 1, 1], [], []>} : vector<16x576xbf16>, vector<576x1152xbf16>, vector<16x1152xf32> -> vector<16x1152xf32>
    %c0_15 = arith.constant 0 : index
    %c0_16 = arith.constant 0 : index
    %19 = vector.load %arg7[%c0_15, %c0_16] : memref<1x1152xf32, #tpu.memory_space<vmem>>, vector<1x1152xf32>
    %20 = vector.broadcast %19 : vector<1x1152xf32> to vector<16x1152xf32>
    %21 = arith.addf %18, %20 : vector<16x1152xf32>
    %cst_17 = arith.constant 0.000000e+00 : f32
    %22 = vector.broadcast %cst_17 : f32 to vector<16x1152xf32>
    %23 = arith.maximumf %21, %22 : vector<16x1152xf32>
    %24 = arith.truncf %23 : vector<16x1152xf32> to vector<16x1152xbf16>
    %c0_18 = arith.constant 0 : index
    %c0_19 = arith.constant 0 : index
    %25 = vector.load %arg8[%c0_18, %c0_19] : memref<1152x72xbf16, #tpu.memory_space<vmem>>, vector<1152x72xbf16>
    %cst_20 = arith.constant dense<0.000000e+00> : vector<16x72xf32>
    %26 = tpu.matmul %24, %25, %cst_20 {dimension_numbers = #tpu.dot_dimension_numbers<[1], [0], [0], [1], [0, 0, 1, 1], [], []>} : vector<16x1152xbf16>, vector<1152x72xbf16>, vector<16x72xf32> -> vector<16x72xf32>
    %c0_21 = arith.constant 0 : index
    %c0_22 = arith.constant 0 : index
    %27 = vector.load %arg9[%c0_21, %c0_22] : memref<1x72xf32, #tpu.memory_space<vmem>>, vector<1x72xf32>
    %28 = vector.broadcast %27 : vector<1x72xf32> to vector<16x72xf32>
    %29 = arith.addf %26, %28 : vector<16x72xf32>
    %cst_23 = arith.constant 0.000000e+00 : f32
    %30 = vector.broadcast %cst_23 : f32 to vector<16x72xf32>
    %31 = arith.maximumf %29, %30 : vector<16x72xf32>
    %32 = arith.truncf %31 : vector<16x72xf32> to vector<16x72xbf16>
    %c0_24 = arith.constant 0 : index
    %c0_25 = arith.constant 0 : index
    %33 = vector.load %arg10[%c0_24, %c0_25] : memref<72x16xbf16, #tpu.memory_space<vmem>>, vector<72x16xbf16>
    %cst_26 = arith.constant dense<0.000000e+00> : vector<16x16xf32>
    %34 = tpu.matmul %32, %33, %cst_26 {dimension_numbers = #tpu.dot_dimension_numbers<[1], [0], [0], [1], [0, 0, 1, 1], [], []>} : vector<16x72xbf16>, vector<72x16xbf16>, vector<16x16xf32> -> vector<16x16xf32>
    %c0_27 = arith.constant 0 : index
    %c0_28 = arith.constant 0 : index
    %35 = vector.load %arg11[%c0_27, %c0_28] : memref<1x16xf32, #tpu.memory_space<vmem>>, vector<1x16xf32>
    %36 = vector.broadcast %35 : vector<1x16xf32> to vector<16x16xf32>
    %37 = arith.addf %34, %36 : vector<16x16xf32>
    %38 = tpu.iota {dimensions = array<i32: 1>} : vector<16x16xi32>
    %c9_i32 = arith.constant 9 : i32
    %39 = vector.broadcast %c9_i32 : i32 to vector<16x16xi32>
    %40 = arith.cmpi slt, %38, %39 : vector<16x16xi32>
    %cst_29 = arith.constant 0xFF800000 : f32
    %41 = vector.broadcast %cst_29 : f32 to vector<16x16xf32>
    %42 = arith.select %40, %37, %41 : vector<16x16xi1>, vector<16x16xf32>
    %cst_30 = arith.constant dense<0xFF800000> : vector<16xf32>
    %43 = vector.multi_reduction <maximumf>, %42, %cst_30 [1] : vector<16x16xf32> to vector<16xf32>
    %44 = vector.shape_cast %43 : vector<16xf32> to vector<16x1xf32>
    %45 = vector.broadcast %44 : vector<16x1xf32> to vector<16x16xf32>
    %46 = arith.subf %42, %45 : vector<16x16xf32>
    %47 = math.exp %46 : vector<16x16xf32>
    %cst_31 = arith.constant dense<0.000000e+00> : vector<16xf32>
    %48 = vector.multi_reduction <add>, %47, %cst_31 [1] : vector<16x16xf32> to vector<16xf32>
    %49 = vector.shape_cast %48 : vector<16xf32> to vector<16x1xf32>
    %50 = tpu.reciprocal %49 {approx = true} : vector<16x1xf32> -> vector<16x1xf32>
    %51 = vector.broadcast %50 : vector<16x1xf32> to vector<16x16xf32>
    %52 = arith.mulf %47, %51 : vector<16x16xf32>
    %53 = arith.select %40, %52, %37 : vector<16x16xi1>, vector<16x16xf32>
    %c0_32 = arith.constant 0 : index
    %c0_33 = arith.constant 0 : index
    %54 = vector.load %arg12[%c0_32, %c0_33] : memref<16x16xf32, #tpu.memory_space<vmem>>, vector<16x16xf32>
    tpu.vector_store %arg12[%c0_32, %c0_33], %53 {strides = array<i32>} : memref<16x16xf32, #tpu.memory_space<vmem>>, vector<16x16xf32>,
    return
  }
  func.func @transform_0(%arg0: i32) -> (i32, i32) {
    %c0_i32 = arith.constant 0 : i32
    %c0_i32_0 = arith.constant 0 : i32
    return %arg0, %c0_i32 : i32, i32
  }
  func.func @transform_1(%arg0: i32) -> (i32, i32) {
    %c0_i32 = arith.constant 0 : i32
    %c0_i32_0 = arith.constant 0 : i32
    %c0_i32_1 = arith.constant 0 : i32
    return %c0_i32, %c0_i32_0 : i32, i32
  }
  func.func @transform_2(%arg0: i32) -> (i32, i32) {
    %c0_i32 = arith.constant 0 : i32
    %c0_i32_0 = arith.constant 0 : i32
    %c0_i32_1 = arith.constant 0 : i32
    return %c0_i32, %c0_i32_0 : i32, i32
  }
  func.func @transform_3(%arg0: i32) -> (i32, i32) {
    %c0_i32 = arith.constant 0 : i32
    %c0_i32_0 = arith.constant 0 : i32
    %c0_i32_1 = arith.constant 0 : i32
    return %c0_i32, %c0_i32_0 : i32, i32
  }
  func.func @transform_4(%arg0: i32) -> (i32, i32) {
    %c0_i32 = arith.constant 0 : i32
    %c0_i32_0 = arith.constant 0 : i32
    %c0_i32_1 = arith.constant 0 : i32
    return %c0_i32, %c0_i32_0 : i32, i32
  }
  func.func @transform_5(%arg0: i32) -> (i32, i32) {
    %c0_i32 = arith.constant 0 : i32
    %c0_i32_0 = arith.constant 0 : i32
    %c0_i32_1 = arith.constant 0 : i32
    return %c0_i32, %c0_i32_0 : i32, i32
  }
  func.func @transform_6(%arg0: i32) -> (i32, i32) {
    %c0_i32 = arith.constant 0 : i32
    %c0_i32_0 = arith.constant 0 : i32
    %c0_i32_1 = arith.constant 0 : i32
    return %c0_i32, %c0_i32_0 : i32, i32
  }
  func.func @transform_7(%arg0: i32) -> (i32, i32) {
    %c0_i32 = arith.constant 0 : i32
    %c0_i32_0 = arith.constant 0 : i32
    %c0_i32_1 = arith.constant 0 : i32
    return %c0_i32, %c0_i32_0 : i32, i32
  }
  func.func @transform_8(%arg0: i32) -> (i32, i32) {
    %c0_i32 = arith.constant 0 : i32
    %c0_i32_0 = arith.constant 0 : i32
    %c0_i32_1 = arith.constant 0 : i32
    return %c0_i32, %c0_i32_0 : i32, i32
  }
  func.func @transform_9(%arg0: i32) -> (i32, i32) {
    %c0_i32 = arith.constant 0 : i32
    %c0_i32_0 = arith.constant 0 : i32
    %c0_i32_1 = arith.constant 0 : i32
    return %c0_i32, %c0_i32_0 : i32, i32
  }
  func.func @transform_10(%arg0: i32) -> (i32, i32) {
    %c0_i32 = arith.constant 0 : i32
    %c0_i32_0 = arith.constant 0 : i32
    %c0_i32_1 = arith.constant 0 : i32
    return %c0_i32, %c0_i32_0 : i32, i32
  }
  func.func @transform_11(%arg0: i32) -> (i32, i32) {
    %c0_i32 = arith.constant 0 : i32
    %c0_i32_0 = arith.constant 0 : i32
    return %arg0, %c0_i32 : i32, i32
  }
}

</mosaic_0001>

<llo_original>
// kernel: net_forward.1
$region0: #{net_forward.1}
  #allocation0 [shape = 'u32[]', space=smem, size = 0x4, offset = 0x4, fixed_abs, tag = 'smem constant byte address 0x4 - core index']
  #allocation1 [shape = 'u32[144,128]{1,0:T(1,128)}', space=vmem, size = 0x12000, scoped, tag = 'internal scratch']
  %s0 = inlined_call_operand.vmem [shape: bf16[16,18], index: 0, kind: input, shape index: {}]
  %s1 = inlined_call_operand.hbm [shape: bf16[18,288], index: 1, kind: input, shape index: {}]
  %s2 = inlined_call_operand.hbm [shape: f32[1,288], index: 2, kind: input, shape index: {}]
  %s3 = inlined_call_operand.hbm [shape: bf16[288,576], index: 3, kind: input, shape index: {}]
  %s4 = inlined_call_operand.hbm [shape: f32[1,576], index: 4, kind: input, shape index: {}]
  %s5 = inlined_call_operand.hbm [shape: bf16[576,1152], index: 5, kind: input, shape index: {}]
  %s6 = inlined_call_operand.hbm [shape: f32[1,1152], index: 6, kind: input, shape index: {}]
  %s7 = inlined_call_operand.vmem [shape: bf16[1152,72], index: 7, kind: input, shape index: {}]
  %s8 = inlined_call_operand.hbm [shape: f32[1,72], index: 8, kind: input, shape index: {}]
  %s9 = inlined_call_operand.vmem [shape: bf16[72,16], index: 9, kind: input, shape index: {}]
  %s10 = inlined_call_operand.hbm [shape: f32[1,16], index: 10, kind: input, shape index: {}]
  %s11 = inlined_call_operand.vmem [shape: f32[16,16], index: 11, kind: output, shape index: {}]
  %s12 = sld [smem:[#allocation0]]
  $region86: #{net_forward.1} parent=0
    _
  %s14 = ssub.s32 1, %s12
  %s15 = scalar_select 0, %s14, %s12
  $region1: #{net_forward.1} parent=0
    #allocation2 [shape = 'u8[18432]{0}', space=vmem, size = 0x4800, scoped, tag = 'input window, operand 1, single buffered']
    #allocation3 [shape = 's32[1]{0}', space=sflag, size = 0x4, scoped, tag = 'scoped memory for net_forward.1']
    #allocation4 [shape = 'u8[1536]{0}', space=vmem, size = 0x800, scoped, tag = 'input window, operand 2, single buffered']
    #allocation5 [shape = 's32[1]{0}', space=sflag, size = 0x4, scoped, tag = 'scoped memory for net_forward.1']
    #allocation6 [shape = 'u8[368640]{0}', space=vmem, size = 0x5a000, scoped, tag = 'input window, operand 3, single buffered']
    #allocation7 [shape = 'u8[2560]{0}', space=vmem, size = 0xc00, scoped, tag = 'input window, operand 4, single buffered']
    #allocation8 [shape = 's32[1]{0}', space=sflag, size = 0x4, scoped, tag = 'scoped memory for net_forward.1']
    #allocation9 [shape = 'u8[1327104]{0}', space=vmem, size = 0x144000, scoped, tag = 'input window, operand 5, single buffered']
    #allocation10 [shape = 'u8[4608]{0}', space=vmem, size = 0x1400, scoped, tag = 'input window, operand 6, single buffered']
    #allocation11 [shape = 's32[1]{0}', space=sflag, size = 0x4, scoped, tag = 'scoped memory for net_forward.1']
    #allocation12 [shape = 'u8[512]{0}', space=vmem, size = 0x400, scoped, tag = 'input window, operand 8, single buffered']
    #allocation13 [shape = 'u8[512]{0}', space=vmem, size = 0x400, scoped, tag = 'input window, operand 10, single buffered']
    #allocation14 [shape = 's32[1]{0}', space=sflag, size = 0x4, scoped, tag = 'scoped memory for net_forward.1']
    %16 = vsyncpa [#allocation3], 0
    %17 = vsyncpa [#allocation5], 0
    %18 = vsyncpa [#allocation8], 0
    %19 = vsyncpa [#allocation11], 0
    %20 = vsyncpa [#allocation14], 0
    // Predicated region
    $region2: #{net_forward.1} parent=1 // pred_check
      _
    $region3: #{net_forward.1} parent=1 // pred_check_branch
      %22 = sbr.rel (0) target = $region5
    $region4: #{net_forward.1} parent=1 // pred_region
      _
    $region5: #{net_forward.1} parent=1 // pred_fallthru
      _
    // Predicated region
    $region6: #{net_forward.1} parent=1 // pred_check
      _
    $region7: #{net_forward.1} parent=1 // pred_check_branch
      %24 = sbr.rel (0) target = $region9
    $region8: #{net_forward.1} parent=1 // pred_region
      %s26 = ssub.s32 576, 576
      %27 = vsyncadd [#allocation3], %s26
      %s28 = sshll.u32 [#allocation2], 4
      %s29 = int_to_ptr.vmem [resolvable:$true] %s28
      %34 = dma.hbm_to_vmem [thread:$0]  %s1, 576, %s29, [#allocation3], 192, 192, 12
    $region9: #{net_forward.1} parent=1 // pred_fallthru
      _
    // Predicated region
    $region10: #{net_forward.1} parent=1 // pred_check
      _
    $region11: #{net_forward.1} parent=1 // pred_check_branch
      %36 = sbr.rel (0) target = $region13
    $region12: #{net_forward.1} parent=1 // pred_region
      %s38 = ssub.s32 48, 48
      %39 = vsyncadd [#allocation5], %s38
      %s41 = sshll.u32 [#allocation4], 4
      %s42 = int_to_ptr.vmem [resolvable:$true] %s41
      %44 = dma.hbm_to_vmem [thread:$0]  %s2, 48, %s42, [#allocation5]
    $region13: #{net_forward.1} parent=1 // pred_fallthru
      _
    // Predicated region
    $region14: #{net_forward.1} parent=1 // pred_check
      _
    $region15: #{net_forward.1} parent=1 // pred_check_branch
      %46 = sbr.rel (0) target = $region17
    $region16: #{net_forward.1} parent=1 // pred_region
      %s48 = ssub.s32 11520, 11520
      %49 = vsyncadd [#allocation5], %s48
      %s50 = sshll.u32 [#allocation6], 4
      %s51 = int_to_ptr.vmem [resolvable:$true] %s50
      %56 = dma.hbm_to_vmem [thread:$0]  %s3, 11520, %s51, [#allocation5], 320, 320, 20
    $region17: #{net_forward.1} parent=1 // pred_fallthru
      _
    // Predicated region
    $region18: #{net_forward.1} parent=1 // pred_check
      _
    $region19: #{net_forward.1} parent=1 // pred_check_branch
      %58 = sbr.rel (0) target = $region21
    $region20: #{net_forward.1} parent=1 // pred_region
      %s60 = ssub.s32 80, 80
      %61 = vsyncadd [#allocation8], %s60
      %s63 = sshll.u32 [#allocation7], 4
      %s64 = int_to_ptr.vmem [resolvable:$true] %s63
      %66 = dma.hbm_to_vmem [thread:$0]  %s4, 80, %s64, [#allocation8]
    $region21: #{net_forward.1} parent=1 // pred_fallthru
      _
    // Predicated region
    $region22: #{net_forward.1} parent=1 // pred_check
      _
    $region23: #{net_forward.1} parent=1 // pred_check_branch
      %68 = sbr.rel (0) target = $region25
    $region24: #{net_forward.1} parent=1 // pred_region
      %s70 = ssub.s32 41472, 41472
      %71 = vsyncadd [#allocation8], %s70
      %s72 = sshll.u32 [#allocation9], 4
      %s73 = int_to_ptr.vmem [resolvable:$true] %s72
      %78 = dma.hbm_to_vmem [thread:$0]  %s5, 41472, %s73, [#allocation8], 576, 576, 36
    $region25: #{net_forward.1} parent=1 // pred_fallthru
      _
    // Predicated region
    $region26: #{net_forward.1} parent=1 // pred_check
      _
    $region27: #{net_forward.1} parent=1 // pred_check_branch
      %80 = sbr.rel (0) target = $region29
    $region28: #{net_forward.1} parent=1 // pred_region
      %s82 = ssub.s32 144, 144
      %83 = vsyncadd [#allocation11], %s82
      %s85 = sshll.u32 [#allocation10], 4
      %s86 = int_to_ptr.vmem [resolvable:$true] %s85
      %88 = dma.hbm_to_vmem [thread:$0]  %s6, 144, %s86, [#allocation11]
    $region29: #{net_forward.1} parent=1 // pred_fallthru
      _
    // Predicated region
    $region30: #{net_forward.1} parent=1 // pred_check
      _
    $region31: #{net_forward.1} parent=1 // pred_check_branch
      %90 = sbr.rel (0) target = $region33
    $region32: #{net_forward.1} parent=1 // pred_region
      _
    $region33: #{net_forward.1} parent=1 // pred_fallthru
      _
    // Predicated region
    $region34: #{net_forward.1} parent=1 // pred_check
      _
    $region35: #{net_forward.1} parent=1 // pred_check_branch
      %92 = sbr.rel (0) target = $region37
    $region36: #{net_forward.1} parent=1 // pred_region
      %s94 = ssub.s32 16, 16
      %95 = vsyncadd [#allocation11], %s94
      %s97 = sshll.u32 [#allocation12], 4
      %s98 = int_to_ptr.vmem [resolvable:$true] %s97
      %100 = dma.hbm_to_vmem [thread:$0]  %s8, 16, %s98, [#allocation11]
    $region37: #{net_forward.1} parent=1 // pred_fallthru
      _
    // Predicated region
    $region38: #{net_forward.1} parent=1 // pred_check
      _
    $region39: #{net_forward.1} parent=1 // pred_check_branch
      %102 = sbr.rel (0) target = $region41
    $region40: #{net_forward.1} parent=1 // pred_region
      _
    $region41: #{net_forward.1} parent=1 // pred_fallthru
      _
    // Predicated region
    $region42: #{net_forward.1} parent=1 // pred_check
      _
    $region43: #{net_forward.1} parent=1 // pred_check_branch
      %104 = sbr.rel (0) target = $region45
    $region44: #{net_forward.1} parent=1 // pred_region
      %s106 = ssub.s32 16, 16
      %107 = vsyncadd [#allocation14], %s106
      %s109 = sshll.u32 [#allocation13], 4
      %s110 = int_to_ptr.vmem [resolvable:$true] %s109
      %112 = dma.hbm_to_vmem [thread:$0]  %s10, 16, %s110, [#allocation14]
    $region45: #{net_forward.1} parent=1 // pred_fallthru
      _
    // Predicated region
    $region46: #{net_forward.1} parent=1 // pred_check
      _
    $region47: #{net_forward.1} parent=1 // pred_check_branch
      %114 = sbr.rel (0) target = $region49
    $region48: #{net_forward.1} parent=1 // pred_region
      %115 = dma.done [#allocation3], 576
    $region49: #{net_forward.1} parent=1 // pred_fallthru
      _
    // Predicated region
    $region50: #{net_forward.1} parent=1 // pred_check
      _
    $region51: #{net_forward.1} parent=1 // pred_check_branch
      %117 = sbr.rel (0) target = $region53
    $region52: #{net_forward.1} parent=1 // pred_region
      %118 = dma.done [#allocation5], 48
    $region53: #{net_forward.1} parent=1 // pred_fallthru
      _
    // Predicated region
    $region54: #{net_forward.1} parent=1 // pred_check
      _
    $region55: #{net_forward.1} parent=1 // pred_check_branch
      %120 = sbr.rel (0) target = $region57
    $region56: #{net_forward.1} parent=1 // pred_region
      %121 = dma.done [#allocation5], 11520
    $region57: #{net_forward.1} parent=1 // pred_fallthru
      _
    // Predicated region
    $region58: #{net_forward.1} parent=1 // pred_check
      _
    $region59: #{net_forward.1} parent=1 // pred_check_branch
      %123 = sbr.rel (0) target = $region61
    $region60: #{net_forward.1} parent=1 // pred_region
      %124 = dma.done [#allocation8], 80
    $region61: #{net_forward.1} parent=1 // pred_fallthru
      _
    // Predicated region
    $region62: #{net_forward.1} parent=1 // pred_check
      _
    $region63: #{net_forward.1} parent=1 // pred_check_branch
      %126 = sbr.rel (0) target = $region65
    $region64: #{net_forward.1} parent=1 // pred_region
      %127 = dma.done [#allocation8], 41472
    $region65: #{net_forward.1} parent=1 // pred_fallthru
      _
    // Predicated region
    $region66: #{net_forward.1} parent=1 // pred_check
      _
    $region67: #{net_forward.1} parent=1 // pred_check_branch
      %129 = sbr.rel (0) target = $region69
    $region68: #{net_forward.1} parent=1 // pred_region
      %130 = dma.done [#allocation11], 144
    $region69: #{net_forward.1} parent=1 // pred_fallthru
      _
    // Predicated region
    $region70: #{net_forward.1} parent=1 // pred_check
      _
    $region71: #{net_forward.1} parent=1 // pred_check_branch
      %132 = sbr.rel (0) target = $region73
    $region72: #{net_forward.1} parent=1 // pred_region
      %133 = dma.done [#allocation11], 16
    $region73: #{net_forward.1} parent=1 // pred_fallthru
      _
    // Predicated region
    $region74: #{net_forward.1} parent=1 // pred_check
      _
    $region75: #{net_forward.1} parent=1 // pred_check_branch
      %135 = sbr.rel (0) target = $region77
    $region76: #{net_forward.1} parent=1 // pred_region
      %136 = dma.done [#allocation14], 16
    $region77: #{net_forward.1} parent=1 // pred_fallthru
      _
    %v138 = vld [vmem:[%s0] sm:$0xf]
    %v139 = vld [vmem:[%s0 + $0x4] sm:$0xf]
    %v140 = vld [vmem:[#allocation2] sm:$0xff]
    %v141 = vld [vmem:[#allocation2 + $0x8] sm:$0xf]
    %v142 = vld [vmem:[#allocation2 + $0xc] sm:$0xff]
    %v143 = vld [vmem:[#allocation2 + $0x14] sm:$0xf]
    %v144 = vld [vmem:[#allocation2 + $0x18] sm:$0x11]
    %v145 = vld [vmem:[#allocation2 + $0x20] sm:$0x1]
    %v146 = vld [vmem:[#allocation4] sm:$0x7]
    %v148 = vlaneseq
    %v149 = vshrl.u32 %v148, 7
    %v150 = vsub.s32 0, %v149
    %v151 = vrot.slane %v146, %v150
    %v152 = vlaneseq
    %v153 = vshrl.u32 %v152, 7
    %v154 = vsub.s32 1, %v153
    %v155 = vrot.slane %v146, %v154
    %v156 = vlaneseq
    %v157 = vshrl.u32 %v156, 7
    %v158 = vsub.s32 2, %v157
    %v159 = vrot.slane %v146, %v158
    %v165 = vunpack.c.l.b16 %v138
    %v166 = vunpack.c.l.b16 %v139
    %v167 = vpack.c.b16 %v166, %v165
    %v174 = vunpack.c.l.b16 %v140
    %v175 = vunpack.c.h.b16 %v140
    %v176 = vunpack.c.l.b16 %v141
    %v177 = vunpack.c.l.b16 %v142
    %v178 = vunpack.c.h.b16 %v142
    %v179 = vunpack.c.l.b16 %v143
    %v180 = vunpack.c.l.b16 %v144
    %v181 = vunpack.c.h.b16 %v144
    %v182 = vunpack.c.l.b16 %v145
    %v183 = vpack.c.b16 %v177, %v174
    %v184 = vpack.c.b16 %v178, %v175
    %v185 = vpack.c.b16 %v179, %v176
    %v186 = vpack.c.b16 %v180, %v180
    %v187 = vpack.c.b16 %v181, %v181
    %v188 = vpack.c.b16 %v182, %v182
    %vm192 = vcmask 146432
    %v194 = vsel %vm192, %v167, 0
    %vm196 = vcmask 1040384
    %v198 = vsel %vm196, %v186, 0
    %v201 = vsel %vm196, %v187, 0
    %v204 = vsel %vm196, %v188, 0
    %206 = vmatprep.subr.bf16.mxu0 0
    %207 = vmatpush1.bf16.msra.mxu0 0
    %208 = vmatprep.subr.bf16.mxu0 0
    %209 = vmatpush1.bf16.msra.mxu0 0
    %210 = vmatprep.subr.bf16.mxu0 0
    %211 = vmatpush1.bf16.msra.mxu0 0
    %212 = vmatprep.subr.bf16.mxu0 0
    %213 = vmatpush1.bf16.msra.mxu0 0
    %214 = vmatprep.subr.bf16.mxu0 0
    %215 = vmatpush1.bf16.msra.mxu0 0
    %216 = vmatprep.subr.bf16.mxu0 0
    %217 = vmatpush1.bf16.msra.mxu0 0
    %218 = vmatprep.subr.bf16.mxu0 %v201
    %219 = vmatpush1.bf16.msra.mxu0 %v198
    %220 = vmatprep.subr.bf16.mxu0 %v184
    %221 = vmatpush1.bf16.msra.mxu0 %v183
    %222 = vmatprep.subr.bf16.mxu0 0
    %223 = vmatpush2.bf16.msra.mxu0 0
    %224 = vmatprep.subr.bf16.mxu0 0
    %225 = vmatpush2.bf16.msra.mxu0 0
    %226 = vmatprep.subr.bf16.mxu0 0
    %227 = vmatpush2.bf16.msra.mxu0 0
    %228 = vmatprep.subr.bf16.mxu0 0
    %229 = vmatpush2.bf16.msra.mxu0 0
    %230 = vmatprep.subr.bf16.mxu0 0
    %231 = vmatpush2.bf16.msra.mxu0 0
    %232 = vmatprep.subr.bf16.mxu0 0
    %233 = vmatpush2.bf16.msra.mxu0 0
    %234 = vmatprep.subr.bf16.mxu0 0
    %235 = vmatpush2.bf16.msra.mxu0 0
    %236 = vmatprep.subr.bf16.mxu0 0
    %237 = vmatpush2.bf16.msra.mxu0 0
    %238 = vmatprep.mubr.bf16.mxu0 0
    %239 = vmatmul.mubr.bf16.gmra.mxu0 %v194
    %v240 = vpop.f32.mrf.mxu0
    %v241 = vadd.f32 %v151, %v240
    %v242 = vpop.f32.mrf.mxu0
    %v243 = vadd.f32 %v155, %v242
    %v244 = vpop.f32.mrf.mxu0
    %v245 = vadd.f32 %v151, %v244
    %v246 = vpop.f32.mrf.mxu0
    %v247 = vadd.f32 %v155, %v246
    %248 = vdwg.mxu0
    %249 = vmatprep.subr.bf16.mxu0 0
    %250 = vmatpush1.bf16.msra.mxu0 0
    %251 = vmatprep.subr.bf16.mxu0 0
    %252 = vmatpush1.bf16.msra.mxu0 0
    %253 = vmatprep.subr.bf16.mxu0 0
    %254 = vmatpush1.bf16.msra.mxu0 0
    %255 = vmatprep.subr.bf16.mxu0 0
    %256 = vmatpush1.bf16.msra.mxu0 0
    %257 = vmatprep.subr.bf16.mxu0 0
    %258 = vmatpush1.bf16.msra.mxu0 0
    %259 = vmatprep.subr.bf16.mxu0 0
    %260 = vmatpush1.bf16.msra.mxu0 0
    %261 = vmatprep.subr.bf16.mxu0 0
    %262 = vmatpush1.bf16.msra.mxu0 %v204
    %263 = vmatprep.subr.bf16.mxu0 0
    %264 = vmatpush1.bf16.msra.mxu0 %v185
    %265 = vmatprep.subr.bf16.mxu0 0
    %266 = vmatpush2.bf16.msra.mxu0 0
    %267 = vmatprep.subr.bf16.mxu0 0
    %268 = vmatpush2.bf16.msra.mxu0 0
    %269 = vmatprep.subr.bf16.mxu0 0
    %270 = vmatpush2.bf16.msra.mxu0 0
    %271 = vmatprep.subr.bf16.mxu0 0
    %272 = vmatpush2.bf16.msra.mxu0 0
    %273 = vmatprep.subr.bf16.mxu0 0
    %274 = vmatpush2.bf16.msra.mxu0 0
    %275 = vmatprep.subr.bf16.mxu0 0
    %276 = vmatpush2.bf16.msra.mxu0 0
    %277 = vmatprep.subr.bf16.mxu0 0
    %278 = vmatpush2.bf16.msra.mxu0 0
    %279 = vmatprep.subr.bf16.mxu0 0
    %280 = vmatpush2.bf16.msra.mxu0 0
    %281 = vmatprep.mubr.bf16.mxu0 0
    %282 = vmatmul.mubr.bf16.gmra.mxu0 %v194
    %v283 = vpop.f32.mrf.mxu0
    %v284 = vadd.f32 %v159, %v283
    %v285 = vpop.f32.mrf.mxu0
    %v286 = vpop.f32.mrf.mxu0
    %v287 = vadd.f32 %v159, %v286
    %v288 = vpop.f32.mrf.mxu0
    %289 = vdwg.mxu0
    %v290 = vmax.f32 %v241, 0.0
    %v291 = vmax.f32 %v243, 0.0
    %v292 = vmax.f32 %v284, 0.0
    %v293 = vmax.f32 %v245, 0.0
    %v294 = vmax.f32 %v247, 0.0
    %v295 = vmax.f32 %v287, 0.0
    %v296 = vpack.c.bf16 %v293, %v290
    %v297 = vpack.c.bf16 %v294, %v291
    %v298 = vpack.c.bf16 %v295, %v292
    %v299 = vld [vmem:[#allocation6] sm:$0xff]
    %v300 = vld [vmem:[#allocation6 + $0x8] sm:$0xff]
    %v301 = vld [vmem:[#allocation6 + $0x10] sm:$0xf]
    %v302 = vld [vmem:[#allocation6 + $0x14] sm:$0xff]
    %v303 = vld [vmem:[#allocation6 + $0x1c] sm:$0xff]
    %v304 = vld [vmem:[#allocation6 + $0x24] sm:$0xf]
    %v305 = vld [vmem:[#allocation6 + $0x28] sm:$0xff]
    %v306 = vld [vmem:[#allocation6 + $0x30] sm:$0xff]
    %v307 = vld [vmem:[#allocation6 + $0x38] sm:$0xf]
    %v308 = vld [vmem:[#allocation6 + $0x3c] sm:$0xff]
    %v309 = vld [vmem:[#allocation6 + $0x44] sm:$0xff]
    %v310 = vld [vmem:[#allocation6 + $0x4c] sm:$0xf]
    %v311 = vld [vmem:[#allocation6 + $0x50] sm:$0xff]
    %v312 = vld [vmem:[#allocation6 + $0x58] sm:$0xff]
    %v313 = vld [vmem:[#allocation6 + $0x60] sm:$0xf]
    %v314 = vld [vmem:[#allocation6 + $0x64] sm:$0xff]
    %v315 = vld [vmem:[#allocation6 + $0x6c] sm:$0xff]
    %v316 = vld [vmem:[#allocation6 + $0x74] sm:$0xf]
    %v317 = vld [vmem:[#allocation6 + $0x78] sm:$0xff]
    %v318 = vld [vmem:[#allocation6 + $0x80] sm:$0xff]
    %v319 = vld [vmem:[#allocation6 + $0x88] sm:$0xf]
    %v320 = vld [vmem:[#allocation6 + $0x8c] sm:$0xff]
    %v321 = vld [vmem:[#allocation6 + $0x94] sm:$0xff]
    %v322 = vld [vmem:[#allocation6 + $0x9c] sm:$0xf]
    %v323 = vld [vmem:[#allocation6 + $0xa0] sm:$0xff]
    %v324 = vld [vmem:[#allocation6 + $0xa8] sm:$0xff]
    %v325 = vld [vmem:[#allocation6 + $0xb0] sm:$0xf]
    %v326 = vld [vmem:[#allocation6 + $0xb4] sm:$0xff]
    %v327 = vld [vmem:[#allocation6 + $0xbc] sm:$0xff]
    %v328 = vld [vmem:[#allocation6 + $0xc4] sm:$0xf]
    %v329 = vld [vmem:[#allocation6 + $0xc8] sm:$0xff]
    %v330 = vld [vmem:[#allocation6 + $0xd0] sm:$0xff]
    %v331 = vld [vmem:[#allocation6 + $0xd8] sm:$0xf]
    %v332 = vld [vmem:[#allocation6 + $0xdc] sm:$0xff]
    %v333 = vld [vmem:[#allocation6 + $0xe4] sm:$0xff]
    %v334 = vld [vmem:[#allocation6 + $0xec] sm:$0xf]
    %v335 = vld [vmem:[#allocation6 + $0xf0] sm:$0xff]
    %v336 = vld [vmem:[#allocation6 + $0xf8] sm:$0xff]
    %v337 = vld [vmem:[#allocation6 + $0x100] sm:$0xf]
    %v338 = vld [vmem:[#allocation6 + $0x104] sm:$0xff]
    %v339 = vld [vmem:[#allocation6 + $0x10c] sm:$0xff]
    %v340 = vld [vmem:[#allocation6 + $0x114] sm:$0xf]
    %v341 = vld [vmem:[#allocation6 + $0x118] sm:$0xff]
    %v342 = vld [vmem:[#allocation6 + $0x120] sm:$0xff]
    %v343 = vld [vmem:[#allocation6 + $0x128] sm:$0xf]
    %v344 = vld [vmem:[#allocation6 + $0x12c] sm:$0xff]
    %v345 = vld [vmem:[#allocation6 + $0x134] sm:$0xff]
    %v346 = vld [vmem:[#allocation6 + $0x13c] sm:$0xf]
    %v347 = vld [vmem:[#allocation6 + $0x140] sm:$0xff]
    %v348 = vld [vmem:[#allocation6 + $0x148] sm:$0xff]
    %v349 = vld [vmem:[#allocation6 + $0x150] sm:$0xf]
    %v350 = vld [vmem:[#allocation6 + $0x154] sm:$0xff]
    %v351 = vld [vmem:[#allocation6 + $0x15c] sm:$0xff]
    %v352 = vld [vmem:[#allocation6 + $0x164] sm:$0xf]
    %v353 = vld [vmem:[#allocation6 + $0x168] sm:$0xff]
    %v354 = vld [vmem:[#allocation6 + $0x170] sm:$0xff]
    %v355 = vld [vmem:[#allocation6 + $0x178] sm:$0xf]
    %v356 = vld [vmem:[#allocation6 + $0x17c] sm:$0xff]
    %v357 = vld [vmem:[#allocation6 + $0x184] sm:$0xff]
    %v358 = vld [vmem:[#allocation6 + $0x18c] sm:$0xf]
    %v359 = vld [vmem:[#allocation6 + $0x190] sm:$0xff]
    %v360 = vld [vmem:[#allocation6 + $0x198] sm:$0xff]
    %v361 = vld [vmem:[#allocation6 + $0x1a0] sm:$0xf]
    %v362 = vld [vmem:[#allocation6 + $0x1a4] sm:$0xff]
    %v363 = vld [vmem:[#allocation6 + $0x1ac] sm:$0xff]
    %v364 = vld [vmem:[#allocation6 + $0x1b4] sm:$0xf]
    %v365 = vld [vmem:[#allocation6 + $0x1b8] sm:$0xff]
    %v366 = vld [vmem:[#allocation6 + $0x1c0] sm:$0xff]
    %v367 = vld [vmem:[#allocation6 + $0x1c8] sm:$0xf]
    %v368 = vld [vmem:[#allocation6 + $0x1cc] sm:$0xff]
    %v369 = vld [vmem:[#allocation6 + $0x1d4] sm:$0xff]
    %v370 = vld [vmem:[#allocation6 + $0x1dc] sm:$0xf]
    %v371 = vld [vmem:[#allocation6 + $0x1e0] sm:$0xff]
    %v372 = vld [vmem:[#allocation6 + $0x1e8] sm:$0xff]
    %v373 = vld [vmem:[#allocation6 + $0x1f0] sm:$0xf]
    %v374 = vld [vmem:[#allocation6 + $0x1f4] sm:$0xff]
    %v375 = vld [vmem:[#allocation6 + $0x1fc] sm:$0xff]
    %v376 = vld [vmem:[#allocation6 + $0x204] sm:$0xf]
    %v377 = vld [vmem:[#allocation6 + $0x208] sm:$0xff]
    %v378 = vld [vmem:[#allocation6 + $0x210] sm:$0xff]
    %v379 = vld [vmem:[#allocation6 + $0x218] sm:$0xf]
    %v380 = vld [vmem:[#allocation6 + $0x21c] sm:$0xff]
    %v381 = vld [vmem:[#allocation6 + $0x224] sm:$0xff]
    %v382 = vld [vmem:[#allocation6 + $0x22c] sm:$0xf]
    %v383 = vld [vmem:[#allocation6 + $0x230] sm:$0xff]
    %v384 = vld [vmem:[#allocation6 + $0x238] sm:$0xff]
    %v385 = vld [vmem:[#allocation6 + $0x240] sm:$0xf]
    %v386 = vld [vmem:[#allocation6 + $0x244] sm:$0xff]
    %v387 = vld [vmem:[#allocation6 + $0x24c] sm:$0xff]
    %v388 = vld [vmem:[#allocation6 + $0x254] sm:$0xf]
    %v389 = vld [vmem:[#allocation6 + $0x258] sm:$0xff]
    %v390 = vld [vmem:[#allocation6 + $0x260] sm:$0xff]
    %v391 = vld [vmem:[#allocation6 + $0x268] sm:$0xf]
    %v392 = vld [vmem:[#allocation6 + $0x26c] sm:$0xff]
    %v393 = vld [vmem:[#allocation6 + $0x274] sm:$0xff]
    %v394 = vld [vmem:[#allocation6 + $0x27c] sm:$0xf]
    %v395 = vld [vmem:[#allocation6 + $0x280] sm:$0xff]
    %v396 = vld [vmem:[#allocation6 + $0x288] sm:$0xff]
    %v397 = vld [vmem:[#allocation6 + $0x290] sm:$0xf]
    %v398 = vld [vmem:[#allocation6 + $0x294] sm:$0xff]
    %v399 = vld [vmem:[#allocation6 + $0x29c] sm:$0xff]
    %v400 = vld [vmem:[#allocation6 + $0x2a4] sm:$0xf]
    %v401 = vld [vmem:[#allocation6 + $0x2a8] sm:$0xff]
    %v402 = vld [vmem:[#allocation6 + $0x2b0] sm:$0xff]
    %v403 = vld [vmem:[#allocation6 + $0x2b8] sm:$0xf]
    %v404 = vld [vmem:[#allocation6 + $0x2bc] sm:$0xff]
    %v405 = vld [vmem:[#allocation6 + $0x2c4] sm:$0xff]
    %v406 = vld [vmem:[#allocation6 + $0x2cc] sm:$0xf]
    %v407 = vld [vmem:[#allocation7] sm:$0x1f]
    %v409 = vlaneseq
    %v410 = vshrl.u32 %v409, 7
    %v411 = vsub.s32 0, %v410
    %v412 = vrot.slane %v407, %v411
    %v413 = vlaneseq
    %v414 = vshrl.u32 %v413, 7
    %v415 = vsub.s32 1, %v414
    %v416 = vrot.slane %v407, %v415
    %v417 = vlaneseq
    %v418 = vshrl.u32 %v417, 7
    %v419 = vsub.s32 2, %v418
    %v420 = vrot.slane %v407, %v419
    %v421 = vlaneseq
    %v422 = vshrl.u32 %v421, 7
    %v423 = vsub.s32 3, %v422
    %v424 = vrot.slane %v407, %v423
    %v425 = vlaneseq
    %v426 = vshrl.u32 %v425, 7
    %v427 = vsub.s32 4, %v426
    %v428 = vrot.slane %v407, %v427
    %v542 = vunpack.c.l.b16 %v299
    %v543 = vunpack.c.h.b16 %v299
    %v544 = vunpack.c.l.b16 %v300
    %v545 = vunpack.c.h.b16 %v300
    %v546 = vunpack.c.l.b16 %v301
    %v547 = vunpack.c.l.b16 %v302
    %v548 = vunpack.c.h.b16 %v302
    %v549 = vunpack.c.l.b16 %v303
    %v550 = vunpack.c.h.b16 %v303
    %v551 = vunpack.c.l.b16 %v304
    %v552 = vunpack.c.l.b16 %v305
    %v553 = vunpack.c.h.b16 %v305
    %v554 = vunpack.c.l.b16 %v306
    %v555 = vunpack.c.h.b16 %v306
    %v556 = vunpack.c.l.b16 %v307
    %v557 = vunpack.c.l.b16 %v308
    %v558 = vunpack.c.h.b16 %v308
    %v559 = vunpack.c.l.b16 %v309
    %v560 = vunpack.c.h.b16 %v309
    %v561 = vunpack.c.l.b16 %v310
    %v562 = vunpack.c.l.b16 %v311
    %v563 = vunpack.c.h.b16 %v311
    %v564 = vunpack.c.l.b16 %v312
    %v565 = vunpack.c.h.b16 %v312
    %v566 = vunpack.c.l.b16 %v313
    %v567 = vunpack.c.l.b16 %v314
    %v568 = vunpack.c.h.b16 %v314
    %v569 = vunpack.c.l.b16 %v315
    %v570 = vunpack.c.h.b16 %v315
    %v571 = vunpack.c.l.b16 %v316
    %v572 = vunpack.c.l.b16 %v317
    %v573 = vunpack.c.h.b16 %v317
    %v574 = vunpack.c.l.b16 %v318
    %v575 = vunpack.c.h.b16 %v318
    %v576 = vunpack.c.l.b16 %v319
    %v577 = vunpack.c.l.b16 %v320
    %v578 = vunpack.c.h.b16 %v320
    %v579 = vunpack.c.l.b16 %v321
    %v580 = vunpack.c.h.b16 %v321
    %v581 = vunpack.c.l.b16 %v322
    %v582 = vunpack.c.l.b16 %v323
    %v583 = vunpack.c.h.b16 %v323
    %v584 = vunpack.c.l.b16 %v324
    %v585 = vunpack.c.h.b16 %v324
    %v586 = vunpack.c.l.b16 %v325
    %v587 = vunpack.c.l.b16 %v326
    %v588 = vunpack.c.h.b16 %v326
    %v589 = vunpack.c.l.b16 %v327
    %v590 = vunpack.c.h.b16 %v327
    %v591 = vunpack.c.l.b16 %v328
    %v592 = vunpack.c.l.b16 %v329
    %v593 = vunpack.c.h.b16 %v329
    %v594 = vunpack.c.l.b16 %v330
    %v595 = vunpack.c.h.b16 %v330
    %v596 = vunpack.c.l.b16 %v331
    %v597 = vunpack.c.l.b16 %v332
    %v598 = vunpack.c.h.b16 %v332
    %v599 = vunpack.c.l.b16 %v333
    %v600 = vunpack.c.h.b16 %v333
    %v601 = vunpack.c.l.b16 %v334
    %v602 = vunpack.c.l.b16 %v335
    %v603 = vunpack.c.h.b16 %v335
    %v604 = vunpack.c.l.b16 %v336
    %v605 = vunpack.c.h.b16 %v336
    %v606 = vunpack.c.l.b16 %v337
    %v607 = vunpack.c.l.b16 %v338
    %v608 = vunpack.c.h.b16 %v338
    %v609 = vunpack.c.l.b16 %v339
    %v610 = vunpack.c.h.b16 %v339
    %v611 = vunpack.c.l.b16 %v340
    %v612 = vunpack.c.l.b16 %v341
    %v613 = vunpack.c.h.b16 %v341
    %v614 = vunpack.c.l.b16 %v342
    %v615 = vunpack.c.h.b16 %v342
    %v616 = vunpack.c.l.b16 %v343
    %v617 = vunpack.c.l.b16 %v344
    %v618 = vunpack.c.h.b16 %v344
    %v619 = vunpack.c.l.b16 %v345
    %v620 = vunpack.c.h.b16 %v345
    %v621 = vunpack.c.l.b16 %v346
    %v622 = vunpack.c.l.b16 %v347
    %v623 = vunpack.c.h.b16 %v347
    %v624 = vunpack.c.l.b16 %v348
    %v625 = vunpack.c.h.b16 %v348
    %v626 = vunpack.c.l.b16 %v349
    %v627 = vunpack.c.l.b16 %v350
    %v628 = vunpack.c.h.b16 %v350
    %v629 = vunpack.c.l.b16 %v351
    %v630 = vunpack.c.h.b16 %v351
    %v631 = vunpack.c.l.b16 %v352
    %v632 = vunpack.c.l.b16 %v353
    %v633 = vunpack.c.h.b16 %v353
    %v634 = vunpack.c.l.b16 %v354
    %v635 = vunpack.c.h.b16 %v354
    %v636 = vunpack.c.l.b16 %v355
    %v637 = vunpack.c.l.b16 %v356
    %v638 = vunpack.c.h.b16 %v356
    %v639 = vunpack.c.l.b16 %v357
    %v640 = vunpack.c.h.b16 %v357
    %v641 = vunpack.c.l.b16 %v358
    %v642 = vunpack.c.l.b16 %v359
    %v643 = vunpack.c.h.b16 %v359
    %v644 = vunpack.c.l.b16 %v360
    %v645 = vunpack.c.h.b16 %v360
    %v646 = vunpack.c.l.b16 %v361
    %v647 = vunpack.c.l.b16 %v362
    %v648 = vunpack.c.h.b16 %v362
    %v649 = vunpack.c.l.b16 %v363
    %v650 = vunpack.c.h.b16 %v363
    %v651 = vunpack.c.l.b16 %v364
    %v652 = vunpack.c.l.b16 %v365
    %v653 = vunpack.c.h.b16 %v365
    %v654 = vunpack.c.l.b16 %v366
    %v655 = vunpack.c.h.b16 %v366
    %v656 = vunpack.c.l.b16 %v367
    %v657 = vunpack.c.l.b16 %v368
    %v658 = vunpack.c.h.b16 %v368
    %v659 = vunpack.c.l.b16 %v369
    %v660 = vunpack.c.h.b16 %v369
    %v661 = vunpack.c.l.b16 %v370
    %v662 = vunpack.c.l.b16 %v371
    %v663 = vunpack.c.h.b16 %v371
    %v664 = vunpack.c.l.b16 %v372
    %v665 = vunpack.c.h.b16 %v372
    %v666 = vunpack.c.l.b16 %v373
    %v667 = vunpack.c.l.b16 %v374
    %v668 = vunpack.c.h.b16 %v374
    %v669 = vunpack.c.l.b16 %v375
    %v670 = vunpack.c.h.b16 %v375
    %v671 = vunpack.c.l.b16 %v376
    %v672 = vunpack.c.l.b16 %v377
    %v673 = vunpack.c.h.b16 %v377
    %v674 = vunpack.c.l.b16 %v378
    %v675 = vunpack.c.h.b16 %v378
    %v676 = vunpack.c.l.b16 %v379
    %v677 = vunpack.c.l.b16 %v380
    %v678 = vunpack.c.h.b16 %v380
    %v679 = vunpack.c.l.b16 %v381
    %v680 = vunpack.c.h.b16 %v381
    %v681 = vunpack.c.l.b16 %v382
    %v682 = vunpack.c.l.b16 %v383
    %v683 = vunpack.c.h.b16 %v383
    %v684 = vunpack.c.l.b16 %v384
    %v685 = vunpack.c.h.b16 %v384
    %v686 = vunpack.c.l.b16 %v385
    %v687 = vunpack.c.l.b16 %v386
    %v688 = vunpack.c.h.b16 %v386
    %v689 = vunpack.c.l.b16 %v387
    %v690 = vunpack.c.h.b16 %v387
    %v691 = vunpack.c.l.b16 %v388
    %v692 = vunpack.c.l.b16 %v389
    %v693 = vunpack.c.h.b16 %v389
    %v694 = vunpack.c.l.b16 %v390
    %v695 = vunpack.c.h.b16 %v390
    %v696 = vunpack.c.l.b16 %v391
    %v697 = vunpack.c.l.b16 %v392
    %v698 = vunpack.c.h.b16 %v392
    %v699 = vunpack.c.l.b16 %v393
    %v700 = vunpack.c.h.b16 %v393
    %v701 = vunpack.c.l.b16 %v394
    %v702 = vunpack.c.l.b16 %v395
    %v703 = vunpack.c.h.b16 %v395
    %v704 = vunpack.c.l.b16 %v396
    %v705 = vunpack.c.h.b16 %v396
    %v706 = vunpack.c.l.b16 %v397
    %v707 = vunpack.c.l.b16 %v398
    %v708 = vunpack.c.h.b16 %v398
    %v709 = vunpack.c.l.b16 %v399
    %v710 = vunpack.c.h.b16 %v399
    %v711 = vunpack.c.l.b16 %v400
    %v712 = vunpack.c.l.b16 %v401
    %v713 = vunpack.c.h.b16 %v401
    %v714 = vunpack.c.l.b16 %v402
    %v715 = vunpack.c.h.b16 %v402
    %v716 = vunpack.c.l.b16 %v403
    %v717 = vunpack.c.l.b16 %v404
    %v718 = vunpack.c.h.b16 %v404
    %v719 = vunpack.c.l.b16 %v405
    %v720 = vunpack.c.h.b16 %v405
    %v721 = vunpack.c.l.b16 %v406
    %v722 = vpack.c.b16 %v547, %v542
    %v723 = vpack.c.b16 %v548, %v543
    %v724 = vpack.c.b16 %v549, %v544
    %v725 = vpack.c.b16 %v550, %v545
    %v726 = vpack.c.b16 %v551, %v546
    %v727 = vpack.c.b16 %v557, %v552
    %v728 = vpack.c.b16 %v558, %v553
    %v729 = vpack.c.b16 %v559, %v554
    %v730 = vpack.c.b16 %v560, %v555
    %v731 = vpack.c.b16 %v561, %v556
    %v732 = vpack.c.b16 %v567, %v562
    %v733 = vpack.c.b16 %v568, %v563
    %v734 = vpack.c.b16 %v569, %v564
    %v735 = vpack.c.b16 %v570, %v565
    %v736 = vpack.c.b16 %v571, %v566
    %v737 = vpack.c.b16 %v577, %v572
    %v738 = vpack.c.b16 %v578, %v573
    %v739 = vpack.c.b16 %v579, %v574
    %v740 = vpack.c.b16 %v580, %v575
    %v741 = vpack.c.b16 %v581, %v576
    %v742 = vpack.c.b16 %v587, %v582
    %v743 = vpack.c.b16 %v588, %v583
    %v744 = vpack.c.b16 %v589, %v584
    %v745 = vpack.c.b16 %v590, %v585
    %v746 = vpack.c.b16 %v591, %v586
    %v747 = vpack.c.b16 %v597, %v592
    %v748 = vpack.c.b16 %v598, %v593
    %v749 = vpack.c.b16 %v599, %v594
    %v750 = vpack.c.b16 %v600, %v595
    %v751 = vpack.c.b16 %v601, %v596
    %v752 = vpack.c.b16 %v607, %v602
    %v753 = vpack.c.b16 %v608, %v603
    %v754 = vpack.c.b16 %v609, %v604
    %v755 = vpack.c.b16 %v610, %v605
    %v756 = vpack.c.b16 %v611, %v606
    %v757 = vpack.c.b16 %v617, %v612
    %v758 = vpack.c.b16 %v618, %v613
    %v759 = vpack.c.b16 %v619, %v614
    %v760 = vpack.c.b16 %v620, %v615
    %v761 = vpack.c.b16 %v621, %v616
    %v762 = vpack.c.b16 %v627, %v622
    %v763 = vpack.c.b16 %v628, %v623
    %v764 = vpack.c.b16 %v629, %v624
    %v765 = vpack.c.b16 %v630, %v625
    %v766 = vpack.c.b16 %v631, %v626
    %v767 = vpack.c.b16 %v637, %v632
    %v768 = vpack.c.b16 %v638, %v633
    %v769 = vpack.c.b16 %v639, %v634
    %v770 = vpack.c.b16 %v640, %v635
    %v771 = vpack.c.b16 %v641, %v636
    %v772 = vpack.c.b16 %v647, %v642
    %v773 = vpack.c.b16 %v648, %v643
    %v774 = vpack.c.b16 %v649, %v644
    %v775 = vpack.c.b16 %v650, %v645
    %v776 = vpack.c.b16 %v651, %v646
    %v777 = vpack.c.b16 %v657, %v652
    %v778 = vpack.c.b16 %v658, %v653
    %v779 = vpack.c.b16 %v659, %v654
    %v780 = vpack.c.b16 %v660, %v655
    %v781 = vpack.c.b16 %v661, %v656
    %v782 = vpack.c.b16 %v667, %v662
    %v783 = vpack.c.b16 %v668, %v663
    %v784 = vpack.c.b16 %v669, %v664
    %v785 = vpack.c.b16 %v670, %v665
    %v786 = vpack.c.b16 %v671, %v666
    %v787 = vpack.c.b16 %v677, %v672
    %v788 = vpack.c.b16 %v678, %v673
    %v789 = vpack.c.b16 %v679, %v674
    %v790 = vpack.c.b16 %v680, %v675
    %v791 = vpack.c.b16 %v681, %v676
    %v792 = vpack.c.b16 %v687, %v682
    %v793 = vpack.c.b16 %v688, %v683
    %v794 = vpack.c.b16 %v689, %v684
    %v795 = vpack.c.b16 %v690, %v685
    %v796 = vpack.c.b16 %v691, %v686
    %v797 = vpack.c.b16 %v697, %v692
    %v798 = vpack.c.b16 %v698, %v693
    %v799 = vpack.c.b16 %v699, %v694
    %v800 = vpack.c.b16 %v700, %v695
    %v801 = vpack.c.b16 %v701, %v696
    %v802 = vpack.c.b16 %v707, %v702
    %v803 = vpack.c.b16 %v708, %v703
    %v804 = vpack.c.b16 %v709, %v704
    %v805 = vpack.c.b16 %v710, %v705
    %v806 = vpack.c.b16 %v711, %v706
    %v807 = vpack.c.b16 %v717, %v712
    %v808 = vpack.c.b16 %v718, %v713
    %v809 = vpack.c.b16 %v719, %v714
    %v810 = vpack.c.b16 %v720, %v715
    %v811 = vpack.c.b16 %v721, %v716
    %vm902 = vcmask 261120
    %v904 = vsel %vm902, %v298, 0
    %906 = vmatprep.subr.bf16.mxu0 %v758
    %907 = vmatpush1.bf16.msra.mxu0 %v757
    %908 = vmatprep.subr.bf16.mxu0 %v753
    %909 = vmatpush1.bf16.msra.mxu0 %v752
    %910 = vmatprep.subr.bf16.mxu0 %v748
    %911 = vmatpush1.bf16.msra.mxu0 %v747
    %912 = vmatprep.subr.bf16.mxu0 %v743
    %913 = vmatpush1.bf16.msra.mxu0 %v742
    %914 = vmatprep.subr.bf16.mxu0 %v738
    %915 = vmatpush1.bf16.msra.mxu0 %v737
    %916 = vmatprep.subr.bf16.mxu0 %v733
    %917 = vmatpush1.bf16.msra.mxu0 %v732
    %918 = vmatprep.subr.bf16.mxu0 %v728
    %919 = vmatpush1.bf16.msra.mxu0 %v727
    %920 = vmatprep.subr.bf16.mxu0 %v723
    %921 = vmatpush1.bf16.msra.mxu0 %v722
    %922 = vmatprep.subr.bf16.mxu0 %v798
    %923 = vmatpush2.bf16.msra.mxu0 %v797
    %924 = vmatprep.subr.bf16.mxu0 %v793
    %925 = vmatpush2.bf16.msra.mxu0 %v792
    %926 = vmatprep.subr.bf16.mxu0 %v788
    %927 = vmatpush2.bf16.msra.mxu0 %v787
    %928 = vmatprep.subr.bf16.mxu0 %v783
    %929 = vmatpush2.bf16.msra.mxu0 %v782
    %930 = vmatprep.subr.bf16.mxu0 %v778
    %931 = vmatpush2.bf16.msra.mxu0 %v777
    %932 = vmatprep.subr.bf16.mxu0 %v773
    %933 = vmatpush2.bf16.msra.mxu0 %v772
    %934 = vmatprep.subr.bf16.mxu0 %v768
    %935 = vmatpush2.bf16.msra.mxu0 %v767
    %936 = vmatprep.subr.bf16.mxu0 %v763
    %937 = vmatpush2.bf16.msra.mxu0 %v762
    %938 = vmatprep.mubr.bf16.mxu0 %v297
    %939 = vmatmul.mubr.bf16.gmra.mxu0 %v296
    %v940 = vpop.f32.mrf.mxu0
    %v941 = vadd.f32 %v412, %v940
    %v942 = vpop.f32.mrf.mxu0
    %v943 = vadd.f32 %v416, %v942
    %v944 = vpop.f32.mrf.mxu0
    %v945 = vadd.f32 %v412, %v944
    %v946 = vpop.f32.mrf.mxu0
    %v947 = vadd.f32 %v416, %v946
    %948 = vdwg.mxu0
    %949 = vmatprep.subr.bf16.mxu0 0
    %950 = vmatpush1.bf16.msra.mxu0 0
    %951 = vmatprep.subr.bf16.mxu0 0
    %952 = vmatpush1.bf16.msra.mxu0 0
    %953 = vmatprep.subr.bf16.mxu0 0
    %954 = vmatpush1.bf16.msra.mxu0 0
    %955 = vmatprep.subr.bf16.mxu0 0
    %956 = vmatpush1.bf16.msra.mxu0 0
    %957 = vmatprep.subr.bf16.mxu0 0
    %958 = vmatpush1.bf16.msra.mxu0 0
    %959 = vmatprep.subr.bf16.mxu0 0
    %960 = vmatpush1.bf16.msra.mxu0 0
    %961 = vmatprep.subr.bf16.mxu0 %v808
    %962 = vmatpush1.bf16.msra.mxu0 %v807
    %963 = vmatprep.subr.bf16.mxu0 %v803
    %964 = vmatpush1.bf16.msra.mxu0 %v802
    %965 = vmatprep.subr.bf16.mxu0 0
    %966 = vmatpush2.bf16.msra.mxu0 0
    %967 = vmatprep.subr.bf16.mxu0 0
    %968 = vmatpush2.bf16.msra.mxu0 0
    %969 = vmatprep.subr.bf16.mxu0 0
    %970 = vmatpush2.bf16.msra.mxu0 0
    %971 = vmatprep.subr.bf16.mxu0 0
    %972 = vmatpush2.bf16.msra.mxu0 0
    %973 = vmatprep.subr.bf16.mxu0 0
    %974 = vmatpush2.bf16.msra.mxu0 0
    %975 = vmatprep.subr.bf16.mxu0 0
    %976 = vmatpush2.bf16.msra.mxu0 0
    %977 = vmatprep.subr.bf16.mxu0 0
    %978 = vmatpush2.bf16.msra.mxu0 0
    %979 = vmatprep.subr.bf16.mxu0 0
    %980 = vmatpush2.bf16.msra.mxu0 0
    %981 = vmatprep.mubr.bf16.mxu0 0
    %982 = vmatmul.mubr.bf16.gmra.mxu0 %v904
    %v983 = vpop.f32.mrf.mxu0
    %v984 = vadd.f32 %v941, %v983
    %v985 = vpop.f32.mrf.mxu0
    %v986 = vadd.f32 %v943, %v985
    %v987 = vpop.f32.mrf.mxu0
    %v988 = vadd.f32 %v945, %v987
    %v989 = vpop.f32.mrf.mxu0
    %v990 = vadd.f32 %v947, %v989
    %991 = vdwg.mxu0
    %992 = vmatprep.subr.bf16.mxu0 %v760
    %993 = vmatpush1.bf16.msra.mxu0 %v759
    %994 = vmatprep.subr.bf16.mxu0 %v755
    %995 = vmatpush1.bf16.msra.mxu0 %v754
    %996 = vmatprep.subr.bf16.mxu0 %v750
    %997 = vmatpush1.bf16.msra.mxu0 %v749
    %998 = vmatprep.subr.bf16.mxu0 %v745
    %999 = vmatpush1.bf16.msra.mxu0 %v744
    %1000 = vmatprep.subr.bf16.mxu0 %v740
    %1001 = vmatpush1.bf16.msra.mxu0 %v739
    %1002 = vmatprep.subr.bf16.mxu0 %v735
    %1003 = vmatpush1.bf16.msra.mxu0 %v734
    %1004 = vmatprep.subr.bf16.mxu0 %v730
    %1005 = vmatpush1.bf16.msra.mxu0 %v729
    %1006 = vmatprep.subr.bf16.mxu0 %v725
    %1007 = vmatpush1.bf16.msra.mxu0 %v724
    %1008 = vmatprep.subr.bf16.mxu0 %v800
    %1009 = vmatpush2.bf16.msra.mxu0 %v799
    %1010 = vmatprep.subr.bf16.mxu0 %v795
    %1011 = vmatpush2.bf16.msra.mxu0 %v794
    %1012 = vmatprep.subr.bf16.mxu0 %v790
    %1013 = vmatpush2.bf16.msra.mxu0 %v789
    %1014 = vmatprep.subr.bf16.mxu0 %v785
    %1015 = vmatpush2.bf16.msra.mxu0 %v784
    %1016 = vmatprep.subr.bf16.mxu0 %v780
    %1017 = vmatpush2.bf16.msra.mxu0 %v779
    %1018 = vmatprep.subr.bf16.mxu0 %v775
    %1019 = vmatpush2.bf16.msra.mxu0 %v774
    %1020 = vmatprep.subr.bf16.mxu0 %v770
    %1021 = vmatpush2.bf16.msra.mxu0 %v769
    %1022 = vmatprep.subr.bf16.mxu0 %v765
    %1023 = vmatpush2.bf16.msra.mxu0 %v764
    %1024 = vmatprep.mubr.bf16.mxu0 %v297
    %1025 = vmatmul.mubr.bf16.gmra.mxu0 %v296
    %v1026 = vpop.f32.mrf.mxu0
    %v1027 = vadd.f32 %v420, %v1026
    %v1028 = vpop.f32.mrf.mxu0
    %v1029 = vadd.f32 %v424, %v1028
    %v1030 = vpop.f32.mrf.mxu0
    %v1031 = vadd.f32 %v420, %v1030
    %v1032 = vpop.f32.mrf.mxu0
    %v1033 = vadd.f32 %v424, %v1032
    %1034 = vdwg.mxu0
    %1035 = vmatprep.subr.bf16.mxu0 0
    %1036 = vmatpush1.bf16.msra.mxu0 0
    %1037 = vmatprep.subr.bf16.mxu0 0
    %1038 = vmatpush1.bf16.msra.mxu0 0
    %1039 = vmatprep.subr.bf16.mxu0 0
    %1040 = vmatpush1.bf16.msra.mxu0 0
    %1041 = vmatprep.subr.bf16.mxu0 0
    %1042 = vmatpush1.bf16.msra.mxu0 0
    %1043 = vmatprep.subr.bf16.mxu0 0
    %1044 = vmatpush1.bf16.msra.mxu0 0
    %1045 = vmatprep.subr.bf16.mxu0 0
    %1046 = vmatpush1.bf16.msra.mxu0 0
    %1047 = vmatprep.subr.bf16.mxu0 %v810
    %1048 = vmatpush1.bf16.msra.mxu0 %v809
    %1049 = vmatprep.subr.bf16.mxu0 %v805
    %1050 = vmatpush1.bf16.msra.mxu0 %v804
    %1051 = vmatprep.subr.bf16.mxu0 0
    %1052 = vmatpush2.bf16.msra.mxu0 0
    %1053 = vmatprep.subr.bf16.mxu0 0
    %1054 = vmatpush2.bf16.msra.mxu0 0
    %1055 = vmatprep.subr.bf16.mxu0 0
    %1056 = vmatpush2.bf16.msra.mxu0 0
    %1057 = vmatprep.subr.bf16.mxu0 0
    %1058 = vmatpush2.bf16.msra.mxu0 0
    %1059 = vmatprep.subr.bf16.mxu0 0
    %1060 = vmatpush2.bf16.msra.mxu0 0
    %1061 = vmatprep.subr.bf16.mxu0 0
    %1062 = vmatpush2.bf16.msra.mxu0 0
    %1063 = vmatprep.subr.bf16.mxu0 0
    %1064 = vmatpush2.bf16.msra.mxu0 0
    %1065 = vmatprep.subr.bf16.mxu0 0
    %1066 = vmatpush2.bf16.msra.mxu0 0
    %1067 = vmatprep.mubr.bf16.mxu0 0
    %1068 = vmatmul.mubr.bf16.gmra.mxu0 %v904
    %v1069 = vpop.f32.mrf.mxu0
    %v1070 = vadd.f32 %v1027, %v1069
    %v1071 = vpop.f32.mrf.mxu0
    %v1072 = vadd.f32 %v1029, %v1071
    %v1073 = vpop.f32.mrf.mxu0
    %v1074 = vadd.f32 %v1031, %v1073
    %v1075 = vpop.f32.mrf.mxu0
    %v1076 = vadd.f32 %v1033, %v1075
    %1077 = vdwg.mxu0
    %1078 = vmatprep.subr.bf16.mxu0 0
    %1079 = vmatpush1.bf16.msra.mxu0 %v761
    %1080 = vmatprep.subr.bf16.mxu0 0
    %1081 = vmatpush1.bf16.msra.mxu0 %v756
    %1082 = vmatprep.subr.bf16.mxu0 0
    %1083 = vmatpush1.bf16.msra.mxu0 %v751
    %1084 = vmatprep.subr.bf16.mxu0 0
    %1085 = vmatpush1.bf16.msra.mxu0 %v746
    %1086 = vmatprep.subr.bf16.mxu0 0
    %1087 = vmatpush1.bf16.msra.mxu0 %v741
    %1088 = vmatprep.subr.bf16.mxu0 0
    %1089 = vmatpush1.bf16.msra.mxu0 %v736
    %1090 = vmatprep.subr.bf16.mxu0 0
    %1091 = vmatpush1.bf16.msra.mxu0 %v731
    %1092 = vmatprep.subr.bf16.mxu0 0
    %1093 = vmatpush1.bf16.msra.mxu0 %v726
    %1094 = vmatprep.subr.bf16.mxu0 0
    %1095 = vmatpush2.bf16.msra.mxu0 %v801
    %1096 = vmatprep.subr.bf16.mxu0 0
    %1097 = vmatpush2.bf16.msra.mxu0 %v796
    %1098 = vmatprep.subr.bf16.mxu0 0
    %1099 = vmatpush2.bf16.msra.mxu0 %v791
    %1100 = vmatprep.subr.bf16.mxu0 0
    %1101 = vmatpush2.bf16.msra.mxu0 %v786
    %1102 = vmatprep.subr.bf16.mxu0 0
    %1103 = vmatpush2.bf16.msra.mxu0 %v781
    %1104 = vmatprep.subr.bf16.mxu0 0
    %1105 = vmatpush2.bf16.msra.mxu0 %v776
    %1106 = vmatprep.subr.bf16.mxu0 0
    %1107 = vmatpush2.bf16.msra.mxu0 %v771
    %1108 = vmatprep.subr.bf16.mxu0 0
    %1109 = vmatpush2.bf16.msra.mxu0 %v766
    %1110 = vmatprep.mubr.bf16.mxu0 %v297
    %1111 = vmatmul.mubr.bf16.gmra.mxu0 %v296
    %v1112 = vpop.f32.mrf.mxu0
    %v1113 = vadd.f32 %v428, %v1112
    %v1114 = vpop.f32.mrf.mxu0
    %v1115 = vpop.f32.mrf.mxu0
    %v1116 = vadd.f32 %v428, %v1115
    %v1117 = vpop.f32.mrf.mxu0
    %1118 = vdwg.mxu0
    %1119 = vmatprep.subr.bf16.mxu0 0
    %1120 = vmatpush1.bf16.msra.mxu0 0
    %1121 = vmatprep.subr.bf16.mxu0 0
    %1122 = vmatpush1.bf16.msra.mxu0 0
    %1123 = vmatprep.subr.bf16.mxu0 0
    %1124 = vmatpush1.bf16.msra.mxu0 0
    %1125 = vmatprep.subr.bf16.mxu0 0
    %1126 = vmatpush1.bf16.msra.mxu0 0
    %1127 = vmatprep.subr.bf16.mxu0 0
    %1128 = vmatpush1.bf16.msra.mxu0 0
    %1129 = vmatprep.subr.bf16.mxu0 0
    %1130 = vmatpush1.bf16.msra.mxu0 0
    %1131 = vmatprep.subr.bf16.mxu0 0
    %1132 = vmatpush1.bf16.msra.mxu0 %v811
    %1133 = vmatprep.subr.bf16.mxu0 0
    %1134 = vmatpush1.bf16.msra.mxu0 %v806
    %1135 = vmatprep.subr.bf16.mxu0 0
    %1136 = vmatpush2.bf16.msra.mxu0 0
    %1137 = vmatprep.subr.bf16.mxu0 0
    %1138 = vmatpush2.bf16.msra.mxu0 0
    %1139 = vmatprep.subr.bf16.mxu0 0
    %1140 = vmatpush2.bf16.msra.mxu0 0
    %1141 = vmatprep.subr.bf16.mxu0 0
    %1142 = vmatpush2.bf16.msra.mxu0 0
    %1143 = vmatprep.subr.bf16.mxu0 0
    %1144 = vmatpush2.bf16.msra.mxu0 0
    %1145 = vmatprep.subr.bf16.mxu0 0
    %1146 = vmatpush2.bf16.msra.mxu0 0
    %1147 = vmatprep.subr.bf16.mxu0 0
    %1148 = vmatpush2.bf16.msra.mxu0 0
    %1149 = vmatprep.subr.bf16.mxu0 0
    %1150 = vmatpush2.bf16.msra.mxu0 0
    %1151 = vmatprep.mubr.bf16.mxu0 0
    %1152 = vmatmul.mubr.bf16.gmra.mxu0 %v904
    %v1153 = vpop.f32.mrf.mxu0
    %v1154 = vadd.f32 %v1113, %v1153
    %v1155 = vpop.f32.mrf.mxu0
    %v1156 = vpop.f32.mrf.mxu0
    %v1157 = vadd.f32 %v1116, %v1156
    %v1158 = vpop.f32.mrf.mxu0
    %1159 = vdwg.mxu0
    %v1160 = vmax.f32 %v984, 0.0
    %v1161 = vmax.f32 %v986, 0.0
    %v1162 = vmax.f32 %v1070, 0.0
    %v1163 = vmax.f32 %v1072, 0.0
    %v1164 = vmax.f32 %v1154, 0.0
    %v1165 = vmax.f32 %v988, 0.0
    %v1166 = vmax.f32 %v990, 0.0
    %v1167 = vmax.f32 %v1074, 0.0
    %v1168 = vmax.f32 %v1076, 0.0
    %v1169 = vmax.f32 %v1157, 0.0
    %v1170 = vpack.c.bf16 %v1165, %v1160
    %v1171 = vpack.c.bf16 %v1166, %v1161
    %v1172 = vpack.c.bf16 %v1167, %v1162
    %v1173 = vpack.c.bf16 %v1168, %v1163
    %v1174 = vpack.c.bf16 %v1169, %v1164
    %v1175 = vld [vmem:[#allocation9] sm:$0xff]
    %v1176 = vld [vmem:[#allocation9 + $0x8] sm:$0xff]
    %v1177 = vld [vmem:[#allocation9 + $0x10] sm:$0xff]
    %v1178 = vld [vmem:[#allocation9 + $0x18] sm:$0xff]
    %v1179 = vld [vmem:[#allocation9 + $0x20] sm:$0xf]
    %v1180 = vld [vmem:[#allocation9 + $0x24] sm:$0xff]
    %v1181 = vld [vmem:[#allocation9 + $0x2c] sm:$0xff]
    %v1182 = vld [vmem:[#allocation9 + $0x34] sm:$0xff]
    %v1183 = vld [vmem:[#allocation9 + $0x3c] sm:$0xff]
    %v1184 = vld [vmem:[#allocation9 + $0x44] sm:$0xf]
    %v1185 = vld [vmem:[#allocation9 + $0x48] sm:$0xff]
    %v1186 = vld [vmem:[#allocation9 + $0x50] sm:$0xff]
    %v1187 = vld [vmem:[#allocation9 + $0x58] sm:$0xff]
    %v1188 = vld [vmem:[#allocation9 + $0x60] sm:$0xff]
    %v1189 = vld [vmem:[#allocation9 + $0x68] sm:$0xf]
    %v1190 = vld [vmem:[#allocation9 + $0x6c] sm:$0xff]
    %v1191 = vld [vmem:[#allocation9 + $0x74] sm:$0xff]
    %v1192 = vld [vmem:[#allocation9 + $0x7c] sm:$0xff]
    %v1193 = vld [vmem:[#allocation9 + $0x84] sm:$0xff]
    %v1194 = vld [vmem:[#allocation9 + $0x8c] sm:$0xf]
    %v1195 = vld [vmem:[#allocation9 + $0x90] sm:$0xff]
    %v1196 = vld [vmem:[#allocation9 + $0x98] sm:$0xff]
    %v1197 = vld [vmem:[#allocation9 + $0xa0] sm:$0xff]
    %v1198 = vld [vmem:[#allocation9 + $0xa8] sm:$0xff]
    %v1199 = vld [vmem:[#allocation9 + $0xb0] sm:$0xf]
    %v1200 = vld [vmem:[#allocation9 + $0xb4] sm:$0xff]
    %v1201 = vld [vmem:[#allocation9 + $0xbc] sm:$0xff]
    %v1202 = vld [vmem:[#allocation9 + $0xc4] sm:$0xff]
    %v1203 = vld [vmem:[#allocation9 + $0xcc] sm:$0xff]
    %v1204 = vld [vmem:[#allocation9 + $0xd4] sm:$0xf]
    %v1205 = vld [vmem:[#allocation9 + $0xd8] sm:$0xff]
    %v1206 = vld [vmem:[#allocation9 + $0xe0] sm:$0xff]
    %v1207 = vld [vmem:[#allocation9 + $0xe8] sm:$0xff]
    %v1208 = vld [vmem:[#allocation9 + $0xf0] sm:$0xff]
    %v1209 = vld [vmem:[#allocation9 + $0xf8] sm:$0xf]
    %v1210 = vld [vmem:[#allocation9 + $0xfc] sm:$0xff]
    %v1211 = vld [vmem:[#allocation9 + $0x104] sm:$0xff]
    %v1212 = vld [vmem:[#allocation9 + $0x10c] sm:$0xff]
    %v1213 = vld [vmem:[#allocation9 + $0x114] sm:$0xff]
    %v1214 = vld [vmem:[#allocation9 + $0x11c] sm:$0xf]
    %v1215 = vld [vmem:[#allocation9 + $0x120] sm:$0xff]
    %v1216 = vld [vmem:[#allocation9 + $0x128] sm:$0xff]
    %v1217 = vld [vmem:[#allocation9 + $0x130] sm:$0xff]
    %v1218 = vld [vmem:[#allocation9 + $0x138] sm:$0xff]
    %v1219 = vld [vmem:[#allocation9 + $0x140] sm:$0xf]
    %v1220 = vld [vmem:[#allocation9 + $0x144] sm:$0xff]
    %v1221 = vld [vmem:[#allocation9 + $0x14c] sm:$0xff]
    %v1222 = vld [vmem:[#allocation9 + $0x154] sm:$0xff]
    %v1223 = vld [vmem:[#allocation9 + $0x15c] sm:$0xff]
    %v1224 = vld [vmem:[#allocation9 + $0x164] sm:$0xf]
    %v1225 = vld [vmem:[#allocation9 + $0x168] sm:$0xff]
    %v1226 = vld [vmem:[#allocation9 + $0x170] sm:$0xff]
    %v1227 = vld [vmem:[#allocation9 + $0x178] sm:$0xff]
    %v1228 = vld [vmem:[#allocation9 + $0x180] sm:$0xff]
    %v1229 = vld [vmem:[#allocation9 + $0x188] sm:$0xf]
    %v1230 = vld [vmem:[#allocation9 + $0x18c] sm:$0xff]
    %v1231 = vld [vmem:[#allocation9 + $0x194] sm:$0xff]
    %v1232 = vld [vmem:[#allocation9 + $0x19c] sm:$0xff]
    %v1233 = vld [vmem:[#allocation9 + $0x1a4] sm:$0xff]
    %v1234 = vld [vmem:[#allocation9 + $0x1ac] sm:$0xf]
    %v1235 = vld [vmem:[#allocation9 + $0x1b0] sm:$0xff]
    %v1236 = vld [vmem:[#allocation9 + $0x1b8] sm:$0xff]
    %v1237 = vld [vmem:[#allocation9 + $0x1c0] sm:$0xff]
    %v1238 = vld [vmem:[#allocation9 + $0x1c8] sm:$0xff]
    %v1239 = vld [vmem:[#allocation9 + $0x1d0] sm:$0xf]
    %v1240 = vld [vmem:[#allocation9 + $0x1d4] sm:$0xff]
    %v1241 = vld [vmem:[#allocation9 + $0x1dc] sm:$0xff]
    %v1242 = vld [vmem:[#allocation9 + $0x1e4] sm:$0xff]
    %v1243 = vld [vmem:[#allocation9 + $0x1ec] sm:$0xff]
    %v1244 = vld [vmem:[#allocation9 + $0x1f4] sm:$0xf]
    %v1245 = vld [vmem:[#allocation9 + $0x1f8] sm:$0xff]
    %v1246 = vld [vmem:[#allocation9 + $0x200] sm:$0xff]
    %v1247 = vld [vmem:[#allocation9 + $0x208] sm:$0xff]
    %v1248 = vld [vmem:[#allocation9 + $0x210] sm:$0xff]
    %v1249 = vld [vmem:[#allocation9 + $0x218] sm:$0xf]
    %v1250 = vld [vmem:[#allocation9 + $0x21c] sm:$0xff]
    %v1251 = vld [vmem:[#allocation9 + $0x224] sm:$0xff]
    %v1252 = vld [vmem:[#allocation9 + $0x22c] sm:$0xff]
    %v1253 = vld [vmem:[#allocation9 + $0x234] sm:$0xff]
    %v1254 = vld [vmem:[#allocation9 + $0x23c] sm:$0xf]
    %v1255 = vld [vmem:[#allocation9 + $0x240] sm:$0xff]
    %v1256 = vld [vmem:[#allocation9 + $0x248] sm:$0xff]
    %v1257 = vld [vmem:[#allocation9 + $0x250] sm:$0xff]
    %v1258 = vld [vmem:[#allocation9 + $0x258] sm:$0xff]
    %v1259 = vld [vmem:[#allocation9 + $0x260] sm:$0xf]
    %v1260 = vld [vmem:[#allocation9 + $0x264] sm:$0xff]
    %v1261 = vld [vmem:[#allocation9 + $0x26c] sm:$0xff]
    %v1262 = vld [vmem:[#allocation9 + $0x274] sm:$0xff]
    %v1263 = vld [vmem:[#allocation9 + $0x27c] sm:$0xff]
    %v1264 = vld [vmem:[#allocation9 + $0x284] sm:$0xf]
    %v1265 = vld [vmem:[#allocation9 + $0x288] sm:$0xff]
    %v1266 = vld [vmem:[#allocation9 + $0x290] sm:$0xff]
    %v1267 = vld [vmem:[#allocation9 + $0x298] sm:$0xff]
    %v1268 = vld [vmem:[#allocation9 + $0x2a0] sm:$0xff]
    %v1269 = vld [vmem:[#allocation9 + $0x2a8] sm:$0xf]
    %v1270 = vld [vmem:[#allocation9 + $0x2ac] sm:$0xff]
    %v1271 = vld [vmem:[#allocation9 + $0x2b4] sm:$0xff]
    %v1272 = vld [vmem:[#allocation9 + $0x2bc] sm:$0xff]
    %v1273 = vld [vmem:[#allocation9 + $0x2c4] sm:$0xff]
    %v1274 = vld [vmem:[#allocation9 + $0x2cc] sm:$0xf]
    %v1275 = vld [vmem:[#allocation9 + $0x2d0] sm:$0xff]
    %v1276 = vld [vmem:[#allocation9 + $0x2d8] sm:$0xff]
    %v1277 = vld [vmem:[#allocation9 + $0x2e0] sm:$0xff]
    %v1278 = vld [vmem:[#allocation9 + $0x2e8] sm:$0xff]
    %v1279 = vld [vmem:[#allocation9 + $0x2f0] sm:$0xf]
    %v1280 = vld [vmem:[#allocation9 + $0x2f4] sm:$0xff]
    %v1281 = vld [vmem:[#allocation9 + $0x2fc] sm:$0xff]
    %v1282 = vld [vmem:[#allocation9 + $0x304] sm:$0xff]
    %v1283 = vld [vmem:[#allocation9 + $0x30c] sm:$0xff]
    %v1284 = vld [vmem:[#allocation9 + $0x314] sm:$0xf]
    %v1285 = vld [vmem:[#allocation9 + $0x318] sm:$0xff]
    %v1286 = vld [vmem:[#allocation9 + $0x320] sm:$0xff]
    %v1287 = vld [vmem:[#allocation9 + $0x328] sm:$0xff]
    %v1288 = vld [vmem:[#allocation9 + $0x330] sm:$0xff]
    %v1289 = vld [vmem:[#allocation9 + $0x338] sm:$0xf]
    %v1290 = vld [vmem:[#allocation9 + $0x33c] sm:$0xff]
    %v1291 = vld [vmem:[#allocation9 + $0x344] sm:$0xff]
    %v1292 = vld [vmem:[#allocation9 + $0x34c] sm:$0xff]
    %v1293 = vld [vmem:[#allocation9 + $0x354] sm:$0xff]
    %v1294 = vld [vmem:[#allocation9 + $0x35c] sm:$0xf]
    %v1295 = vld [vmem:[#allocation9 + $0x360] sm:$0xff]
    %v1296 = vld [vmem:[#allocation9 + $0x368] sm:$0xff]
    %v1297 = vld [vmem:[#allocation9 + $0x370] sm:$0xff]
    %v1298 = vld [vmem:[#allocation9 + $0x378] sm:$0xff]
    %v1299 = vld [vmem:[#allocation9 + $0x380] sm:$0xf]
    %v1300 = vld [vmem:[#allocation9 + $0x384] sm:$0xff]
    %v1301 = vld [vmem:[#allocation9 + $0x38c] sm:$0xff]
    %v1302 = vld [vmem:[#allocation9 + $0x394] sm:$0xff]
    %v1303 = vld [vmem:[#allocation9 + $0x39c] sm:$0xff]
    %v1304 = vld [vmem:[#allocation9 + $0x3a4] sm:$0xf]
    %v1305 = vld [vmem:[#allocation9 + $0x3a8] sm:$0xff]
    %v1306 = vld [vmem:[#allocation9 + $0x3b0] sm:$0xff]
    %v1307 = vld [vmem:[#allocation9 + $0x3b8] sm:$0xff]
    %v1308 = vld [vmem:[#allocation9 + $0x3c0] sm:$0xff]
    %v1309 = vld [vmem:[#allocation9 + $0x3c8] sm:$0xf]
    %v1310 = vld [vmem:[#allocation9 + $0x3cc] sm:$0xff]
    %v1311 = vld [vmem:[#allocation9 + $0x3d4] sm:$0xff]
    %v1312 = vld [vmem:[#allocation9 + $0x3dc] sm:$0xff]
    %v1313 = vld [vmem:[#allocation9 + $0x3e4] sm:$0xff]
    %v1314 = vld [vmem:[#allocation9 + $0x3ec] sm:$0xf]
    %v1315 = vld [vmem:[#allocation9 + $0x3f0] sm:$0xff]
    %v1316 = vld [vmem:[#allocation9 + $0x3f8] sm:$0xff]
    %v1317 = vld [vmem:[#allocation9 + $0x400] sm:$0xff]
    %v1318 = vld [vmem:[#allocation9 + $0x408] sm:$0xff]
    %v1319 = vld [vmem:[#allocation9 + $0x410] sm:$0xf]
    %v1320 = vld [vmem:[#allocation9 + $0x414] sm:$0xff]
    %v1321 = vld [vmem:[#allocation9 + $0x41c] sm:$0xff]
    %v1322 = vld [vmem:[#allocation9 + $0x424] sm:$0xff]
    %v1323 = vld [vmem:[#allocation9 + $0x42c] sm:$0xff]
    %v1324 = vld [vmem:[#allocation9 + $0x434] sm:$0xf]
    %v1325 = vld [vmem:[#allocation9 + $0x438] sm:$0xff]
    %v1326 = vld [vmem:[#allocation9 + $0x440] sm:$0xff]
    %v1327 = vld [vmem:[#allocation9 + $0x448] sm:$0xff]
    %v1328 = vld [vmem:[#allocation9 + $0x450] sm:$0xff]
    %v1329 = vld [vmem:[#allocation9 + $0x458] sm:$0xf]
    %v1330 = vld [vmem:[#allocation9 + $0x45c] sm:$0xff]
    %v1331 = vld [vmem:[#allocation9 + $0x464] sm:$0xff]
    %v1332 = vld [vmem:[#allocation9 + $0x46c] sm:$0xff]
    %v1333 = vld [vmem:[#allocation9 + $0x474] sm:$0xff]
    %v1334 = vld [vmem:[#allocation9 + $0x47c] sm:$0xf]
    %v1335 = vld [vmem:[#allocation9 + $0x480] sm:$0xff]
    %v1336 = vld [vmem:[#allocation9 + $0x488] sm:$0xff]
    %v1337 = vld [vmem:[#allocation9 + $0x490] sm:$0xff]
    %v1338 = vld [vmem:[#allocation9 + $0x498] sm:$0xff]
    %v1339 = vld [vmem:[#allocation9 + $0x4a0] sm:$0xf]
    %v1340 = vld [vmem:[#allocation9 + $0x4a4] sm:$0xff]
    %v1341 = vld [vmem:[#allocation9 + $0x4ac] sm:$0xff]
    %v1342 = vld [vmem:[#allocation9 + $0x4b4] sm:$0xff]
    %v1343 = vld [vmem:[#allocation9 + $0x4bc] sm:$0xff]
    %v1344 = vld [vmem:[#allocation9 + $0x4c4] sm:$0xf]
    %v1345 = vld [vmem:[#allocation9 + $0x4c8] sm:$0xff]
    %v1346 = vld [vmem:[#allocation9 + $0x4d0] sm:$0xff]
    %v1347 = vld [vmem:[#allocation9 + $0x4d8] sm:$0xff]
    %v1348 = vld [vmem:[#allocation9 + $0x4e0] sm:$0xff]
    %v1349 = vld [vmem:[#allocation9 + $0x4e8] sm:$0xf]
    %v1350 = vld [vmem:[#allocation9 + $0x4ec] sm:$0xff]
    %v1351 = vld [vmem:[#allocation9 + $0x4f4] sm:$0xff]
    %v1352 = vld [vmem:[#allocation9 + $0x4fc] sm:$0xff]
    %v1353 = vld [vmem:[#allocation9 + $0x504] sm:$0xff]
    %v1354 = vld [vmem:[#allocation9 + $0x50c] sm:$0xf]
    %v1355 = vld [vmem:[#allocation9 + $0x510] sm:$0xff]
    %v1356 = vld [vmem:[#allocation9 + $0x518] sm:$0xff]
    %v1357 = vld [vmem:[#allocation9 + $0x520] sm:$0xff]
    %v1358 = vld [vmem:[#allocation9 + $0x528] sm:$0xff]
    %v1359 = vld [vmem:[#allocation9 + $0x530] sm:$0xf]
    %v1360 = vld [vmem:[#allocation9 + $0x534] sm:$0xff]
    %v1361 = vld [vmem:[#allocation9 + $0x53c] sm:$0xff]
    %v1362 = vld [vmem:[#allocation9 + $0x544] sm:$0xff]
    %v1363 = vld [vmem:[#allocation9 + $0x54c] sm:$0xff]
    %v1364 = vld [vmem:[#allocation9 + $0x554] sm:$0xf]
    %v1365 = vld [vmem:[#allocation9 + $0x558] sm:$0xff]
    %v1366 = vld [vmem:[#allocation9 + $0x560] sm:$0xff]
    %v1367 = vld [vmem:[#allocation9 + $0x568] sm:$0xff]
    %v1368 = vld [vmem:[#allocation9 + $0x570] sm:$0xff]
    %v1369 = vld [vmem:[#allocation9 + $0x578] sm:$0xf]
    %v1370 = vld [vmem:[#allocation9 + $0x57c] sm:$0xff]
    %v1371 = vld [vmem:[#allocation9 + $0x584] sm:$0xff]
    %v1372 = vld [vmem:[#allocation9 + $0x58c] sm:$0xff]
    %v1373 = vld [vmem:[#allocation9 + $0x594] sm:$0xff]
    %v1374 = vld [vmem:[#allocation9 + $0x59c] sm:$0xf]
    %v1375 = vld [vmem:[#allocation9 + $0x5a0] sm:$0xff]
    %v1376 = vld [vmem:[#allocation9 + $0x5a8] sm:$0xff]
    %v1377 = vld [vmem:[#allocation9 + $0x5b0] sm:$0xff]
    %v1378 = vld [vmem:[#allocation9 + $0x5b8] sm:$0xff]
    %v1379 = vld [vmem:[#allocation9 + $0x5c0] sm:$0xf]
    %v1380 = vld [vmem:[#allocation9 + $0x5c4] sm:$0xff]
    %v1381 = vld [vmem:[#allocation9 + $0x5cc] sm:$0xff]
    %v1382 = vld [vmem:[#allocation9 + $0x5d4] sm:$0xff]
    %v1383 = vld [vmem:[#allocation9 + $0x5dc] sm:$0xff]
    %v1384 = vld [vmem:[#allocation9 + $0x5e4] sm:$0xf]
    %v1385 = vld [vmem:[#allocation9 + $0x5e8] sm:$0xff]
    %v1386 = vld [vmem:[#allocation9 + $0x5f0] sm:$0xff]
    %v1387 = vld [vmem:[#allocation9 + $0x5f8] sm:$0xff]
    %v1388 = vld [vmem:[#allocation9 + $0x600] sm:$0xff]
    %v1389 = vld [vmem:[#allocation9 + $0x608] sm:$0xf]
    %v1390 = vld [vmem:[#allocation9 + $0x60c] sm:$0xff]
    %v1391 = vld [vmem:[#allocation9 + $0x614] sm:$0xff]
    %v1392 = vld [vmem:[#allocation9 + $0x61c] sm:$0xff]
    %v1393 = vld [vmem:[#allocation9 + $0x624] sm:$0xff]
    %v1394 = vld [vmem:[#allocation9 + $0x62c] sm:$0xf]
    %v1395 = vld [vmem:[#allocation9 + $0x630] sm:$0xff]
    %v1396 = vld [vmem:[#allocation9 + $0x638] sm:$0xff]
    %v1397 = vld [vmem:[#allocation9 + $0x640] sm:$0xff]
    %v1398 = vld [vmem:[#allocation9 + $0x648] sm:$0xff]
    %v1399 = vld [vmem:[#allocation9 + $0x650] sm:$0xf]
    %v1400 = vld [vmem:[#allocation9 + $0x654] sm:$0xff]
    %v1401 = vld [vmem:[#allocation9 + $0x65c] sm:$0xff]
    %v1402 = vld [vmem:[#allocation9 + $0x664] sm:$0xff]
    %v1403 = vld [vmem:[#allocation9 + $0x66c] sm:$0xff]
    %v1404 = vld [vmem:[#allocation9 + $0x674] sm:$0xf]
    %v1405 = vld [vmem:[#allocation9 + $0x678] sm:$0xff]
    %v1406 = vld [vmem:[#allocation9 + $0x680] sm:$0xff]
    %v1407 = vld [vmem:[#allocation9 + $0x688] sm:$0xff]
    %v1408 = vld [vmem:[#allocation9 + $0x690] sm:$0xff]
    %v1409 = vld [vmem:[#allocation9 + $0x698] sm:$0xf]
    %v1410 = vld [vmem:[#allocation9 + $0x69c] sm:$0xff]
    %v1411 = vld [vmem:[#allocation9 + $0x6a4] sm:$0xff]
    %v1412 = vld [vmem:[#allocation9 + $0x6ac] sm:$0xff]
    %v1413 = vld [vmem:[#allocation9 + $0x6b4] sm:$0xff]
    %v1414 = vld [vmem:[#allocation9 + $0x6bc] sm:$0xf]
    %v1415 = vld [vmem:[#allocation9 + $0x6c0] sm:$0xff]
    %v1416 = vld [vmem:[#allocation9 + $0x6c8] sm:$0xff]
    %v1417 = vld [vmem:[#allocation9 + $0x6d0] sm:$0xff]
    %v1418 = vld [vmem:[#allocation9 + $0x6d8] sm:$0xff]
    %v1419 = vld [vmem:[#allocation9 + $0x6e0] sm:$0xf]
    %v1420 = vld [vmem:[#allocation9 + $0x6e4] sm:$0xff]
    %v1421 = vld [vmem:[#allocation9 + $0x6ec] sm:$0xff]
    %v1422 = vld [vmem:[#allocation9 + $0x6f4] sm:$0xff]
    %v1423 = vld [vmem:[#allocation9 + $0x6fc] sm:$0xff]
    %v1424 = vld [vmem:[#allocation9 + $0x704] sm:$0xf]
    %v1425 = vld [vmem:[#allocation9 + $0x708] sm:$0xff]
    %v1426 = vld [vmem:[#allocation9 + $0x710] sm:$0xff]
    %v1427 = vld [vmem:[#allocation9 + $0x718] sm:$0xff]
    %v1428 = vld [vmem:[#allocation9 + $0x720] sm:$0xff]
    %v1429 = vld [vmem:[#allocation9 + $0x728] sm:$0xf]
    %v1430 = vld [vmem:[#allocation9 + $0x72c] sm:$0xff]
    %v1431 = vld [vmem:[#allocation9 + $0x734] sm:$0xff]
    %v1432 = vld [vmem:[#allocation9 + $0x73c] sm:$0xff]
    %v1433 = vld [vmem:[#allocation9 + $0x744] sm:$0xff]
    %v1434 = vld [vmem:[#allocation9 + $0x74c] sm:$0xf]
    %v1435 = vld [vmem:[#allocation9 + $0x750] sm:$0xff]
    %v1436 = vld [vmem:[#allocation9 + $0x758] sm:$0xff]
    %v1437 = vld [vmem:[#allocation9 + $0x760] sm:$0xff]
    %v1438 = vld [vmem:[#allocation9 + $0x768] sm:$0xff]
    %v1439 = vld [vmem:[#allocation9 + $0x770] sm:$0xf]
    %v1440 = vld [vmem:[#allocation9 + $0x774] sm:$0xff]
    %v1441 = vld [vmem:[#allocation9 + $0x77c] sm:$0xff]
    %v1442 = vld [vmem:[#allocation9 + $0x784] sm:$0xff]
    %v1443 = vld [vmem:[#allocation9 + $0x78c] sm:$0xff]
    %v1444 = vld [vmem:[#allocation9 + $0x794] sm:$0xf]
    %v1445 = vld [vmem:[#allocation9 + $0x798] sm:$0xff]
    %v1446 = vld [vmem:[#allocation9 + $0x7a0] sm:$0xff]
    %v1447 = vld [vmem:[#allocation9 + $0x7a8] sm:$0xff]
    %v1448 = vld [vmem:[#allocation9 + $0x7b0] sm:$0xff]
    %v1449 = vld [vmem:[#allocation9 + $0x7b8] sm:$0xf]
    %v1450 = vld [vmem:[#allocation9 + $0x7bc] sm:$0xff]
    %v1451 = vld [vmem:[#allocation9 + $0x7c4] sm:$0xff]
    %v1452 = vld [vmem:[#allocation9 + $0x7cc] sm:$0xff]
    %v1453 = vld [vmem:[#allocation9 + $0x7d4] sm:$0xff]
    %v1454 = vld [vmem:[#allocation9 + $0x7dc] sm:$0xf]
    %v1455 = vld [vmem:[#allocation9 + $0x7e0] sm:$0xff]
    %v1456 = vld [vmem:[#allocation9 + $0x7e8] sm:$0xff]
    %v1457 = vld [vmem:[#allocation9 + $0x7f0] sm:$0xff]
    %v1458 = vld [vmem:[#allocation9 + $0x7f8] sm:$0xff]
    %v1459 = vld [vmem:[#allocation9 + $0x800] sm:$0xf]
    %v1460 = vld [vmem:[#allocation9 + $0x804] sm:$0xff]
    %v1461 = vld [vmem:[#allocation9 + $0x80c] sm:$0xff]
    %v1462 = vld [vmem:[#allocation9 + $0x814] sm:$0xff]
    %v1463 = vld [vmem:[#allocation9 + $0x81c] sm:$0xff]
    %v1464 = vld [vmem:[#allocation9 + $0x824] sm:$0xf]
    %v1465 = vld [vmem:[#allocation9 + $0x828] sm:$0xff]
    %v1466 = vld [vmem:[#allocation9 + $0x830] sm:$0xff]
    %v1467 = vld [vmem:[#allocation9 + $0x838] sm:$0xff]
    %v1468 = vld [vmem:[#allocation9 + $0x840] sm:$0xff]
    %v1469 = vld [vmem:[#allocation9 + $0x848] sm:$0xf]
    %v1470 = vld [vmem:[#allocation9 + $0x84c] sm:$0xff]
    %v1471 = vld [vmem:[#allocation9 + $0x854] sm:$0xff]
    %v1472 = vld [vmem:[#allocation9 + $0x85c] sm:$0xff]
    %v1473 = vld [vmem:[#allocation9 + $0x864] sm:$0xff]
    %v1474 = vld [vmem:[#allocation9 + $0x86c] sm:$0xf]
    %v1475 = vld [vmem:[#allocation9 + $0x870] sm:$0xff]
    %v1476 = vld [vmem:[#allocation9 + $0x878] sm:$0xff]
    %v1477 = vld [vmem:[#allocation9 + $0x880] sm:$0xff]
    %v1478 = vld [vmem:[#allocation9 + $0x888] sm:$0xff]
    %v1479 = vld [vmem:[#allocation9 + $0x890] sm:$0xf]
    %v1480 = vld [vmem:[#allocation9 + $0x894] sm:$0xff]
    %v1481 = vld [vmem:[#allocation9 + $0x89c] sm:$0xff]
    %v1482 = vld [vmem:[#allocation9 + $0x8a4] sm:$0xff]
    %v1483 = vld [vmem:[#allocation9 + $0x8ac] sm:$0xff]
    %v1484 = vld [vmem:[#allocation9 + $0x8b4] sm:$0xf]
    %v1485 = vld [vmem:[#allocation9 + $0x8b8] sm:$0xff]
    %v1486 = vld [vmem:[#allocation9 + $0x8c0] sm:$0xff]
    %v1487 = vld [vmem:[#allocation9 + $0x8c8] sm:$0xff]
    %v1488 = vld [vmem:[#allocation9 + $0x8d0] sm:$0xff]
    %v1489 = vld [vmem:[#allocation9 + $0x8d8] sm:$0xf]
    %v1490 = vld [vmem:[#allocation9 + $0x8dc] sm:$0xff]
    %v1491 = vld [vmem:[#allocation9 + $0x8e4] sm:$0xff]
    %v1492 = vld [vmem:[#allocation9 + $0x8ec] sm:$0xff]
    %v1493 = vld [vmem:[#allocation9 + $0x8f4] sm:$0xff]
    %v1494 = vld [vmem:[#allocation9 + $0x8fc] sm:$0xf]
    %v1495 = vld [vmem:[#allocation9 + $0x900] sm:$0xff]
    %v1496 = vld [vmem:[#allocation9 + $0x908] sm:$0xff]
    %v1497 = vld [vmem:[#allocation9 + $0x910] sm:$0xff]
    %v1498 = vld [vmem:[#allocation9 + $0x918] sm:$0xff]
    %v1499 = vld [vmem:[#allocation9 + $0x920] sm:$0xf]
    %v1500 = vld [vmem:[#allocation9 + $0x924] sm:$0xff]
    %v1501 = vld [vmem:[#allocation9 + $0x92c] sm:$0xff]
    %v1502 = vld [vmem:[#allocation9 + $0x934] sm:$0xff]
    %v1503 = vld [vmem:[#allocation9 + $0x93c] sm:$0xff]
    %v1504 = vld [vmem:[#allocation9 + $0x944] sm:$0xf]
    %v1505 = vld [vmem:[#allocation9 + $0x948] sm:$0xff]
    %v1506 = vld [vmem:[#allocation9 + $0x950] sm:$0xff]
    %v1507 = vld [vmem:[#allocation9 + $0x958] sm:$0xff]
    %v1508 = vld [vmem:[#allocation9 + $0x960] sm:$0xff]
    %v1509 = vld [vmem:[#allocation9 + $0x968] sm:$0xf]
    %v1510 = vld [vmem:[#allocation9 + $0x96c] sm:$0xff]
    %v1511 = vld [vmem:[#allocation9 + $0x974] sm:$0xff]
    %v1512 = vld [vmem:[#allocation9 + $0x97c] sm:$0xff]
    %v1513 = vld [vmem:[#allocation9 + $0x984] sm:$0xff]
    %v1514 = vld [vmem:[#allocation9 + $0x98c] sm:$0xf]
    %v1515 = vld [vmem:[#allocation9 + $0x990] sm:$0xff]
    %v1516 = vld [vmem:[#allocation9 + $0x998] sm:$0xff]
    %v1517 = vld [vmem:[#allocation9 + $0x9a0] sm:$0xff]
    %v1518 = vld [vmem:[#allocation9 + $0x9a8] sm:$0xff]
    %v1519 = vld [vmem:[#allocation9 + $0x9b0] sm:$0xf]
    %v1520 = vld [vmem:[#allocation9 + $0x9b4] sm:$0xff]
    %v1521 = vld [vmem:[#allocation9 + $0x9bc] sm:$0xff]
    %v1522 = vld [vmem:[#allocation9 + $0x9c4] sm:$0xff]
    %v1523 = vld [vmem:[#allocation9 + $0x9cc] sm:$0xff]
    %v1524 = vld [vmem:[#allocation9 + $0x9d4] sm:$0xf]
    %v1525 = vld [vmem:[#allocation9 + $0x9d8] sm:$0xff]
    %v1526 = vld [vmem:[#allocation9 + $0x9e0] sm:$0xff]
    %v1527 = vld [vmem:[#allocation9 + $0x9e8] sm:$0xff]
    %v1528 = vld [vmem:[#allocation9 + $0x9f0] sm:$0xff]
    %v1529 = vld [vmem:[#allocation9 + $0x9f8] sm:$0xf]
    %v1530 = vld [vmem:[#allocation9 + $0x9fc] sm:$0xff]
    %v1531 = vld [vmem:[#allocation9 + $0xa04] sm:$0xff]
    %v1532 = vld [vmem:[#allocation9 + $0xa0c] sm:$0xff]
    %v1533 = vld [vmem:[#allocation9 + $0xa14] sm:$0xff]
    %v1534 = vld [vmem:[#allocation9 + $0xa1c] sm:$0xf]
    %v1535 = vld [vmem:[#allocation10] sm:$0xff]
    %v1536 = vld [vmem:[#allocation10 + $0x8] sm:$0x1]
    %v1539 = vlaneseq
    %v1540 = vshrl.u32 %v1539, 7
    %v1541 = vsub.s32 0, %v1540
    %v1542 = vrot.slane %v1535, %v1541
    %v1543 = vlaneseq
    %v1544 = vshrl.u32 %v1543, 7
    %v1545 = vsub.s32 1, %v1544
    %v1546 = vrot.slane %v1535, %v1545
    %v1547 = vlaneseq
    %v1548 = vshrl.u32 %v1547, 7
    %v1549 = vsub.s32 2, %v1548
    %v1550 = vrot.slane %v1535, %v1549
    %v1551 = vlaneseq
    %v1552 = vshrl.u32 %v1551, 7
    %v1553 = vsub.s32 3, %v1552
    %v1554 = vrot.slane %v1535, %v1553
    %v1555 = vlaneseq
    %v1556 = vshrl.u32 %v1555, 7
    %v1557 = vsub.s32 4, %v1556
    %v1558 = vrot.slane %v1535, %v1557
    %v1559 = vlaneseq
    %v1560 = vshrl.u32 %v1559, 7
    %v1561 = vsub.s32 5, %v1560
    %v1562 = vrot.slane %v1535, %v1561
    %v1563 = vlaneseq
    %v1564 = vshrl.u32 %v1563, 7
    %v1565 = vsub.s32 6, %v1564
    %v1566 = vrot.slane %v1535, %v1565
    %v1567 = vlaneseq
    %v1568 = vshrl.u32 %v1567, 7
    %v1569 = vsub.s32 7, %v1568
    %v1570 = vrot.slane %v1535, %v1569
    %v1571 = vlaneseq
    %v1572 = vshrl.u32 %v1571, 7
    %v1573 = vsub.s32 0, %v1572
    %v1574 = vrot.slane %v1536, %v1573
    %v1944 = vunpack.c.l.b16 %v1175
    %v1945 = vunpack.c.h.b16 %v1175
    %v1946 = vunpack.c.l.b16 %v1176
    %v1947 = vunpack.c.h.b16 %v1176
    %v1948 = vunpack.c.l.b16 %v1177
    %v1949 = vunpack.c.h.b16 %v1177
    %v1950 = vunpack.c.l.b16 %v1178
    %v1951 = vunpack.c.h.b16 %v1178
    %v1952 = vunpack.c.l.b16 %v1179
    %v1953 = vunpack.c.l.b16 %v1180
    %v1954 = vunpack.c.h.b16 %v1180
    %v1955 = vunpack.c.l.b16 %v1181
    %v1956 = vunpack.c.h.b16 %v1181
    %v1957 = vunpack.c.l.b16 %v1182
    %v1958 = vunpack.c.h.b16 %v1182
    %v1959 = vunpack.c.l.b16 %v1183
    %v1960 = vunpack.c.h.b16 %v1183
    %v1961 = vunpack.c.l.b16 %v1184
    %v1962 = vunpack.c.l.b16 %v1185
    %v1963 = vunpack.c.h.b16 %v1185
    %v1964 = vunpack.c.l.b16 %v1186
    %v1965 = vunpack.c.h.b16 %v1186
    %v1966 = vunpack.c.l.b16 %v1187
    %v1967 = vunpack.c.h.b16 %v1187
    %v1968 = vunpack.c.l.b16 %v1188
    %v1969 = vunpack.c.h.b16 %v1188
    %v1970 = vunpack.c.l.b16 %v1189
    %v1971 = vunpack.c.l.b16 %v1190
    %v1972 = vunpack.c.h.b16 %v1190
    %v1973 = vunpack.c.l.b16 %v1191
    %v1974 = vunpack.c.h.b16 %v1191
    %v1975 = vunpack.c.l.b16 %v1192
    %v1976 = vunpack.c.h.b16 %v1192
    %v1977 = vunpack.c.l.b16 %v1193
    %v1978 = vunpack.c.h.b16 %v1193
    %v1979 = vunpack.c.l.b16 %v1194
    %v1980 = vunpack.c.l.b16 %v1195
    %v1981 = vunpack.c.h.b16 %v1195
    %v1982 = vunpack.c.l.b16 %v1196
    %v1983 = vunpack.c.h.b16 %v1196
    %v1984 = vunpack.c.l.b16 %v1197
    %v1985 = vunpack.c.h.b16 %v1197
    %v1986 = vunpack.c.l.b16 %v1198
    %v1987 = vunpack.c.h.b16 %v1198
    %v1988 = vunpack.c.l.b16 %v1199
    %v1989 = vunpack.c.l.b16 %v1200
    %v1990 = vunpack.c.h.b16 %v1200
    %v1991 = vunpack.c.l.b16 %v1201
    %v1992 = vunpack.c.h.b16 %v1201
    %v1993 = vunpack.c.l.b16 %v1202
    %v1994 = vunpack.c.h.b16 %v1202
    %v1995 = vunpack.c.l.b16 %v1203
    %v1996 = vunpack.c.h.b16 %v1203
    %v1997 = vunpack.c.l.b16 %v1204
    %v1998 = vunpack.c.l.b16 %v1205
    %v1999 = vunpack.c.h.b16 %v1205
    %v2000 = vunpack.c.l.b16 %v1206
    %v2001 = vunpack.c.h.b16 %v1206
    %v2002 = vunpack.c.l.b16 %v1207
    %v2003 = vunpack.c.h.b16 %v1207
    %v2004 = vunpack.c.l.b16 %v1208
    %v2005 = vunpack.c.h.b16 %v1208
    %v2006 = vunpack.c.l.b16 %v1209
    %v2007 = vunpack.c.l.b16 %v1210
    %v2008 = vunpack.c.h.b16 %v1210
    %v2009 = vunpack.c.l.b16 %v1211
    %v2010 = vunpack.c.h.b16 %v1211
    %v2011 = vunpack.c.l.b16 %v1212
    %v2012 = vunpack.c.h.b16 %v1212
    %v2013 = vunpack.c.l.b16 %v1213
    %v2014 = vunpack.c.h.b16 %v1213
    %v2015 = vunpack.c.l.b16 %v1214
    %v2016 = vunpack.c.l.b16 %v1215
    %v2017 = vunpack.c.h.b16 %v1215
    %v2018 = vunpack.c.l.b16 %v1216
    %v2019 = vunpack.c.h.b16 %v1216
    %v2020 = vunpack.c.l.b16 %v1217
    %v2021 = vunpack.c.h.b16 %v1217
    %v2022 = vunpack.c.l.b16 %v1218
    %v2023 = vunpack.c.h.b16 %v1218
    %v2024 = vunpack.c.l.b16 %v1219
    %v2025 = vunpack.c.l.b16 %v1220
    %v2026 = vunpack.c.h.b16 %v1220
    %v2027 = vunpack.c.l.b16 %v1221
    %v2028 = vunpack.c.h.b16 %v1221
    %v2029 = vunpack.c.l.b16 %v1222
    %v2030 = vunpack.c.h.b16 %v1222
    %v2031 = vunpack.c.l.b16 %v1223
    %v2032 = vunpack.c.h.b16 %v1223
    %v2033 = vunpack.c.l.b16 %v1224
    %v2034 = vunpack.c.l.b16 %v1225
    %v2035 = vunpack.c.h.b16 %v1225
    %v2036 = vunpack.c.l.b16 %v1226
    %v2037 = vunpack.c.h.b16 %v1226
    %v2038 = vunpack.c.l.b16 %v1227
    %v2039 = vunpack.c.h.b16 %v1227
    %v2040 = vunpack.c.l.b16 %v1228
    %v2041 = vunpack.c.h.b16 %v1228
    %v2042 = vunpack.c.l.b16 %v1229
    %v2043 = vunpack.c.l.b16 %v1230
    %v2044 = vunpack.c.h.b16 %v1230
    %v2045 = vunpack.c.l.b16 %v1231
    %v2046 = vunpack.c.h.b16 %v1231
    %v2047 = vunpack.c.l.b16 %v1232
    %v2048 = vunpack.c.h.b16 %v1232
    %v2049 = vunpack.c.l.b16 %v1233
    %v2050 = vunpack.c.h.b16 %v1233
    %v2051 = vunpack.c.l.b16 %v1234
    %v2052 = vunpack.c.l.b16 %v1235
    %v2053 = vunpack.c.h.b16 %v1235
    %v2054 = vunpack.c.l.b16 %v1236
    %v2055 = vunpack.c.h.b16 %v1236
    %v2056 = vunpack.c.l.b16 %v1237
    %v2057 = vunpack.c.h.b16 %v1237
    %v2058 = vunpack.c.l.b16 %v1238
    %v2059 = vunpack.c.h.b16 %v1238
    %v2060 = vunpack.c.l.b16 %v1239
    %v2061 = vunpack.c.l.b16 %v1240
    %v2062 = vunpack.c.h.b16 %v1240
    %v2063 = vunpack.c.l.b16 %v1241
    %v2064 = vunpack.c.h.b16 %v1241
    %v2065 = vunpack.c.l.b16 %v1242
    %v2066 = vunpack.c.h.b16 %v1242
    %v2067 = vunpack.c.l.b16 %v1243
    %v2068 = vunpack.c.h.b16 %v1243
    %v2069 = vunpack.c.l.b16 %v1244
    %v2070 = vunpack.c.l.b16 %v1245
    %v2071 = vunpack.c.h.b16 %v1245
    %v2072 = vunpack.c.l.b16 %v1246
    %v2073 = vunpack.c.h.b16 %v1246
    %v2074 = vunpack.c.l.b16 %v1247
    %v2075 = vunpack.c.h.b16 %v1247
    %v2076 = vunpack.c.l.b16 %v1248
    %v2077 = vunpack.c.h.b16 %v1248
    %v2078 = vunpack.c.l.b16 %v1249
    %v2079 = vunpack.c.l.b16 %v1250
    %v2080 = vunpack.c.h.b16 %v1250
    %v2081 = vunpack.c.l.b16 %v1251
    %v2082 = vunpack.c.h.b16 %v1251
    %v2083 = vunpack.c.l.b16 %v1252
    %v2084 = vunpack.c.h.b16 %v1252
    %v2085 = vunpack.c.l.b16 %v1253
    %v2086 = vunpack.c.h.b16 %v1253
    %v2087 = vunpack.c.l.b16 %v1254
    %v2088 = vunpack.c.l.b16 %v1255
    %v2089 = vunpack.c.h.b16 %v1255
    %v2090 = vunpack.c.l.b16 %v1256
    %v2091 = vunpack.c.h.b16 %v1256
    %v2092 = vunpack.c.l.b16 %v1257
    %v2093 = vunpack.c.h.b16 %v1257
    %v2094 = vunpack.c.l.b16 %v1258
    %v2095 = vunpack.c.h.b16 %v1258
    %v2096 = vunpack.c.l.b16 %v1259
    %v2097 = vunpack.c.l.b16 %v1260
    %v2098 = vunpack.c.h.b16 %v1260
    %v2099 = vunpack.c.l.b16 %v1261
    %v2100 = vunpack.c.h.b16 %v1261
    %v2101 = vunpack.c.l.b16 %v1262
    %v2102 = vunpack.c.h.b16 %v1262
    %v2103 = vunpack.c.l.b16 %v1263
    %v2104 = vunpack.c.h.b16 %v1263
    %v2105 = vunpack.c.l.b16 %v1264
    %v2106 = vunpack.c.l.b16 %v1265
    %v2107 = vunpack.c.h.b16 %v1265
    %v2108 = vunpack.c.l.b16 %v1266
    %v2109 = vunpack.c.h.b16 %v1266
    %v2110 = vunpack.c.l.b16 %v1267
    %v2111 = vunpack.c.h.b16 %v1267
    %v2112 = vunpack.c.l.b16 %v1268
    %v2113 = vunpack.c.h.b16 %v1268
    %v2114 = vunpack.c.l.b16 %v1269
    %v2115 = vunpack.c.l.b16 %v1270
    %v2116 = vunpack.c.h.b16 %v1270
    %v2117 = vunpack.c.l.b16 %v1271
    %v2118 = vunpack.c.h.b16 %v1271
    %v2119 = vunpack.c.l.b16 %v1272
    %v2120 = vunpack.c.h.b16 %v1272
    %v2121 = vunpack.c.l.b16 %v1273
    %v2122 = vunpack.c.h.b16 %v1273
    %v2123 = vunpack.c.l.b16 %v1274
    %v2124 = vunpack.c.l.b16 %v1275
    %v2125 = vunpack.c.h.b16 %v1275
    %v2126 = vunpack.c.l.b16 %v1276
    %v2127 = vunpack.c.h.b16 %v1276
    %v2128 = vunpack.c.l.b16 %v1277
    %v2129 = vunpack.c.h.b16 %v1277
    %v2130 = vunpack.c.l.b16 %v1278
    %v2131 = vunpack.c.h.b16 %v1278
    %v2132 = vunpack.c.l.b16 %v1279
    %v2133 = vunpack.c.l.b16 %v1280
    %v2134 = vunpack.c.h.b16 %v1280
    %v2135 = vunpack.c.l.b16 %v1281
    %v2136 = vunpack.c.h.b16 %v1281
    %v2137 = vunpack.c.l.b16 %v1282
    %v2138 = vunpack.c.h.b16 %v1282
    %v2139 = vunpack.c.l.b16 %v1283
    %v2140 = vunpack.c.h.b16 %v1283
    %v2141 = vunpack.c.l.b16 %v1284
    %v2142 = vunpack.c.l.b16 %v1285
    %v2143 = vunpack.c.h.b16 %v1285
    %v2144 = vunpack.c.l.b16 %v1286
    %v2145 = vunpack.c.h.b16 %v1286
    %v2146 = vunpack.c.l.b16 %v1287
    %v2147 = vunpack.c.h.b16 %v1287
    %v2148 = vunpack.c.l.b16 %v1288
    %v2149 = vunpack.c.h.b16 %v1288
    %v2150 = vunpack.c.l.b16 %v1289
    %v2151 = vunpack.c.l.b16 %v1290
    %v2152 = vunpack.c.h.b16 %v1290
    %v2153 = vunpack.c.l.b16 %v1291
    %v2154 = vunpack.c.h.b16 %v1291
    %v2155 = vunpack.c.l.b16 %v1292
    %v2156 = vunpack.c.h.b16 %v1292
    %v2157 = vunpack.c.l.b16 %v1293
    %v2158 = vunpack.c.h.b16 %v1293
    %v2159 = vunpack.c.l.b16 %v1294
    %v2160 = vunpack.c.l.b16 %v1295
    %v2161 = vunpack.c.h.b16 %v1295
    %v2162 = vunpack.c.l.b16 %v1296
    %v2163 = vunpack.c.h.b16 %v1296
    %v2164 = vunpack.c.l.b16 %v1297
    %v2165 = vunpack.c.h.b16 %v1297
    %v2166 = vunpack.c.l.b16 %v1298
    %v2167 = vunpack.c.h.b16 %v1298
    %v2168 = vunpack.c.l.b16 %v1299
    %v2169 = vunpack.c.l.b16 %v1300
    %v2170 = vunpack.c.h.b16 %v1300
    %v2171 = vunpack.c.l.b16 %v1301
    %v2172 = vunpack.c.h.b16 %v1301
    %v2173 = vunpack.c.l.b16 %v1302
    %v2174 = vunpack.c.h.b16 %v1302
    %v2175 = vunpack.c.l.b16 %v1303
    %v2176 = vunpack.c.h.b16 %v1303
    %v2177 = vunpack.c.l.b16 %v1304
    %v2178 = vunpack.c.l.b16 %v1305
    %v2179 = vunpack.c.h.b16 %v1305
    %v2180 = vunpack.c.l.b16 %v1306
    %v2181 = vunpack.c.h.b16 %v1306
    %v2182 = vunpack.c.l.b16 %v1307
    %v2183 = vunpack.c.h.b16 %v1307
    %v2184 = vunpack.c.l.b16 %v1308
    %v2185 = vunpack.c.h.b16 %v1308
    %v2186 = vunpack.c.l.b16 %v1309
    %v2187 = vunpack.c.l.b16 %v1310
    %v2188 = vunpack.c.h.b16 %v1310
    %v2189 = vunpack.c.l.b16 %v1311
    %v2190 = vunpack.c.h.b16 %v1311
    %v2191 = vunpack.c.l.b16 %v1312
    %v2192 = vunpack.c.h.b16 %v1312
    %v2193 = vunpack.c.l.b16 %v1313
    %v2194 = vunpack.c.h.b16 %v1313
    %v2195 = vunpack.c.l.b16 %v1314
    %v2196 = vunpack.c.l.b16 %v1315
    %v2197 = vunpack.c.h.b16 %v1315
    %v2198 = vunpack.c.l.b16 %v1316
    %v2199 = vunpack.c.h.b16 %v1316
    %v2200 = vunpack.c.l.b16 %v1317
    %v2201 = vunpack.c.h.b16 %v1317
    %v2202 = vunpack.c.l.b16 %v1318
    %v2203 = vunpack.c.h.b16 %v1318
    %v2204 = vunpack.c.l.b16 %v1319
    %v2205 = vunpack.c.l.b16 %v1320
    %v2206 = vunpack.c.h.b16 %v1320
    %v2207 = vunpack.c.l.b16 %v1321
    %v2208 = vunpack.c.h.b16 %v1321
    %v2209 = vunpack.c.l.b16 %v1322
    %v2210 = vunpack.c.h.b16 %v1322
    %v2211 = vunpack.c.l.b16 %v1323
    %v2212 = vunpack.c.h.b16 %v1323
    %v2213 = vunpack.c.l.b16 %v1324
    %v2214 = vunpack.c.l.b16 %v1325
    %v2215 = vunpack.c.h.b16 %v1325
    %v2216 = vunpack.c.l.b16 %v1326
    %v2217 = vunpack.c.h.b16 %v1326
    %v2218 = vunpack.c.l.b16 %v1327
    %v2219 = vunpack.c.h.b16 %v1327
    %v2220 = vunpack.c.l.b16 %v1328
    %v2221 = vunpack.c.h.b16 %v1328
    %v2222 = vunpack.c.l.b16 %v1329
    %v2223 = vunpack.c.l.b16 %v1330
    %v2224 = vunpack.c.h.b16 %v1330
    %v2225 = vunpack.c.l.b16 %v1331
    %v2226 = vunpack.c.h.b16 %v1331
    %v2227 = vunpack.c.l.b16 %v1332
    %v2228 = vunpack.c.h.b16 %v1332
    %v2229 = vunpack.c.l.b16 %v1333
    %v2230 = vunpack.c.h.b16 %v1333
    %v2231 = vunpack.c.l.b16 %v1334
    %v2232 = vunpack.c.l.b16 %v1335
    %v2233 = vunpack.c.h.b16 %v1335
    %v2234 = vunpack.c.l.b16 %v1336
    %v2235 = vunpack.c.h.b16 %v1336
    %v2236 = vunpack.c.l.b16 %v1337
    %v2237 = vunpack.c.h.b16 %v1337
    %v2238 = vunpack.c.l.b16 %v1338
    %v2239 = vunpack.c.h.b16 %v1338
    %v2240 = vunpack.c.l.b16 %v1339
    %v2241 = vunpack.c.l.b16 %v1340
    %v2242 = vunpack.c.h.b16 %v1340
    %v2243 = vunpack.c.l.b16 %v1341
    %v2244 = vunpack.c.h.b16 %v1341
    %v2245 = vunpack.c.l.b16 %v1342
    %v2246 = vunpack.c.h.b16 %v1342
    %v2247 = vunpack.c.l.b16 %v1343
    %v2248 = vunpack.c.h.b16 %v1343
    %v2249 = vunpack.c.l.b16 %v1344
    %v2250 = vunpack.c.l.b16 %v1345
    %v2251 = vunpack.c.h.b16 %v1345
    %v2252 = vunpack.c.l.b16 %v1346
    %v2253 = vunpack.c.h.b16 %v1346
    %v2254 = vunpack.c.l.b16 %v1347
    %v2255 = vunpack.c.h.b16 %v1347
    %v2256 = vunpack.c.l.b16 %v1348
    %v2257 = vunpack.c.h.b16 %v1348
    %v2258 = vunpack.c.l.b16 %v1349
    %v2259 = vunpack.c.l.b16 %v1350
    %v2260 = vunpack.c.h.b16 %v1350
    %v2261 = vunpack.c.l.b16 %v1351
    %v2262 = vunpack.c.h.b16 %v1351
    %v2263 = vunpack.c.l.b16 %v1352
    %v2264 = vunpack.c.h.b16 %v1352
    %v2265 = vunpack.c.l.b16 %v1353
    %v2266 = vunpack.c.h.b16 %v1353
    %v2267 = vunpack.c.l.b16 %v1354
    %v2268 = vunpack.c.l.b16 %v1355
    %v2269 = vunpack.c.h.b16 %v1355
    %v2270 = vunpack.c.l.b16 %v1356
    %v2271 = vunpack.c.h.b16 %v1356
    %v2272 = vunpack.c.l.b16 %v1357
    %v2273 = vunpack.c.h.b16 %v1357
    %v2274 = vunpack.c.l.b16 %v1358
    %v2275 = vunpack.c.h.b16 %v1358
    %v2276 = vunpack.c.l.b16 %v1359
    %v2277 = vunpack.c.l.b16 %v1360
    %v2278 = vunpack.c.h.b16 %v1360
    %v2279 = vunpack.c.l.b16 %v1361
    %v2280 = vunpack.c.h.b16 %v1361
    %v2281 = vunpack.c.l.b16 %v1362
    %v2282 = vunpack.c.h.b16 %v1362
    %v2283 = vunpack.c.l.b16 %v1363
    %v2284 = vunpack.c.h.b16 %v1363
    %v2285 = vunpack.c.l.b16 %v1364
    %v2286 = vunpack.c.l.b16 %v1365
    %v2287 = vunpack.c.h.b16 %v1365
    %v2288 = vunpack.c.l.b16 %v1366
    %v2289 = vunpack.c.h.b16 %v1366
    %v2290 = vunpack.c.l.b16 %v1367
    %v2291 = vunpack.c.h.b16 %v1367
    %v2292 = vunpack.c.l.b16 %v1368
    %v2293 = vunpack.c.h.b16 %v1368
    %v2294 = vunpack.c.l.b16 %v1369
    %v2295 = vunpack.c.l.b16 %v1370
    %v2296 = vunpack.c.h.b16 %v1370
    %v2297 = vunpack.c.l.b16 %v1371
    %v2298 = vunpack.c.h.b16 %v1371
    %v2299 = vunpack.c.l.b16 %v1372
    %v2300 = vunpack.c.h.b16 %v1372
    %v2301 = vunpack.c.l.b16 %v1373
    %v2302 = vunpack.c.h.b16 %v1373
    %v2303 = vunpack.c.l.b16 %v1374
    %v2304 = vunpack.c.l.b16 %v1375
    %v2305 = vunpack.c.h.b16 %v1375
    %v2306 = vunpack.c.l.b16 %v1376
    %v2307 = vunpack.c.h.b16 %v1376
    %v2308 = vunpack.c.l.b16 %v1377
    %v2309 = vunpack.c.h.b16 %v1377
    %v2310 = vunpack.c.l.b16 %v1378
    %v2311 = vunpack.c.h.b16 %v1378
    %v2312 = vunpack.c.l.b16 %v1379
    %v2313 = vunpack.c.l.b16 %v1380
    %v2314 = vunpack.c.h.b16 %v1380
    %v2315 = vunpack.c.l.b16 %v1381
    %v2316 = vunpack.c.h.b16 %v1381
    %v2317 = vunpack.c.l.b16 %v1382
    %v2318 = vunpack.c.h.b16 %v1382
    %v2319 = vunpack.c.l.b16 %v1383
    %v2320 = vunpack.c.h.b16 %v1383
    %v2321 = vunpack.c.l.b16 %v1384
    %v2322 = vunpack.c.l.b16 %v1385
    %v2323 = vunpack.c.h.b16 %v1385
    %v2324 = vunpack.c.l.b16 %v1386
    %v2325 = vunpack.c.h.b16 %v1386
    %v2326 = vunpack.c.l.b16 %v1387
    %v2327 = vunpack.c.h.b16 %v1387
    %v2328 = vunpack.c.l.b16 %v1388
    %v2329 = vunpack.c.h.b16 %v1388
    %v2330 = vunpack.c.l.b16 %v1389
    %v2331 = vunpack.c.l.b16 %v1390
    %v2332 = vunpack.c.h.b16 %v1390
    %v2333 = vunpack.c.l.b16 %v1391
    %v2334 = vunpack.c.h.b16 %v1391
    %v2335 = vunpack.c.l.b16 %v1392
    %v2336 = vunpack.c.h.b16 %v1392
    %v2337 = vunpack.c.l.b16 %v1393
    %v2338 = vunpack.c.h.b16 %v1393
    %v2339 = vunpack.c.l.b16 %v1394
    %v2340 = vunpack.c.l.b16 %v1395
    %v2341 = vunpack.c.h.b16 %v1395
    %v2342 = vunpack.c.l.b16 %v1396
    %v2343 = vunpack.c.h.b16 %v1396
    %v2344 = vunpack.c.l.b16 %v1397
    %v2345 = vunpack.c.h.b16 %v1397
    %v2346 = vunpack.c.l.b16 %v1398
    %v2347 = vunpack.c.h.b16 %v1398
    %v2348 = vunpack.c.l.b16 %v1399
    %v2349 = vunpack.c.l.b16 %v1400
    %v2350 = vunpack.c.h.b16 %v1400
    %v2351 = vunpack.c.l.b16 %v1401
    %v2352 = vunpack.c.h.b16 %v1401
    %v2353 = vunpack.c.l.b16 %v1402
    %v2354 = vunpack.c.h.b16 %v1402
    %v2355 = vunpack.c.l.b16 %v1403
    %v2356 = vunpack.c.h.b16 %v1403
    %v2357 = vunpack.c.l.b16 %v1404
    %v2358 = vunpack.c.l.b16 %v1405
    %v2359 = vunpack.c.h.b16 %v1405
    %v2360 = vunpack.c.l.b16 %v1406
    %v2361 = vunpack.c.h.b16 %v1406
    %v2362 = vunpack.c.l.b16 %v1407
    %v2363 = vunpack.c.h.b16 %v1407
    %v2364 = vunpack.c.l.b16 %v1408
    %v2365 = vunpack.c.h.b16 %v1408
    %v2366 = vunpack.c.l.b16 %v1409
    %v2367 = vunpack.c.l.b16 %v1410
    %v2368 = vunpack.c.h.b16 %v1410
    %v2369 = vunpack.c.l.b16 %v1411
    %v2370 = vunpack.c.h.b16 %v1411
    %v2371 = vunpack.c.l.b16 %v1412
    %v2372 = vunpack.c.h.b16 %v1412
    %v2373 = vunpack.c.l.b16 %v1413
    %v2374 = vunpack.c.h.b16 %v1413
    %v2375 = vunpack.c.l.b16 %v1414
    %v2376 = vunpack.c.l.b16 %v1415
    %v2377 = vunpack.c.h.b16 %v1415
    %v2378 = vunpack.c.l.b16 %v1416
    %v2379 = vunpack.c.h.b16 %v1416
    %v2380 = vunpack.c.l.b16 %v1417
    %v2381 = vunpack.c.h.b16 %v1417
    %v2382 = vunpack.c.l.b16 %v1418
    %v2383 = vunpack.c.h.b16 %v1418
    %v2384 = vunpack.c.l.b16 %v1419
    %v2385 = vunpack.c.l.b16 %v1420
    %v2386 = vunpack.c.h.b16 %v1420
    %v2387 = vunpack.c.l.b16 %v1421
    %v2388 = vunpack.c.h.b16 %v1421
    %v2389 = vunpack.c.l.b16 %v1422
    %v2390 = vunpack.c.h.b16 %v1422
    %v2391 = vunpack.c.l.b16 %v1423
    %v2392 = vunpack.c.h.b16 %v1423
    %v2393 = vunpack.c.l.b16 %v1424
    %v2394 = vunpack.c.l.b16 %v1425
    %v2395 = vunpack.c.h.b16 %v1425
    %v2396 = vunpack.c.l.b16 %v1426
    %v2397 = vunpack.c.h.b16 %v1426
    %v2398 = vunpack.c.l.b16 %v1427
    %v2399 = vunpack.c.h.b16 %v1427
    %v2400 = vunpack.c.l.b16 %v1428
    %v2401 = vunpack.c.h.b16 %v1428
    %v2402 = vunpack.c.l.b16 %v1429
    %v2403 = vunpack.c.l.b16 %v1430
    %v2404 = vunpack.c.h.b16 %v1430
    %v2405 = vunpack.c.l.b16 %v1431
    %v2406 = vunpack.c.h.b16 %v1431
    %v2407 = vunpack.c.l.b16 %v1432
    %v2408 = vunpack.c.h.b16 %v1432
    %v2409 = vunpack.c.l.b16 %v1433
    %v2410 = vunpack.c.h.b16 %v1433
    %v2411 = vunpack.c.l.b16 %v1434
    %v2412 = vunpack.c.l.b16 %v1435
    %v2413 = vunpack.c.h.b16 %v1435
    %v2414 = vunpack.c.l.b16 %v1436
    %v2415 = vunpack.c.h.b16 %v1436
    %v2416 = vunpack.c.l.b16 %v1437
    %v2417 = vunpack.c.h.b16 %v1437
    %v2418 = vunpack.c.l.b16 %v1438
    %v2419 = vunpack.c.h.b16 %v1438
    %v2420 = vunpack.c.l.b16 %v1439
    %v2421 = vunpack.c.l.b16 %v1440
    %v2422 = vunpack.c.h.b16 %v1440
    %v2423 = vunpack.c.l.b16 %v1441
    %v2424 = vunpack.c.h.b16 %v1441
    %v2425 = vunpack.c.l.b16 %v1442
    %v2426 = vunpack.c.h.b16 %v1442
    %v2427 = vunpack.c.l.b16 %v1443
    %v2428 = vunpack.c.h.b16 %v1443
    %v2429 = vunpack.c.l.b16 %v1444
    %v2430 = vunpack.c.l.b16 %v1445
    %v2431 = vunpack.c.h.b16 %v1445
    %v2432 = vunpack.c.l.b16 %v1446
    %v2433 = vunpack.c.h.b16 %v1446
    %v2434 = vunpack.c.l.b16 %v1447
    %v2435 = vunpack.c.h.b16 %v1447
    %v2436 = vunpack.c.l.b16 %v1448
    %v2437 = vunpack.c.h.b16 %v1448
    %v2438 = vunpack.c.l.b16 %v1449
    %v2439 = vunpack.c.l.b16 %v1450
    %v2440 = vunpack.c.h.b16 %v1450
    %v2441 = vunpack.c.l.b16 %v1451
    %v2442 = vunpack.c.h.b16 %v1451
    %v2443 = vunpack.c.l.b16 %v1452
    %v2444 = vunpack.c.h.b16 %v1452
    %v2445 = vunpack.c.l.b16 %v1453
    %v2446 = vunpack.c.h.b16 %v1453
    %v2447 = vunpack.c.l.b16 %v1454
    %v2448 = vunpack.c.l.b16 %v1455
    %v2449 = vunpack.c.h.b16 %v1455
    %v2450 = vunpack.c.l.b16 %v1456
    %v2451 = vunpack.c.h.b16 %v1456
    %v2452 = vunpack.c.l.b16 %v1457
    %v2453 = vunpack.c.h.b16 %v1457
    %v2454 = vunpack.c.l.b16 %v1458
    %v2455 = vunpack.c.h.b16 %v1458
    %v2456 = vunpack.c.l.b16 %v1459
    %v2457 = vunpack.c.l.b16 %v1460
    %v2458 = vunpack.c.h.b16 %v1460
    %v2459 = vunpack.c.l.b16 %v1461
    %v2460 = vunpack.c.h.b16 %v1461
    %v2461 = vunpack.c.l.b16 %v1462
    %v2462 = vunpack.c.h.b16 %v1462
    %v2463 = vunpack.c.l.b16 %v1463
    %v2464 = vunpack.c.h.b16 %v1463
    %v2465 = vunpack.c.l.b16 %v1464
    %v2466 = vunpack.c.l.b16 %v1465
    %v2467 = vunpack.c.h.b16 %v1465
    %v2468 = vunpack.c.l.b16 %v1466
    %v2469 = vunpack.c.h.b16 %v1466
    %v2470 = vunpack.c.l.b16 %v1467
    %v2471 = vunpack.c.h.b16 %v1467
    %v2472 = vunpack.c.l.b16 %v1468
    %v2473 = vunpack.c.h.b16 %v1468
    %v2474 = vunpack.c.l.b16 %v1469
    %v2475 = vunpack.c.l.b16 %v1470
    %v2476 = vunpack.c.h.b16 %v1470
    %v2477 = vunpack.c.l.b16 %v1471
    %v2478 = vunpack.c.h.b16 %v1471
    %v2479 = vunpack.c.l.b16 %v1472
    %v2480 = vunpack.c.h.b16 %v1472
    %v2481 = vunpack.c.l.b16 %v1473
    %v2482 = vunpack.c.h.b16 %v1473
    %v2483 = vunpack.c.l.b16 %v1474
    %v2484 = vunpack.c.l.b16 %v1475
    %v2485 = vunpack.c.h.b16 %v1475
    %v2486 = vunpack.c.l.b16 %v1476
    %v2487 = vunpack.c.h.b16 %v1476
    %v2488 = vunpack.c.l.b16 %v1477
    %v2489 = vunpack.c.h.b16 %v1477
    %v2490 = vunpack.c.l.b16 %v1478
    %v2491 = vunpack.c.h.b16 %v1478
    %v2492 = vunpack.c.l.b16 %v1479
    %v2493 = vunpack.c.l.b16 %v1480
    %v2494 = vunpack.c.h.b16 %v1480
    %v2495 = vunpack.c.l.b16 %v1481
    %v2496 = vunpack.c.h.b16 %v1481
    %v2497 = vunpack.c.l.b16 %v1482
    %v2498 = vunpack.c.h.b16 %v1482
    %v2499 = vunpack.c.l.b16 %v1483
    %v2500 = vunpack.c.h.b16 %v1483
    %v2501 = vunpack.c.l.b16 %v1484
    %v2502 = vunpack.c.l.b16 %v1485
    %v2503 = vunpack.c.h.b16 %v1485
    %v2504 = vunpack.c.l.b16 %v1486
    %v2505 = vunpack.c.h.b16 %v1486
    %v2506 = vunpack.c.l.b16 %v1487
    %v2507 = vunpack.c.h.b16 %v1487
    %v2508 = vunpack.c.l.b16 %v1488
    %v2509 = vunpack.c.h.b16 %v1488
    %v2510 = vunpack.c.l.b16 %v1489
    %v2511 = vunpack.c.l.b16 %v1490
    %v2512 = vunpack.c.h.b16 %v1490
    %v2513 = vunpack.c.l.b16 %v1491
    %v2514 = vunpack.c.h.b16 %v1491
    %v2515 = vunpack.c.l.b16 %v1492
    %v2516 = vunpack.c.h.b16 %v1492
    %v2517 = vunpack.c.l.b16 %v1493
    %v2518 = vunpack.c.h.b16 %v1493
    %v2519 = vunpack.c.l.b16 %v1494
    %v2520 = vunpack.c.l.b16 %v1495
    %v2521 = vunpack.c.h.b16 %v1495
    %v2522 = vunpack.c.l.b16 %v1496
    %v2523 = vunpack.c.h.b16 %v1496
    %v2524 = vunpack.c.l.b16 %v1497
    %v2525 = vunpack.c.h.b16 %v1497
    %v2526 = vunpack.c.l.b16 %v1498
    %v2527 = vunpack.c.h.b16 %v1498
    %v2528 = vunpack.c.l.b16 %v1499
    %v2529 = vunpack.c.l.b16 %v1500
    %v2530 = vunpack.c.h.b16 %v1500
    %v2531 = vunpack.c.l.b16 %v1501
    %v2532 = vunpack.c.h.b16 %v1501
    %v2533 = vunpack.c.l.b16 %v1502
    %v2534 = vunpack.c.h.b16 %v1502
    %v2535 = vunpack.c.l.b16 %v1503
    %v2536 = vunpack.c.h.b16 %v1503
    %v2537 = vunpack.c.l.b16 %v1504
    %v2538 = vunpack.c.l.b16 %v1505
    %v2539 = vunpack.c.h.b16 %v1505
    %v2540 = vunpack.c.l.b16 %v1506
    %v2541 = vunpack.c.h.b16 %v1506
    %v2542 = vunpack.c.l.b16 %v1507
    %v2543 = vunpack.c.h.b16 %v1507
    %v2544 = vunpack.c.l.b16 %v1508
    %v2545 = vunpack.c.h.b16 %v1508
    %v2546 = vunpack.c.l.b16 %v1509
    %v2547 = vunpack.c.l.b16 %v1510
    %v2548 = vunpack.c.h.b16 %v1510
    %v2549 = vunpack.c.l.b16 %v1511
    %v2550 = vunpack.c.h.b16 %v1511
    %v2551 = vunpack.c.l.b16 %v1512
    %v2552 = vunpack.c.h.b16 %v1512
    %v2553 = vunpack.c.l.b16 %v1513
    %v2554 = vunpack.c.h.b16 %v1513
    %v2555 = vunpack.c.l.b16 %v1514
    %v2556 = vunpack.c.l.b16 %v1515
    %v2557 = vunpack.c.h.b16 %v1515
    %v2558 = vunpack.c.l.b16 %v1516
    %v2559 = vunpack.c.h.b16 %v1516
    %v2560 = vunpack.c.l.b16 %v1517
    %v2561 = vunpack.c.h.b16 %v1517
    %v2562 = vunpack.c.l.b16 %v1518
    %v2563 = vunpack.c.h.b16 %v1518
    %v2564 = vunpack.c.l.b16 %v1519
    %v2565 = vunpack.c.l.b16 %v1520
    %v2566 = vunpack.c.h.b16 %v1520
    %v2567 = vunpack.c.l.b16 %v1521
    %v2568 = vunpack.c.h.b16 %v1521
    %v2569 = vunpack.c.l.b16 %v1522
    %v2570 = vunpack.c.h.b16 %v1522
    %v2571 = vunpack.c.l.b16 %v1523
    %v2572 = vunpack.c.h.b16 %v1523
    %v2573 = vunpack.c.l.b16 %v1524
    %v2574 = vunpack.c.l.b16 %v1525
    %v2575 = vunpack.c.h.b16 %v1525
    %v2576 = vunpack.c.l.b16 %v1526
    %v2577 = vunpack.c.h.b16 %v1526
    %v2578 = vunpack.c.l.b16 %v1527
    %v2579 = vunpack.c.h.b16 %v1527
    %v2580 = vunpack.c.l.b16 %v1528
    %v2581 = vunpack.c.h.b16 %v1528
    %v2582 = vunpack.c.l.b16 %v1529
    %v2583 = vunpack.c.l.b16 %v1530
    %v2584 = vunpack.c.h.b16 %v1530
    %v2585 = vunpack.c.l.b16 %v1531
    %v2586 = vunpack.c.h.b16 %v1531
    %v2587 = vunpack.c.l.b16 %v1532
    %v2588 = vunpack.c.h.b16 %v1532
    %v2589 = vunpack.c.l.b16 %v1533
    %v2590 = vunpack.c.h.b16 %v1533
    %v2591 = vunpack.c.l.b16 %v1534
    %v2592 = vpack.c.b16 %v1953, %v1944
    %v2593 = vpack.c.b16 %v1954, %v1945
    %v2594 = vpack.c.b16 %v1955, %v1946
    %v2595 = vpack.c.b16 %v1956, %v1947
    %v2596 = vpack.c.b16 %v1957, %v1948
    %v2597 = vpack.c.b16 %v1958, %v1949
    %v2598 = vpack.c.b16 %v1959, %v1950
    %v2599 = vpack.c.b16 %v1960, %v1951
    %v2600 = vpack.c.b16 %v1961, %v1952
    %v2601 = vpack.c.b16 %v1971, %v1962
    %v2602 = vpack.c.b16 %v1972, %v1963
    %v2603 = vpack.c.b16 %v1973, %v1964
    %v2604 = vpack.c.b16 %v1974, %v1965
    %v2605 = vpack.c.b16 %v1975, %v1966
    %v2606 = vpack.c.b16 %v1976, %v1967
    %v2607 = vpack.c.b16 %v1977, %v1968
    %v2608 = vpack.c.b16 %v1978, %v1969
    %v2609 = vpack.c.b16 %v1979, %v1970
    %v2610 = vpack.c.b16 %v1989, %v1980
    %v2611 = vpack.c.b16 %v1990, %v1981
    %v2612 = vpack.c.b16 %v1991, %v1982
    %v2613 = vpack.c.b16 %v1992, %v1983
    %v2614 = vpack.c.b16 %v1993, %v1984
    %v2615 = vpack.c.b16 %v1994, %v1985
    %v2616 = vpack.c.b16 %v1995, %v1986
    %v2617 = vpack.c.b16 %v1996, %v1987
    %v2618 = vpack.c.b16 %v1997, %v1988
    %v2619 = vpack.c.b16 %v2007, %v1998
    %v2620 = vpack.c.b16 %v2008, %v1999
    %v2621 = vpack.c.b16 %v2009, %v2000
    %v2622 = vpack.c.b16 %v2010, %v2001
    %v2623 = vpack.c.b16 %v2011, %v2002
    %v2624 = vpack.c.b16 %v2012, %v2003
    %v2625 = vpack.c.b16 %v2013, %v2004
    %v2626 = vpack.c.b16 %v2014, %v2005
    %v2627 = vpack.c.b16 %v2015, %v2006
    %v2628 = vpack.c.b16 %v2025, %v2016
    %v2629 = vpack.c.b16 %v2026, %v2017
    %v2630 = vpack.c.b16 %v2027, %v2018
    %v2631 = vpack.c.b16 %v2028, %v2019
    %v2632 = vpack.c.b16 %v2029, %v2020
    %v2633 = vpack.c.b16 %v2030, %v2021
    %v2634 = vpack.c.b16 %v2031, %v2022
    %v2635 = vpack.c.b16 %v2032, %v2023
    %v2636 = vpack.c.b16 %v2033, %v2024
    %v2637 = vpack.c.b16 %v2043, %v2034
    %v2638 = vpack.c.b16 %v2044, %v2035
    %v2639 = vpack.c.b16 %v2045, %v2036
    %v2640 = vpack.c.b16 %v2046, %v2037
    %v2641 = vpack.c.b16 %v2047, %v2038
    %v2642 = vpack.c.b16 %v2048, %v2039
    %v2643 = vpack.c.b16 %v2049, %v2040
    %v2644 = vpack.c.b16 %v2050, %v2041
    %v2645 = vpack.c.b16 %v2051, %v2042
    %v2646 = vpack.c.b16 %v2061, %v2052
    %v2647 = vpack.c.b16 %v2062, %v2053
    %v2648 = vpack.c.b16 %v2063, %v2054
    %v2649 = vpack.c.b16 %v2064, %v2055
    %v2650 = vpack.c.b16 %v2065, %v2056
    %v2651 = vpack.c.b16 %v2066, %v2057
    %v2652 = vpack.c.b16 %v2067, %v2058
    %v2653 = vpack.c.b16 %v2068, %v2059
    %v2654 = vpack.c.b16 %v2069, %v2060
    %v2655 = vpack.c.b16 %v2079, %v2070
    %v2656 = vpack.c.b16 %v2080, %v2071
    %v2657 = vpack.c.b16 %v2081, %v2072
    %v2658 = vpack.c.b16 %v2082, %v2073
    %v2659 = vpack.c.b16 %v2083, %v2074
    %v2660 = vpack.c.b16 %v2084, %v2075
    %v2661 = vpack.c.b16 %v2085, %v2076
    %v2662 = vpack.c.b16 %v2086, %v2077
    %v2663 = vpack.c.b16 %v2087, %v2078
    %v2664 = vpack.c.b16 %v2097, %v2088
    %v2665 = vpack.c.b16 %v2098, %v2089
    %v2666 = vpack.c.b16 %v2099, %v2090
    %v2667 = vpack.c.b16 %v2100, %v2091
    %v2668 = vpack.c.b16 %v2101, %v2092
    %v2669 = vpack.c.b16 %v2102, %v2093
    %v2670 = vpack.c.b16 %v2103, %v2094
    %v2671 = vpack.c.b16 %v2104, %v2095
    %v2672 = vpack.c.b16 %v2105, %v2096
    %v2673 = vpack.c.b16 %v2115, %v2106
    %v2674 = vpack.c.b16 %v2116, %v2107
    %v2675 = vpack.c.b16 %v2117, %v2108
    %v2676 = vpack.c.b16 %v2118, %v2109
    %v2677 = vpack.c.b16 %v2119, %v2110
    %v2678 = vpack.c.b16 %v2120, %v2111
    %v2679 = vpack.c.b16 %v2121, %v2112
    %v2680 = vpack.c.b16 %v2122, %v2113
    %v2681 = vpack.c.b16 %v2123, %v2114
    %v2682 = vpack.c.b16 %v2133, %v2124
    %v2683 = vpack.c.b16 %v2134, %v2125
    %v2684 = vpack.c.b16 %v2135, %v2126
    %v2685 = vpack.c.b16 %v2136, %v2127
    %v2686 = vpack.c.b16 %v2137, %v2128
    %v2687 = vpack.c.b16 %v2138, %v2129
    %v2688 = vpack.c.b16 %v2139, %v2130
    %v2689 = vpack.c.b16 %v2140, %v2131
    %v2690 = vpack.c.b16 %v2141, %v2132
    %v2691 = vpack.c.b16 %v2151, %v2142
    %v2692 = vpack.c.b16 %v2152, %v2143
    %v2693 = vpack.c.b16 %v2153, %v2144
    %v2694 = vpack.c.b16 %v2154, %v2145
    %v2695 = vpack.c.b16 %v2155, %v2146
    %v2696 = vpack.c.b16 %v2156, %v2147
    %v2697 = vpack.c.b16 %v2157, %v2148
    %v2698 = vpack.c.b16 %v2158, %v2149
    %v2699 = vpack.c.b16 %v2159, %v2150
    %v2700 = vpack.c.b16 %v2169, %v2160
    %v2701 = vpack.c.b16 %v2170, %v2161
    %v2702 = vpack.c.b16 %v2171, %v2162
    %v2703 = vpack.c.b16 %v2172, %v2163
    %v2704 = vpack.c.b16 %v2173, %v2164
    %v2705 = vpack.c.b16 %v2174, %v2165
    %v2706 = vpack.c.b16 %v2175, %v2166
    %v2707 = vpack.c.b16 %v2176, %v2167
    %v2708 = vpack.c.b16 %v2177, %v2168
    %v2709 = vpack.c.b16 %v2187, %v2178
    %v2710 = vpack.c.b16 %v2188, %v2179
    %v2711 = vpack.c.b16 %v2189, %v2180
    %v2712 = vpack.c.b16 %v2190, %v2181
    %v2713 = vpack.c.b16 %v2191, %v2182
    %v2714 = vpack.c.b16 %v2192, %v2183
    %v2715 = vpack.c.b16 %v2193, %v2184
    %v2716 = vpack.c.b16 %v2194, %v2185
    %v2717 = vpack.c.b16 %v2195, %v2186
    %v2718 = vpack.c.b16 %v2205, %v2196
    %v2719 = vpack.c.b16 %v2206, %v2197
    %v2720 = vpack.c.b16 %v2207, %v2198
    %v2721 = vpack.c.b16 %v2208, %v2199
    %v2722 = vpack.c.b16 %v2209, %v2200
    %v2723 = vpack.c.b16 %v2210, %v2201
    %v2724 = vpack.c.b16 %v2211, %v2202
    %v2725 = vpack.c.b16 %v2212, %v2203
    %v2726 = vpack.c.b16 %v2213, %v2204
    %v2727 = vpack.c.b16 %v2223, %v2214
    %v2728 = vpack.c.b16 %v2224, %v2215
    %v2729 = vpack.c.b16 %v2225, %v2216
    %v2730 = vpack.c.b16 %v2226, %v2217
    %v2731 = vpack.c.b16 %v2227, %v2218
    %v2732 = vpack.c.b16 %v2228, %v2219
    %v2733 = vpack.c.b16 %v2229, %v2220
    %v2734 = vpack.c.b16 %v2230, %v2221
    %v2735 = vpack.c.b16 %v2231, %v2222
    %v2736 = vpack.c.b16 %v2241, %v2232
    %v2737 = vpack.c.b16 %v2242, %v2233
    %v2738 = vpack.c.b16 %v2243, %v2234
    %v2739 = vpack.c.b16 %v2244, %v2235
    %v2740 = vpack.c.b16 %v2245, %v2236
    %v2741 = vpack.c.b16 %v2246, %v2237
    %v2742 = vpack.c.b16 %v2247, %v2238
    %v2743 = vpack.c.b16 %v2248, %v2239
    %v2744 = vpack.c.b16 %v2249, %v2240
    %v2745 = vpack.c.b16 %v2259, %v2250
    %v2746 = vpack.c.b16 %v2260, %v2251
    %v2747 = vpack.c.b16 %v2261, %v2252
    %v2748 = vpack.c.b16 %v2262, %v2253
    %v2749 = vpack.c.b16 %v2263, %v2254
    %v2750 = vpack.c.b16 %v2264, %v2255
    %v2751 = vpack.c.b16 %v2265, %v2256
    %v2752 = vpack.c.b16 %v2266, %v2257
    %v2753 = vpack.c.b16 %v2267, %v2258
    %v2754 = vpack.c.b16 %v2277, %v2268
    %v2755 = vpack.c.b16 %v2278, %v2269
    %v2756 = vpack.c.b16 %v2279, %v2270
    %v2757 = vpack.c.b16 %v2280, %v2271
    %v2758 = vpack.c.b16 %v2281, %v2272
    %v2759 = vpack.c.b16 %v2282, %v2273
    %v2760 = vpack.c.b16 %v2283, %v2274
    %v2761 = vpack.c.b16 %v2284, %v2275
    %v2762 = vpack.c.b16 %v2285, %v2276
    %v2763 = vpack.c.b16 %v2295, %v2286
    %v2764 = vpack.c.b16 %v2296, %v2287
    %v2765 = vpack.c.b16 %v2297, %v2288
    %v2766 = vpack.c.b16 %v2298, %v2289
    %v2767 = vpack.c.b16 %v2299, %v2290
    %v2768 = vpack.c.b16 %v2300, %v2291
    %v2769 = vpack.c.b16 %v2301, %v2292
    %v2770 = vpack.c.b16 %v2302, %v2293
    %v2771 = vpack.c.b16 %v2303, %v2294
    %v2772 = vpack.c.b16 %v2313, %v2304
    %v2773 = vpack.c.b16 %v2314, %v2305
    %v2774 = vpack.c.b16 %v2315, %v2306
    %v2775 = vpack.c.b16 %v2316, %v2307
    %v2776 = vpack.c.b16 %v2317, %v2308
    %v2777 = vpack.c.b16 %v2318, %v2309
    %v2778 = vpack.c.b16 %v2319, %v2310
    %v2779 = vpack.c.b16 %v2320, %v2311
    %v2780 = vpack.c.b16 %v2321, %v2312
    %v2781 = vpack.c.b16 %v2331, %v2322
    %v2782 = vpack.c.b16 %v2332, %v2323
    %v2783 = vpack.c.b16 %v2333, %v2324
    %v2784 = vpack.c.b16 %v2334, %v2325
    %v2785 = vpack.c.b16 %v2335, %v2326
    %v2786 = vpack.c.b16 %v2336, %v2327
    %v2787 = vpack.c.b16 %v2337, %v2328
    %v2788 = vpack.c.b16 %v2338, %v2329
    %v2789 = vpack.c.b16 %v2339, %v2330
    %v2790 = vpack.c.b16 %v2349, %v2340
    %v2791 = vpack.c.b16 %v2350, %v2341
    %v2792 = vpack.c.b16 %v2351, %v2342
    %v2793 = vpack.c.b16 %v2352, %v2343
    %v2794 = vpack.c.b16 %v2353, %v2344
    %v2795 = vpack.c.b16 %v2354, %v2345
    %v2796 = vpack.c.b16 %v2355, %v2346
    %v2797 = vpack.c.b16 %v2356, %v2347
    %v2798 = vpack.c.b16 %v2357, %v2348
    %v2799 = vpack.c.b16 %v2367, %v2358
    %v2800 = vpack.c.b16 %v2368, %v2359
    %v2801 = vpack.c.b16 %v2369, %v2360
    %v2802 = vpack.c.b16 %v2370, %v2361
    %v2803 = vpack.c.b16 %v2371, %v2362
    %v2804 = vpack.c.b16 %v2372, %v2363
    %v2805 = vpack.c.b16 %v2373, %v2364
    %v2806 = vpack.c.b16 %v2374, %v2365
    %v2807 = vpack.c.b16 %v2375, %v2366
    %v2808 = vpack.c.b16 %v2385, %v2376
    %v2809 = vpack.c.b16 %v2386, %v2377
    %v2810 = vpack.c.b16 %v2387, %v2378
    %v2811 = vpack.c.b16 %v2388, %v2379
    %v2812 = vpack.c.b16 %v2389, %v2380
    %v2813 = vpack.c.b16 %v2390, %v2381
    %v2814 = vpack.c.b16 %v2391, %v2382
    %v2815 = vpack.c.b16 %v2392, %v2383
    %v2816 = vpack.c.b16 %v2393, %v2384
    %v2817 = vpack.c.b16 %v2403, %v2394
    %v2818 = vpack.c.b16 %v2404, %v2395
    %v2819 = vpack.c.b16 %v2405, %v2396
    %v2820 = vpack.c.b16 %v2406, %v2397
    %v2821 = vpack.c.b16 %v2407, %v2398
    %v2822 = vpack.c.b16 %v2408, %v2399
    %v2823 = vpack.c.b16 %v2409, %v2400
    %v2824 = vpack.c.b16 %v2410, %v2401
    %v2825 = vpack.c.b16 %v2411, %v2402
    %v2826 = vpack.c.b16 %v2421, %v2412
    %v2827 = vpack.c.b16 %v2422, %v2413
    %v2828 = vpack.c.b16 %v2423, %v2414
    %v2829 = vpack.c.b16 %v2424, %v2415
    %v2830 = vpack.c.b16 %v2425, %v2416
    %v2831 = vpack.c.b16 %v2426, %v2417
    %v2832 = vpack.c.b16 %v2427, %v2418
    %v2833 = vpack.c.b16 %v2428, %v2419
    %v2834 = vpack.c.b16 %v2429, %v2420
    %v2835 = vpack.c.b16 %v2439, %v2430
    %v2836 = vpack.c.b16 %v2440, %v2431
    %v2837 = vpack.c.b16 %v2441, %v2432
    %v2838 = vpack.c.b16 %v2442, %v2433
    %v2839 = vpack.c.b16 %v2443, %v2434
    %v2840 = vpack.c.b16 %v2444, %v2435
    %v2841 = vpack.c.b16 %v2445, %v2436
    %v2842 = vpack.c.b16 %v2446, %v2437
    %v2843 = vpack.c.b16 %v2447, %v2438
    %v2844 = vpack.c.b16 %v2457, %v2448
    %v2845 = vpack.c.b16 %v2458, %v2449
    %v2846 = vpack.c.b16 %v2459, %v2450
    %v2847 = vpack.c.b16 %v2460, %v2451
    %v2848 = vpack.c.b16 %v2461, %v2452
    %v2849 = vpack.c.b16 %v2462, %v2453
    %v2850 = vpack.c.b16 %v2463, %v2454
    %v2851 = vpack.c.b16 %v2464, %v2455
    %v2852 = vpack.c.b16 %v2465, %v2456
    %v2853 = vpack.c.b16 %v2475, %v2466
    %v2854 = vpack.c.b16 %v2476, %v2467
    %v2855 = vpack.c.b16 %v2477, %v2468
    %v2856 = vpack.c.b16 %v2478, %v2469
    %v2857 = vpack.c.b16 %v2479, %v2470
    %v2858 = vpack.c.b16 %v2480, %v2471
    %v2859 = vpack.c.b16 %v2481, %v2472
    %v2860 = vpack.c.b16 %v2482, %v2473
    %v2861 = vpack.c.b16 %v2483, %v2474
    %v2862 = vpack.c.b16 %v2493, %v2484
    %v2863 = vpack.c.b16 %v2494, %v2485
    %v2864 = vpack.c.b16 %v2495, %v2486
    %v2865 = vpack.c.b16 %v2496, %v2487
    %v2866 = vpack.c.b16 %v2497, %v2488
    %v2867 = vpack.c.b16 %v2498, %v2489
    %v2868 = vpack.c.b16 %v2499, %v2490
    %v2869 = vpack.c.b16 %v2500, %v2491
    %v2870 = vpack.c.b16 %v2501, %v2492
    %v2871 = vpack.c.b16 %v2511, %v2502
    %v2872 = vpack.c.b16 %v2512, %v2503
    %v2873 = vpack.c.b16 %v2513, %v2504
    %v2874 = vpack.c.b16 %v2514, %v2505
    %v2875 = vpack.c.b16 %v2515, %v2506
    %v2876 = vpack.c.b16 %v2516, %v2507
    %v2877 = vpack.c.b16 %v2517, %v2508
    %v2878 = vpack.c.b16 %v2518, %v2509
    %v2879 = vpack.c.b16 %v2519, %v2510
    %v2880 = vpack.c.b16 %v2529, %v2520
    %v2881 = vpack.c.b16 %v2530, %v2521
    %v2882 = vpack.c.b16 %v2531, %v2522
    %v2883 = vpack.c.b16 %v2532, %v2523
    %v2884 = vpack.c.b16 %v2533, %v2524
    %v2885 = vpack.c.b16 %v2534, %v2525
    %v2886 = vpack.c.b16 %v2535, %v2526
    %v2887 = vpack.c.b16 %v2536, %v2527
    %v2888 = vpack.c.b16 %v2537, %v2528
    %v2889 = vpack.c.b16 %v2547, %v2538
    %v2890 = vpack.c.b16 %v2548, %v2539
    %v2891 = vpack.c.b16 %v2549, %v2540
    %v2892 = vpack.c.b16 %v2550, %v2541
    %v2893 = vpack.c.b16 %v2551, %v2542
    %v2894 = vpack.c.b16 %v2552, %v2543
    %v2895 = vpack.c.b16 %v2553, %v2544
    %v2896 = vpack.c.b16 %v2554, %v2545
    %v2897 = vpack.c.b16 %v2555, %v2546
    %v2898 = vpack.c.b16 %v2565, %v2556
    %v2899 = vpack.c.b16 %v2566, %v2557
    %v2900 = vpack.c.b16 %v2567, %v2558
    %v2901 = vpack.c.b16 %v2568, %v2559
    %v2902 = vpack.c.b16 %v2569, %v2560
    %v2903 = vpack.c.b16 %v2570, %v2561
    %v2904 = vpack.c.b16 %v2571, %v2562
    %v2905 = vpack.c.b16 %v2572, %v2563
    %v2906 = vpack.c.b16 %v2573, %v2564
    %v2907 = vpack.c.b16 %v2583, %v2574
    %v2908 = vpack.c.b16 %v2584, %v2575
    %v2909 = vpack.c.b16 %v2585, %v2576
    %v2910 = vpack.c.b16 %v2586, %v2577
    %v2911 = vpack.c.b16 %v2587, %v2578
    %v2912 = vpack.c.b16 %v2588, %v2579
    %v2913 = vpack.c.b16 %v2589, %v2580
    %v2914 = vpack.c.b16 %v2590, %v2581
    %v2915 = vpack.c.b16 %v2591, %v2582
    %vm3240 = vcmask 523264
    %v3242 = vsel %vm3240, %v1174, 0
    %3244 = vmatprep.subr.bf16.mxu0 %v2656
    %3245 = vmatpush1.bf16.msra.mxu0 %v2655
    %3246 = vmatprep.subr.bf16.mxu0 %v2647
    %3247 = vmatpush1.bf16.msra.mxu0 %v2646
    %3248 = vmatprep.subr.bf16.mxu0 %v2638
    %3249 = vmatpush1.bf16.msra.mxu0 %v2637
    %3250 = vmatprep.subr.bf16.mxu0 %v2629
    %3251 = vmatpush1.bf16.msra.mxu0 %v2628
    %3252 = vmatprep.subr.bf16.mxu0 %v2620
    %3253 = vmatpush1.bf16.msra.mxu0 %v2619
    %3254 = vmatprep.subr.bf16.mxu0 %v2611
    %3255 = vmatpush1.bf16.msra.mxu0 %v2610
    %3256 = vmatprep.subr.bf16.mxu0 %v2602
    %3257 = vmatpush1.bf16.msra.mxu0 %v2601
    %3258 = vmatprep.subr.bf16.mxu0 %v2593
    %3259 = vmatpush1.bf16.msra.mxu0 %v2592
    %3260 = vmatprep.subr.bf16.mxu0 %v2728
    %3261 = vmatpush2.bf16.msra.mxu0 %v2727
    %3262 = vmatprep.subr.bf16.mxu0 %v2719
    %3263 = vmatpush2.bf16.msra.mxu0 %v2718
    %3264 = vmatprep.subr.bf16.mxu0 %v2710
    %3265 = vmatpush2.bf16.msra.mxu0 %v2709
    %3266 = vmatprep.subr.bf16.mxu0 %v2701
    %3267 = vmatpush2.bf16.msra.mxu0 %v2700
    %3268 = vmatprep.subr.bf16.mxu0 %v2692
    %3269 = vmatpush2.bf16.msra.mxu0 %v2691
    %3270 = vmatprep.subr.bf16.mxu0 %v2683
    %3271 = vmatpush2.bf16.msra.mxu0 %v2682
    %3272 = vmatprep.subr.bf16.mxu0 %v2674
    %3273 = vmatpush2.bf16.msra.mxu0 %v2673
    %3274 = vmatprep.subr.bf16.mxu0 %v2665
    %3275 = vmatpush2.bf16.msra.mxu0 %v2664
    %3276 = vmatprep.mubr.bf16.mxu0 %v1171
    %3277 = vmatmul.mubr.bf16.gmra.mxu0 %v1170
    %v3278 = vpop.f32.mrf.mxu0
    %v3279 = vadd.f32 %v1542, %v3278
    %v3280 = vpop.f32.mrf.mxu0
    %v3281 = vadd.f32 %v1546, %v3280
    %v3282 = vpop.f32.mrf.mxu0
    %v3283 = vadd.f32 %v1542, %v3282
    %v3284 = vpop.f32.mrf.mxu0
    %v3285 = vadd.f32 %v1546, %v3284
    %3286 = vdwg.mxu0
    %3287 = vmatprep.subr.bf16.mxu0 %v2800
    %3288 = vmatpush1.bf16.msra.mxu0 %v2799
    %3289 = vmatprep.subr.bf16.mxu0 %v2791
    %3290 = vmatpush1.bf16.msra.mxu0 %v2790
    %3291 = vmatprep.subr.bf16.mxu0 %v2782
    %3292 = vmatpush1.bf16.msra.mxu0 %v2781
    %3293 = vmatprep.subr.bf16.mxu0 %v2773
    %3294 = vmatpush1.bf16.msra.mxu0 %v2772
    %3295 = vmatprep.subr.bf16.mxu0 %v2764
    %3296 = vmatpush1.bf16.msra.mxu0 %v2763
    %3297 = vmatprep.subr.bf16.mxu0 %v2755
    %3298 = vmatpush1.bf16.msra.mxu0 %v2754
    %3299 = vmatprep.subr.bf16.mxu0 %v2746
    %3300 = vmatpush1.bf16.msra.mxu0 %v2745
    %3301 = vmatprep.subr.bf16.mxu0 %v2737
    %3302 = vmatpush1.bf16.msra.mxu0 %v2736
    %3303 = vmatprep.subr.bf16.mxu0 %v2872
    %3304 = vmatpush2.bf16.msra.mxu0 %v2871
    %3305 = vmatprep.subr.bf16.mxu0 %v2863
    %3306 = vmatpush2.bf16.msra.mxu0 %v2862
    %3307 = vmatprep.subr.bf16.mxu0 %v2854
    %3308 = vmatpush2.bf16.msra.mxu0 %v2853
    %3309 = vmatprep.subr.bf16.mxu0 %v2845
    %3310 = vmatpush2.bf16.msra.mxu0 %v2844
    %3311 = vmatprep.subr.bf16.mxu0 %v2836
    %3312 = vmatpush2.bf16.msra.mxu0 %v2835
    %3313 = vmatprep.subr.bf16.mxu0 %v2827
    %3314 = vmatpush2.bf16.msra.mxu0 %v2826
    %3315 = vmatprep.subr.bf16.mxu0 %v2818
    %3316 = vmatpush2.bf16.msra.mxu0 %v2817
    %3317 = vmatprep.subr.bf16.mxu0 %v2809
    %3318 = vmatpush2.bf16.msra.mxu0 %v2808
    %3319 = vmatprep.mubr.bf16.mxu0 %v1173
    %3320 = vmatmul.mubr.bf16.gmra.mxu0 %v1172
    %v3321 = vpop.f32.mrf.mxu0
    %v3322 = vadd.f32 %v3279, %v3321
    %v3323 = vpop.f32.mrf.mxu0
    %v3324 = vadd.f32 %v3281, %v3323
    %v3325 = vpop.f32.mrf.mxu0
    %v3326 = vadd.f32 %v3283, %v3325
    %v3327 = vpop.f32.mrf.mxu0
    %v3328 = vadd.f32 %v3285, %v3327
    %3329 = vdwg.mxu0
    %3330 = vmatprep.subr.bf16.mxu0 0
    %3331 = vmatpush1.bf16.msra.mxu0 0
    %3332 = vmatprep.subr.bf16.mxu0 0
    %3333 = vmatpush1.bf16.msra.mxu0 0
    %3334 = vmatprep.subr.bf16.mxu0 0
    %3335 = vmatpush1.bf16.msra.mxu0 0
    %3336 = vmatprep.subr.bf16.mxu0 0
    %3337 = vmatpush1.bf16.msra.mxu0 0
    %3338 = vmatprep.subr.bf16.mxu0 %v2908
    %3339 = vmatpush1.bf16.msra.mxu0 %v2907
    %3340 = vmatprep.subr.bf16.mxu0 %v2899
    %3341 = vmatpush1.bf16.msra.mxu0 %v2898
    %3342 = vmatprep.subr.bf16.mxu0 %v2890
    %3343 = vmatpush1.bf16.msra.mxu0 %v2889
    %3344 = vmatprep.subr.bf16.mxu0 %v2881
    %3345 = vmatpush1.bf16.msra.mxu0 %v2880
    %3346 = vmatprep.subr.bf16.mxu0 0
    %3347 = vmatpush2.bf16.msra.mxu0 0
    %3348 = vmatprep.subr.bf16.mxu0 0
    %3349 = vmatpush2.bf16.msra.mxu0 0
    %3350 = vmatprep.subr.bf16.mxu0 0
    %3351 = vmatpush2.bf16.msra.mxu0 0
    %3352 = vmatprep.subr.bf16.mxu0 0
    %3353 = vmatpush2.bf16.msra.mxu0 0
    %3354 = vmatprep.subr.bf16.mxu0 0
    %3355 = vmatpush2.bf16.msra.mxu0 0
    %3356 = vmatprep.subr.bf16.mxu0 0
    %3357 = vmatpush2.bf16.msra.mxu0 0
    %3358 = vmatprep.subr.bf16.mxu0 0
    %3359 = vmatpush2.bf16.msra.mxu0 0
    %3360 = vmatprep.subr.bf16.mxu0 0
    %3361 = vmatpush2.bf16.msra.mxu0 0
    %3362 = vmatprep.mubr.bf16.mxu0 0
    %3363 = vmatmul.mubr.bf16.gmra.mxu0 %v3242
    %v3364 = vpop.f32.mrf.mxu0
    %v3365 = vadd.f32 %v3322, %v3364
    %v3366 = vpop.f32.mrf.mxu0
    %v3367 = vadd.f32 %v3324, %v3366
    %v3368 = vpop.f32.mrf.mxu0
    %v3369 = vadd.f32 %v3326, %v3368
    %v3370 = vpop.f32.mrf.mxu0
    %v3371 = vadd.f32 %v3328, %v3370
    %3372 = vdwg.mxu0
    %3373 = vmatprep.subr.bf16.mxu0 %v2658
    %3374 = vmatpush1.bf16.msra.mxu0 %v2657
    %3375 = vmatprep.subr.bf16.mxu0 %v2649
    %3376 = vmatpush1.bf16.msra.mxu0 %v2648
    %3377 = vmatprep.subr.bf16.mxu0 %v2640
    %3378 = vmatpush1.bf16.msra.mxu0 %v2639
    %3379 = vmatprep.subr.bf16.mxu0 %v2631
    %3380 = vmatpush1.bf16.msra.mxu0 %v2630
    %3381 = vmatprep.subr.bf16.mxu0 %v2622
    %3382 = vmatpush1.bf16.msra.mxu0 %v2621
    %3383 = vmatprep.subr.bf16.mxu0 %v2613
    %3384 = vmatpush1.bf16.msra.mxu0 %v2612
    %3385 = vmatprep.subr.bf16.mxu0 %v2604
    %3386 = vmatpush1.bf16.msra.mxu0 %v2603
    %3387 = vmatprep.subr.bf16.mxu0 %v2595
    %3388 = vmatpush1.bf16.msra.mxu0 %v2594
    %3389 = vmatprep.subr.bf16.mxu0 %v2730
    %3390 = vmatpush2.bf16.msra.mxu0 %v2729
    %3391 = vmatprep.subr.bf16.mxu0 %v2721
    %3392 = vmatpush2.bf16.msra.mxu0 %v2720
    %3393 = vmatprep.subr.bf16.mxu0 %v2712
    %3394 = vmatpush2.bf16.msra.mxu0 %v2711
    %3395 = vmatprep.subr.bf16.mxu0 %v2703
    %3396 = vmatpush2.bf16.msra.mxu0 %v2702
    %3397 = vmatprep.subr.bf16.mxu0 %v2694
    %3398 = vmatpush2.bf16.msra.mxu0 %v2693
    %3399 = vmatprep.subr.bf16.mxu0 %v2685
    %3400 = vmatpush2.bf16.msra.mxu0 %v2684
    %3401 = vmatprep.subr.bf16.mxu0 %v2676
    %3402 = vmatpush2.bf16.msra.mxu0 %v2675
    %3403 = vmatprep.subr.bf16.mxu0 %v2667
    %3404 = vmatpush2.bf16.msra.mxu0 %v2666
    %3405 = vmatprep.mubr.bf16.mxu0 %v1171
    %3406 = vmatmul.mubr.bf16.gmra.mxu0 %v1170
    %v3407 = vpop.f32.mrf.mxu0
    %v3408 = vadd.f32 %v1550, %v3407
    %v3409 = vpop.f32.mrf.mxu0
    %v3410 = vadd.f32 %v1554, %v3409
    %v3411 = vpop.f32.mrf.mxu0
    %v3412 = vadd.f32 %v1550, %v3411
    %v3413 = vpop.f32.mrf.mxu0
    %v3414 = vadd.f32 %v1554, %v3413
    %3415 = vdwg.mxu0
    %3416 = vmatprep.subr.bf16.mxu0 %v2802
    %3417 = vmatpush1.bf16.msra.mxu0 %v2801
    %3418 = vmatprep.subr.bf16.mxu0 %v2793
    %3419 = vmatpush1.bf16.msra.mxu0 %v2792
    %3420 = vmatprep.subr.bf16.mxu0 %v2784
    %3421 = vmatpush1.bf16.msra.mxu0 %v2783
    %3422 = vmatprep.subr.bf16.mxu0 %v2775
    %3423 = vmatpush1.bf16.msra.mxu0 %v2774
    %3424 = vmatprep.subr.bf16.mxu0 %v2766
    %3425 = vmatpush1.bf16.msra.mxu0 %v2765
    %3426 = vmatprep.subr.bf16.mxu0 %v2757
    %3427 = vmatpush1.bf16.msra.mxu0 %v2756
    %3428 = vmatprep.subr.bf16.mxu0 %v2748
    %3429 = vmatpush1.bf16.msra.mxu0 %v2747
    %3430 = vmatprep.subr.bf16.mxu0 %v2739
    %3431 = vmatpush1.bf16.msra.mxu0 %v2738
    %3432 = vmatprep.subr.bf16.mxu0 %v2874
    %3433 = vmatpush2.bf16.msra.mxu0 %v2873
    %3434 = vmatprep.subr.bf16.mxu0 %v2865
    %3435 = vmatpush2.bf16.msra.mxu0 %v2864
    %3436 = vmatprep.subr.bf16.mxu0 %v2856
    %3437 = vmatpush2.bf16.msra.mxu0 %v2855
    %3438 = vmatprep.subr.bf16.mxu0 %v2847
    %3439 = vmatpush2.bf16.msra.mxu0 %v2846
    %3440 = vmatprep.subr.bf16.mxu0 %v2838
    %3441 = vmatpush2.bf16.msra.mxu0 %v2837
    %3442 = vmatprep.subr.bf16.mxu0 %v2829
    %3443 = vmatpush2.bf16.msra.mxu0 %v2828
    %3444 = vmatprep.subr.bf16.mxu0 %v2820
    %3445 = vmatpush2.bf16.msra.mxu0 %v2819
    %3446 = vmatprep.subr.bf16.mxu0 %v2811
    %3447 = vmatpush2.bf16.msra.mxu0 %v2810
    %3448 = vmatprep.mubr.bf16.mxu0 %v1173
    %3449 = vmatmul.mubr.bf16.gmra.mxu0 %v1172
    %v3450 = vpop.f32.mrf.mxu0
    %v3451 = vadd.f32 %v3408, %v3450
    %v3452 = vpop.f32.mrf.mxu0
    %v3453 = vadd.f32 %v3410, %v3452
    %v3454 = vpop.f32.mrf.mxu0
    %v3455 = vadd.f32 %v3412, %v3454
    %v3456 = vpop.f32.mrf.mxu0
    %v3457 = vadd.f32 %v3414, %v3456
    %3458 = vdwg.mxu0
    %3459 = vmatprep.subr.bf16.mxu0 0
    %3460 = vmatpush1.bf16.msra.mxu0 0
    %3461 = vmatprep.subr.bf16.mxu0 0
    %3462 = vmatpush1.bf16.msra.mxu0 0
    %3463 = vmatprep.subr.bf16.mxu0 0
    %3464 = vmatpush1.bf16.msra.mxu0 0
    %3465 = vmatprep.subr.bf16.mxu0 0
    %3466 = vmatpush1.bf16.msra.mxu0 0
    %3467 = vmatprep.subr.bf16.mxu0 %v2910
    %3468 = vmatpush1.bf16.msra.mxu0 %v2909
    %3469 = vmatprep.subr.bf16.mxu0 %v2901
    %3470 = vmatpush1.bf16.msra.mxu0 %v2900
    %3471 = vmatprep.subr.bf16.mxu0 %v2892
    %3472 = vmatpush1.bf16.msra.mxu0 %v2891
    %3473 = vmatprep.subr.bf16.mxu0 %v2883
    %3474 = vmatpush1.bf16.msra.mxu0 %v2882
    %3475 = vmatprep.subr.bf16.mxu0 0
    %3476 = vmatpush2.bf16.msra.mxu0 0
    %3477 = vmatprep.subr.bf16.mxu0 0
    %3478 = vmatpush2.bf16.msra.mxu0 0
    %3479 = vmatprep.subr.bf16.mxu0 0
    %3480 = vmatpush2.bf16.msra.mxu0 0
    %3481 = vmatprep.subr.bf16.mxu0 0
    %3482 = vmatpush2.bf16.msra.mxu0 0
    %3483 = vmatprep.subr.bf16.mxu0 0
    %3484 = vmatpush2.bf16.msra.mxu0 0
    %3485 = vmatprep.subr.bf16.mxu0 0
    %3486 = vmatpush2.bf16.msra.mxu0 0
    %3487 = vmatprep.subr.bf16.mxu0 0
    %3488 = vmatpush2.bf16.msra.mxu0 0
    %3489 = vmatprep.subr.bf16.mxu0 0
    %3490 = vmatpush2.bf16.msra.mxu0 0
    %3491 = vmatprep.mubr.bf16.mxu0 0
    %3492 = vmatmul.mubr.bf16.gmra.mxu0 %v3242
    %v3493 = vpop.f32.mrf.mxu0
    %v3494 = vadd.f32 %v3451, %v3493
    %v3495 = vpop.f32.mrf.mxu0
    %v3496 = vadd.f32 %v3453, %v3495
    %v3497 = vpop.f32.mrf.mxu0
    %v3498 = vadd.f32 %v3455, %v3497
    %v3499 = vpop.f32.mrf.mxu0
    %v3500 = vadd.f32 %v3457, %v3499
    %3501 = vdwg.mxu0
    %3502 = vmatprep.subr.bf16.mxu0 %v2660
    %3503 = vmatpush1.bf16.msra.mxu0 %v2659
    %3504 = vmatprep.subr.bf16.mxu0 %v2651
    %3505 = vmatpush1.bf16.msra.mxu0 %v2650
    %3506 = vmatprep.subr.bf16.mxu0 %v2642
    %3507 = vmatpush1.bf16.msra.mxu0 %v2641
    %3508 = vmatprep.subr.bf16.mxu0 %v2633
    %3509 = vmatpush1.bf16.msra.mxu0 %v2632
    %3510 = vmatprep.subr.bf16.mxu0 %v2624
    %3511 = vmatpush1.bf16.msra.mxu0 %v2623
    %3512 = vmatprep.subr.bf16.mxu0 %v2615
    %3513 = vmatpush1.bf16.msra.mxu0 %v2614
    %3514 = vmatprep.subr.bf16.mxu0 %v2606
    %3515 = vmatpush1.bf16.msra.mxu0 %v2605
    %3516 = vmatprep.subr.bf16.mxu0 %v2597
    %3517 = vmatpush1.bf16.msra.mxu0 %v2596
    %3518 = vmatprep.subr.bf16.mxu0 %v2732
    %3519 = vmatpush2.bf16.msra.mxu0 %v2731
    %3520 = vmatprep.subr.bf16.mxu0 %v2723
    %3521 = vmatpush2.bf16.msra.mxu0 %v2722
    %3522 = vmatprep.subr.bf16.mxu0 %v2714
    %3523 = vmatpush2.bf16.msra.mxu0 %v2713
    %3524 = vmatprep.subr.bf16.mxu0 %v2705
    %3525 = vmatpush2.bf16.msra.mxu0 %v2704
    %3526 = vmatprep.subr.bf16.mxu0 %v2696
    %3527 = vmatpush2.bf16.msra.mxu0 %v2695
    %3528 = vmatprep.subr.bf16.mxu0 %v2687
    %3529 = vmatpush2.bf16.msra.mxu0 %v2686
    %3530 = vmatprep.subr.bf16.mxu0 %v2678
    %3531 = vmatpush2.bf16.msra.mxu0 %v2677
    %3532 = vmatprep.subr.bf16.mxu0 %v2669
    %3533 = vmatpush2.bf16.msra.mxu0 %v2668
    %3534 = vmatprep.mubr.bf16.mxu0 %v1171
    %3535 = vmatmul.mubr.bf16.gmra.mxu0 %v1170
    %v3536 = vpop.f32.mrf.mxu0
    %v3537 = vadd.f32 %v1558, %v3536
    %v3538 = vpop.f32.mrf.mxu0
    %v3539 = vadd.f32 %v1562, %v3538
    %v3540 = vpop.f32.mrf.mxu0
    %v3541 = vadd.f32 %v1558, %v3540
    %v3542 = vpop.f32.mrf.mxu0
    %v3543 = vadd.f32 %v1562, %v3542
    %3544 = vdwg.mxu0
    %3545 = vmatprep.subr.bf16.mxu0 %v2804
    %3546 = vmatpush1.bf16.msra.mxu0 %v2803
    %3547 = vmatprep.subr.bf16.mxu0 %v2795
    %3548 = vmatpush1.bf16.msra.mxu0 %v2794
    %3549 = vmatprep.subr.bf16.mxu0 %v2786
    %3550 = vmatpush1.bf16.msra.mxu0 %v2785
    %3551 = vmatprep.subr.bf16.mxu0 %v2777
    %3552 = vmatpush1.bf16.msra.mxu0 %v2776
    %3553 = vmatprep.subr.bf16.mxu0 %v2768
    %3554 = vmatpush1.bf16.msra.mxu0 %v2767
    %3555 = vmatprep.subr.bf16.mxu0 %v2759
    %3556 = vmatpush1.bf16.msra.mxu0 %v2758
    %3557 = vmatprep.subr.bf16.mxu0 %v2750
    %3558 = vmatpush1.bf16.msra.mxu0 %v2749
    %3559 = vmatprep.subr.bf16.mxu0 %v2741
    %3560 = vmatpush1.bf16.msra.mxu0 %v2740
    %3561 = vmatprep.subr.bf16.mxu0 %v2876
    %3562 = vmatpush2.bf16.msra.mxu0 %v2875
    %3563 = vmatprep.subr.bf16.mxu0 %v2867
    %3564 = vmatpush2.bf16.msra.mxu0 %v2866
    %3565 = vmatprep.subr.bf16.mxu0 %v2858
    %3566 = vmatpush2.bf16.msra.mxu0 %v2857
    %3567 = vmatprep.subr.bf16.mxu0 %v2849
    %3568 = vmatpush2.bf16.msra.mxu0 %v2848
    %3569 = vmatprep.subr.bf16.mxu0 %v2840
    %3570 = vmatpush2.bf16.msra.mxu0 %v2839
    %3571 = vmatprep.subr.bf16.mxu0 %v2831
    %3572 = vmatpush2.bf16.msra.mxu0 %v2830
    %3573 = vmatprep.subr.bf16.mxu0 %v2822
    %3574 = vmatpush2.bf16.msra.mxu0 %v2821
    %3575 = vmatprep.subr.bf16.mxu0 %v2813
    %3576 = vmatpush2.bf16.msra.mxu0 %v2812
    %3577 = vmatprep.mubr.bf16.mxu0 %v1173
    %3578 = vmatmul.mubr.bf16.gmra.mxu0 %v1172
    %v3579 = vpop.f32.mrf.mxu0
    %v3580 = vadd.f32 %v3537, %v3579
    %v3581 = vpop.f32.mrf.mxu0
    %v3582 = vadd.f32 %v3539, %v3581
    %v3583 = vpop.f32.mrf.mxu0
    %v3584 = vadd.f32 %v3541, %v3583
    %v3585 = vpop.f32.mrf.mxu0
    %v3586 = vadd.f32 %v3543, %v3585
    %3587 = vdwg.mxu0
    %3588 = vmatprep.subr.bf16.mxu0 0
    %3589 = vmatpush1.bf16.msra.mxu0 0
    %3590 = vmatprep.subr.bf16.mxu0 0
    %3591 = vmatpush1.bf16.msra.mxu0 0
    %3592 = vmatprep.subr.bf16.mxu0 0
    %3593 = vmatpush1.bf16.msra.mxu0 0
    %3594 = vmatprep.subr.bf16.mxu0 0
    %3595 = vmatpush1.bf16.msra.mxu0 0
    %3596 = vmatprep.subr.bf16.mxu0 %v2912
    %3597 = vmatpush1.bf16.msra.mxu0 %v2911
    %3598 = vmatprep.subr.bf16.mxu0 %v2903
    %3599 = vmatpush1.bf16.msra.mxu0 %v2902
    %3600 = vmatprep.subr.bf16.mxu0 %v2894
    %3601 = vmatpush1.bf16.msra.mxu0 %v2893
    %3602 = vmatprep.subr.bf16.mxu0 %v2885
    %3603 = vmatpush1.bf16.msra.mxu0 %v2884
    %3604 = vmatprep.subr.bf16.mxu0 0
    %3605 = vmatpush2.bf16.msra.mxu0 0
    %3606 = vmatprep.subr.bf16.mxu0 0
    %3607 = vmatpush2.bf16.msra.mxu0 0
    %3608 = vmatprep.subr.bf16.mxu0 0
    %3609 = vmatpush2.bf16.msra.mxu0 0
    %3610 = vmatprep.subr.bf16.mxu0 0
    %3611 = vmatpush2.bf16.msra.mxu0 0
    %3612 = vmatprep.subr.bf16.mxu0 0
    %3613 = vmatpush2.bf16.msra.mxu0 0
    %3614 = vmatprep.subr.bf16.mxu0 0
    %3615 = vmatpush2.bf16.msra.mxu0 0
    %3616 = vmatprep.subr.bf16.mxu0 0
    %3617 = vmatpush2.bf16.msra.mxu0 0
    %3618 = vmatprep.subr.bf16.mxu0 0
    %3619 = vmatpush2.bf16.msra.mxu0 0
    %3620 = vmatprep.mubr.bf16.mxu0 0
    %3621 = vmatmul.mubr.bf16.gmra.mxu0 %v3242
    %v3622 = vpop.f32.mrf.mxu0
    %v3623 = vadd.f32 %v3580, %v3622
    %v3624 = vpop.f32.mrf.mxu0
    %v3625 = vadd.f32 %v3582, %v3624
    %v3626 = vpop.f32.mrf.mxu0
    %v3627 = vadd.f32 %v3584, %v3626
    %v3628 = vpop.f32.mrf.mxu0
    %v3629 = vadd.f32 %v3586, %v3628
    %3630 = vdwg.mxu0
    %3631 = vmatprep.subr.bf16.mxu0 %v2662
    %3632 = vmatpush1.bf16.msra.mxu0 %v2661
    %3633 = vmatprep.subr.bf16.mxu0 %v2653
    %3634 = vmatpush1.bf16.msra.mxu0 %v2652
    %3635 = vmatprep.subr.bf16.mxu0 %v2644
    %3636 = vmatpush1.bf16.msra.mxu0 %v2643
    %3637 = vmatprep.subr.bf16.mxu0 %v2635
    %3638 = vmatpush1.bf16.msra.mxu0 %v2634
    %3639 = vmatprep.subr.bf16.mxu0 %v2626
    %3640 = vmatpush1.bf16.msra.mxu0 %v2625
    %3641 = vmatprep.subr.bf16.mxu0 %v2617
    %3642 = vmatpush1.bf16.msra.mxu0 %v2616
    %3643 = vmatprep.subr.bf16.mxu0 %v2608
    %3644 = vmatpush1.bf16.msra.mxu0 %v2607
    %3645 = vmatprep.subr.bf16.mxu0 %v2599
    %3646 = vmatpush1.bf16.msra.mxu0 %v2598
    %3647 = vmatprep.subr.bf16.mxu0 %v2734
    %3648 = vmatpush2.bf16.msra.mxu0 %v2733
    %3649 = vmatprep.subr.bf16.mxu0 %v2725
    %3650 = vmatpush2.bf16.msra.mxu0 %v2724
    %3651 = vmatprep.subr.bf16.mxu0 %v2716
    %3652 = vmatpush2.bf16.msra.mxu0 %v2715
    %3653 = vmatprep.subr.bf16.mxu0 %v2707
    %3654 = vmatpush2.bf16.msra.mxu0 %v2706
    %3655 = vmatprep.subr.bf16.mxu0 %v2698
    %3656 = vmatpush2.bf16.msra.mxu0 %v2697
    %3657 = vmatprep.subr.bf16.mxu0 %v2689
    %3658 = vmatpush2.bf16.msra.mxu0 %v2688
    %3659 = vmatprep.subr.bf16.mxu0 %v2680
    %3660 = vmatpush2.bf16.msra.mxu0 %v2679
    %3661 = vmatprep.subr.bf16.mxu0 %v2671
    %3662 = vmatpush2.bf16.msra.mxu0 %v2670
    %3663 = vmatprep.mubr.bf16.mxu0 %v1171
    %3664 = vmatmul.mubr.bf16.gmra.mxu0 %v1170
    %v3665 = vpop.f32.mrf.mxu0
    %v3666 = vadd.f32 %v1566, %v3665
    %v3667 = vpop.f32.mrf.mxu0
    %v3668 = vadd.f32 %v1570, %v3667
    %v3669 = vpop.f32.mrf.mxu0
    %v3670 = vadd.f32 %v1566, %v3669
    %v3671 = vpop.f32.mrf.mxu0
    %v3672 = vadd.f32 %v1570, %v3671
    %3673 = vdwg.mxu0
    %3674 = vmatprep.subr.bf16.mxu0 %v2806
    %3675 = vmatpush1.bf16.msra.mxu0 %v2805
    %3676 = vmatprep.subr.bf16.mxu0 %v2797
    %3677 = vmatpush1.bf16.msra.mxu0 %v2796
    %3678 = vmatprep.subr.bf16.mxu0 %v2788
    %3679 = vmatpush1.bf16.msra.mxu0 %v2787
    %3680 = vmatprep.subr.bf16.mxu0 %v2779
    %3681 = vmatpush1.bf16.msra.mxu0 %v2778
    %3682 = vmatprep.subr.bf16.mxu0 %v2770
    %3683 = vmatpush1.bf16.msra.mxu0 %v2769
    %3684 = vmatprep.subr.bf16.mxu0 %v2761
    %3685 = vmatpush1.bf16.msra.mxu0 %v2760
    %3686 = vmatprep.subr.bf16.mxu0 %v2752
    %3687 = vmatpush1.bf16.msra.mxu0 %v2751
    %3688 = vmatprep.subr.bf16.mxu0 %v2743
    %3689 = vmatpush1.bf16.msra.mxu0 %v2742
    %3690 = vmatprep.subr.bf16.mxu0 %v2878
    %3691 = vmatpush2.bf16.msra.mxu0 %v2877
    %3692 = vmatprep.subr.bf16.mxu0 %v2869
    %3693 = vmatpush2.bf16.msra.mxu0 %v2868
    %3694 = vmatprep.subr.bf16.mxu0 %v2860
    %3695 = vmatpush2.bf16.msra.mxu0 %v2859
    %3696 = vmatprep.subr.bf16.mxu0 %v2851
    %3697 = vmatpush2.bf16.msra.mxu0 %v2850
    %3698 = vmatprep.subr.bf16.mxu0 %v2842
    %3699 = vmatpush2.bf16.msra.mxu0 %v2841
    %3700 = vmatprep.subr.bf16.mxu0 %v2833
    %3701 = vmatpush2.bf16.msra.mxu0 %v2832
    %3702 = vmatprep.subr.bf16.mxu0 %v2824
    %3703 = vmatpush2.bf16.msra.mxu0 %v2823
    %3704 = vmatprep.subr.bf16.mxu0 %v2815
    %3705 = vmatpush2.bf16.msra.mxu0 %v2814
    %3706 = vmatprep.mubr.bf16.mxu0 %v1173
    %3707 = vmatmul.mubr.bf16.gmra.mxu0 %v1172
    %v3708 = vpop.f32.mrf.mxu0
    %v3709 = vadd.f32 %v3666, %v3708
    %v3710 = vpop.f32.mrf.mxu0
    %v3711 = vadd.f32 %v3668, %v3710
    %v3712 = vpop.f32.mrf.mxu0
    %v3713 = vadd.f32 %v3670, %v3712
    %v3714 = vpop.f32.mrf.mxu0
    %v3715 = vadd.f32 %v3672, %v3714
    %3716 = vdwg.mxu0
    %3717 = vmatprep.subr.bf16.mxu0 0
    %3718 = vmatpush1.bf16.msra.mxu0 0
    %3719 = vmatprep.subr.bf16.mxu0 0
    %3720 = vmatpush1.bf16.msra.mxu0 0
    %3721 = vmatprep.subr.bf16.mxu0 0
    %3722 = vmatpush1.bf16.msra.mxu0 0
    %3723 = vmatprep.subr.bf16.mxu0 0
    %3724 = vmatpush1.bf16.msra.mxu0 0
    %3725 = vmatprep.subr.bf16.mxu0 %v2914
    %3726 = vmatpush1.bf16.msra.mxu0 %v2913
    %3727 = vmatprep.subr.bf16.mxu0 %v2905
    %3728 = vmatpush1.bf16.msra.mxu0 %v2904
    %3729 = vmatprep.subr.bf16.mxu0 %v2896
    %3730 = vmatpush1.bf16.msra.mxu0 %v2895
    %3731 = vmatprep.subr.bf16.mxu0 %v2887
    %3732 = vmatpush1.bf16.msra.mxu0 %v2886
    %3733 = vmatprep.subr.bf16.mxu0 0
    %3734 = vmatpush2.bf16.msra.mxu0 0
    %3735 = vmatprep.subr.bf16.mxu0 0
    %3736 = vmatpush2.bf16.msra.mxu0 0
    %3737 = vmatprep.subr.bf16.mxu0 0
    %3738 = vmatpush2.bf16.msra.mxu0 0
    %3739 = vmatprep.subr.bf16.mxu0 0
    %3740 = vmatpush2.bf16.msra.mxu0 0
    %3741 = vmatprep.subr.bf16.mxu0 0
    %3742 = vmatpush2.bf16.msra.mxu0 0
    %3743 = vmatprep.subr.bf16.mxu0 0
    %3744 = vmatpush2.bf16.msra.mxu0 0
    %3745 = vmatprep.subr.bf16.mxu0 0
    %3746 = vmatpush2.bf16.msra.mxu0 0
    %3747 = vmatprep.subr.bf16.mxu0 0
    %3748 = vmatpush2.bf16.msra.mxu0 0
    %3749 = vmatprep.mubr.bf16.mxu0 0
    %3750 = vmatmul.mubr.bf16.gmra.mxu0 %v3242
    %v3751 = vpop.f32.mrf.mxu0
    %v3752 = vadd.f32 %v3709, %v3751
    %v3753 = vpop.f32.mrf.mxu0
    %v3754 = vadd.f32 %v3711, %v3753
    %v3755 = vpop.f32.mrf.mxu0
    %v3756 = vadd.f32 %v3713, %v3755
    %v3757 = vpop.f32.mrf.mxu0
    %v3758 = vadd.f32 %v3715, %v3757
    %3759 = vdwg.mxu0
    %3760 = vmatprep.subr.bf16.mxu0 0
    %3761 = vmatpush1.bf16.msra.mxu0 %v2663
    %3762 = vmatprep.subr.bf16.mxu0 0
    %3763 = vmatpush1.bf16.msra.mxu0 %v2654
    %3764 = vmatprep.subr.bf16.mxu0 0
    %3765 = vmatpush1.bf16.msra.mxu0 %v2645
    %3766 = vmatprep.subr.bf16.mxu0 0
    %3767 = vmatpush1.bf16.msra.mxu0 %v2636
    %3768 = vmatprep.subr.bf16.mxu0 0
    %3769 = vmatpush1.bf16.msra.mxu0 %v2627
    %3770 = vmatprep.subr.bf16.mxu0 0
    %3771 = vmatpush1.bf16.msra.mxu0 %v2618
    %3772 = vmatprep.subr.bf16.mxu0 0
    %3773 = vmatpush1.bf16.msra.mxu0 %v2609
    %3774 = vmatprep.subr.bf16.mxu0 0
    %3775 = vmatpush1.bf16.msra.mxu0 %v2600
    %3776 = vmatprep.subr.bf16.mxu0 0
    %3777 = vmatpush2.bf16.msra.mxu0 %v2735
    %3778 = vmatprep.subr.bf16.mxu0 0
    %3779 = vmatpush2.bf16.msra.mxu0 %v2726
    %3780 = vmatprep.subr.bf16.mxu0 0
    %3781 = vmatpush2.bf16.msra.mxu0 %v2717
    %3782 = vmatprep.subr.bf16.mxu0 0
    %3783 = vmatpush2.bf16.msra.mxu0 %v2708
    %3784 = vmatprep.subr.bf16.mxu0 0
    %3785 = vmatpush2.bf16.msra.mxu0 %v2699
    %3786 = vmatprep.subr.bf16.mxu0 0
    %3787 = vmatpush2.bf16.msra.mxu0 %v2690
    %3788 = vmatprep.subr.bf16.mxu0 0
    %3789 = vmatpush2.bf16.msra.mxu0 %v2681
    %3790 = vmatprep.subr.bf16.mxu0 0
    %3791 = vmatpush2.bf16.msra.mxu0 %v2672
    %3792 = vmatprep.mubr.bf16.mxu0 %v1171
    %3793 = vmatmul.mubr.bf16.gmra.mxu0 %v1170
    %v3794 = vpop.f32.mrf.mxu0
    %v3795 = vadd.f32 %v1574, %v3794
    %v3796 = vpop.f32.mrf.mxu0
    %v3797 = vpop.f32.mrf.mxu0
    %v3798 = vadd.f32 %v1574, %v3797
    %v3799 = vpop.f32.mrf.mxu0
    %3800 = vdwg.mxu0
    %3801 = vmatprep.subr.bf16.mxu0 0
    %3802 = vmatpush1.bf16.msra.mxu0 %v2807
    %3803 = vmatprep.subr.bf16.mxu0 0
    %3804 = vmatpush1.bf16.msra.mxu0 %v2798
    %3805 = vmatprep.subr.bf16.mxu0 0
    %3806 = vmatpush1.bf16.msra.mxu0 %v2789
    %3807 = vmatprep.subr.bf16.mxu0 0
    %3808 = vmatpush1.bf16.msra.mxu0 %v2780
    %3809 = vmatprep.subr.bf16.mxu0 0
    %3810 = vmatpush1.bf16.msra.mxu0 %v2771
    %3811 = vmatprep.subr.bf16.mxu0 0
    %3812 = vmatpush1.bf16.msra.mxu0 %v2762
    %3813 = vmatprep.subr.bf16.mxu0 0
    %3814 = vmatpush1.bf16.msra.mxu0 %v2753
    %3815 = vmatprep.subr.bf16.mxu0 0
    %3816 = vmatpush1.bf16.msra.mxu0 %v2744
    %3817 = vmatprep.subr.bf16.mxu0 0
    %3818 = vmatpush2.bf16.msra.mxu0 %v2879
    %3819 = vmatprep.subr.bf16.mxu0 0
    %3820 = vmatpush2.bf16.msra.mxu0 %v2870
    %3821 = vmatprep.subr.bf16.mxu0 0
    %3822 = vmatpush2.bf16.msra.mxu0 %v2861
    %3823 = vmatprep.subr.bf16.mxu0 0
    %3824 = vmatpush2.bf16.msra.mxu0 %v2852
    %3825 = vmatprep.subr.bf16.mxu0 0
    %3826 = vmatpush2.bf16.msra.mxu0 %v2843
    %3827 = vmatprep.subr.bf16.mxu0 0
    %3828 = vmatpush2.bf16.msra.mxu0 %v2834
    %3829 = vmatprep.subr.bf16.mxu0 0
    %3830 = vmatpush2.bf16.msra.mxu0 %v2825
    %3831 = vmatprep.subr.bf16.mxu0 0
    %3832 = vmatpush2.bf16.msra.mxu0 %v2816
    %3833 = vmatprep.mubr.bf16.mxu0 %v1173
    %3834 = vmatmul.mubr.bf16.gmra.mxu0 %v1172
    %v3835 = vpop.f32.mrf.mxu0
    %v3836 = vadd.f32 %v3795, %v3835
    %v3837 = vpop.f32.mrf.mxu0
    %v3838 = vpop.f32.mrf.mxu0
    %v3839 = vadd.f32 %v3798, %v3838
    %v3840 = vpop.f32.mrf.mxu0
    %3841 = vdwg.mxu0
    %3842 = vmatprep.subr.bf16.mxu0 0
    %3843 = vmatpush1.bf16.msra.mxu0 0
    %3844 = vmatprep.subr.bf16.mxu0 0
    %3845 = vmatpush1.bf16.msra.mxu0 0
    %3846 = vmatprep.subr.bf16.mxu0 0
    %3847 = vmatpush1.bf16.msra.mxu0 0
    %3848 = vmatprep.subr.bf16.mxu0 0
    %3849 = vmatpush1.bf16.msra.mxu0 0
    %3850 = vmatprep.subr.bf16.mxu0 0
    %3851 = vmatpush1.bf16.msra.mxu0 %v2915
    %3852 = vmatprep.subr.bf16.mxu0 0
    %3853 = vmatpush1.bf16.msra.mxu0 %v2906
    %3854 = vmatprep.subr.bf16.mxu0 0
    %3855 = vmatpush1.bf16.msra.mxu0 %v2897
    %3856 = vmatprep.subr.bf16.mxu0 0
    %3857 = vmatpush1.bf16.msra.mxu0 %v2888
    %3858 = vmatprep.subr.bf16.mxu0 0
    %3859 = vmatpush2.bf16.msra.mxu0 0
    %3860 = vmatprep.subr.bf16.mxu0 0
    %3861 = vmatpush2.bf16.msra.mxu0 0
    %3862 = vmatprep.subr.bf16.mxu0 0
    %3863 = vmatpush2.bf16.msra.mxu0 0
    %3864 = vmatprep.subr.bf16.mxu0 0
    %3865 = vmatpush2.bf16.msra.mxu0 0
    %3866 = vmatprep.subr.bf16.mxu0 0
    %3867 = vmatpush2.bf16.msra.mxu0 0
    %3868 = vmatprep.subr.bf16.mxu0 0
    %3869 = vmatpush2.bf16.msra.mxu0 0
    %3870 = vmatprep.subr.bf16.mxu0 0
    %3871 = vmatpush2.bf16.msra.mxu0 0
    %3872 = vmatprep.subr.bf16.mxu0 0
    %3873 = vmatpush2.bf16.msra.mxu0 0
    %3874 = vmatprep.mubr.bf16.mxu0 0
    %3875 = vmatmul.mubr.bf16.gmra.mxu0 %v3242
    %v3876 = vpop.f32.mrf.mxu0
    %v3877 = vadd.f32 %v3836, %v3876
    %v3878 = vpop.f32.mrf.mxu0
    %v3879 = vpop.f32.mrf.mxu0
    %v3880 = vadd.f32 %v3839, %v3879
    %v3881 = vpop.f32.mrf.mxu0
    %3882 = vdwg.mxu0
    %v3883 = vmax.f32 %v3365, 0.0
    %v3884 = vmax.f32 %v3367, 0.0
    %v3885 = vmax.f32 %v3494, 0.0
    %v3886 = vmax.f32 %v3496, 0.0
    %v3887 = vmax.f32 %v3623, 0.0
    %v3888 = vmax.f32 %v3625, 0.0
    %v3889 = vmax.f32 %v3752, 0.0
    %v3890 = vmax.f32 %v3754, 0.0
    %v3891 = vmax.f32 %v3877, 0.0
    %v3892 = vmax.f32 %v3369, 0.0
    %v3893 = vmax.f32 %v3371, 0.0
    %v3894 = vmax.f32 %v3498, 0.0
    %v3895 = vmax.f32 %v3500, 0.0
    %v3896 = vmax.f32 %v3627, 0.0
    %v3897 = vmax.f32 %v3629, 0.0
    %v3898 = vmax.f32 %v3756, 0.0
    %v3899 = vmax.f32 %v3758, 0.0
    %v3900 = vmax.f32 %v3880, 0.0
    %v3901 = vpack.c.bf16 %v3892, %v3883
    %v3902 = vpack.c.bf16 %v3893, %v3884
    %v3903 = vpack.c.bf16 %v3894, %v3885
    %v3904 = vpack.c.bf16 %v3895, %v3886
    %v3905 = vpack.c.bf16 %v3896, %v3887
    %v3906 = vpack.c.bf16 %v3897, %v3888
    %v3907 = vpack.c.bf16 %v3898, %v3889
    %v3908 = vpack.c.bf16 %v3899, %v3890
    %v3909 = vpack.c.bf16 %v3900, %v3891
    %v3910 = vld [vmem:[%s7] sm:$0xf]
    %v3911 = vld [vmem:[%s7 + $0x4] sm:$0xf]
    %v3912 = vld [vmem:[%s7 + $0x8] sm:$0xf]
    %v3913 = vld [vmem:[%s7 + $0xc] sm:$0xf]
    %v3914 = vld [vmem:[%s7 + $0x10] sm:$0xf]
    %v3915 = vld [vmem:[%s7 + $0x14] sm:$0xf]
    %v3916 = vld [vmem:[%s7 + $0x18] sm:$0xf]
    %v3917 = vld [vmem:[%s7 + $0x1c] sm:$0xf]
    %v3918 = vld [vmem:[%s7 + $0x20] sm:$0xf]
    %v3919 = vld [vmem:[%s7 + $0x24] sm:$0xf]
    %v3920 = vld [vmem:[%s7 + $0x28] sm:$0xf]
    %v3921 = vld [vmem:[%s7 + $0x2c] sm:$0xf]
    %v3922 = vld [vmem:[%s7 + $0x30] sm:$0xf]
    %v3923 = vld [vmem:[%s7 + $0x34] sm:$0xf]
    %v3924 = vld [vmem:[%s7 + $0x38] sm:$0xf]
    %v3925 = vld [vmem:[%s7 + $0x3c] sm:$0xf]
    %v3926 = vld [vmem:[%s7 + $0x40] sm:$0xf]
    %v3927 = vld [vmem:[%s7 + $0x44] sm:$0xf]
    %v3928 = vld [vmem:[%s7 + $0x48] sm:$0xf]
    %v3929 = vld [vmem:[%s7 + $0x4c] sm:$0xf]
    %v3930 = vld [vmem:[%s7 + $0x50] sm:$0xf]
    %v3931 = vld [vmem:[%s7 + $0x54] sm:$0xf]
    %v3932 = vld [vmem:[%s7 + $0x58] sm:$0xf]
    %v3933 = vld [vmem:[%s7 + $0x5c] sm:$0xf]
    %v3934 = vld [vmem:[%s7 + $0x60] sm:$0xf]
    %v3935 = vld [vmem:[%s7 + $0x64] sm:$0xf]
    %v3936 = vld [vmem:[%s7 + $0x68] sm:$0xf]
    %v3937 = vld [vmem:[%s7 + $0x6c] sm:$0xf]
    %v3938 = vld [vmem:[%s7 + $0x70] sm:$0xf]
    %v3939 = vld [vmem:[%s7 + $0x74] sm:$0xf]
    %v3940 = vld [vmem:[%s7 + $0x78] sm:$0xf]
    %v3941 = vld [vmem:[%s7 + $0x7c] sm:$0xf]
    %v3942 = vld [vmem:[%s7 + $0x80] sm:$0xf]
    %v3943 = vld [vmem:[%s7 + $0x84] sm:$0xf]
    %v3944 = vld [vmem:[%s7 + $0x88] sm:$0xf]
    %v3945 = vld [vmem:[%s7 + $0x8c] sm:$0xf]
    %v3946 = vld [vmem:[%s7 + $0x90] sm:$0xf]
    %v3947 = vld [vmem:[%s7 + $0x94] sm:$0xf]
    %v3948 = vld [vmem:[%s7 + $0x98] sm:$0xf]
    %v3949 = vld [vmem:[%s7 + $0x9c] sm:$0xf]
    %v3950 = vld [vmem:[%s7 + $0xa0] sm:$0xf]
    %v3951 = vld [vmem:[%s7 + $0xa4] sm:$0xf]
    %v3952 = vld [vmem:[%s7 + $0xa8] sm:$0xf]
    %v3953 = vld [vmem:[%s7 + $0xac] sm:$0xf]
    %v3954 = vld [vmem:[%s7 + $0xb0] sm:$0xf]
    %v3955 = vld [vmem:[%s7 + $0xb4] sm:$0xf]
    %v3956 = vld [vmem:[%s7 + $0xb8] sm:$0xf]
    %v3957 = vld [vmem:[%s7 + $0xbc] sm:$0xf]
    %v3958 = vld [vmem:[%s7 + $0xc0] sm:$0xf]
    %v3959 = vld [vmem:[%s7 + $0xc4] sm:$0xf]
    %v3960 = vld [vmem:[%s7 + $0xc8] sm:$0xf]
    %v3961 = vld [vmem:[%s7 + $0xcc] sm:$0xf]
    %v3962 = vld [vmem:[%s7 + $0xd0] sm:$0xf]
    %v3963 = vld [vmem:[%s7 + $0xd4] sm:$0xf]
    %v3964 = vld [vmem:[%s7 + $0xd8] sm:$0xf]
    %v3965 = vld [vmem:[%s7 + $0xdc] sm:$0xf]
    %v3966 = vld [vmem:[%s7 + $0xe0] sm:$0xf]
    %v3967 = vld [vmem:[%s7 + $0xe4] sm:$0xf]
    %v3968 = vld [vmem:[%s7 + $0xe8] sm:$0xf]
    %v3969 = vld [vmem:[%s7 + $0xec] sm:$0xf]
    %v3970 = vld [vmem:[%s7 + $0xf0] sm:$0xf]
    %v3971 = vld [vmem:[%s7 + $0xf4] sm:$0xf]
    %v3972 = vld [vmem:[%s7 + $0xf8] sm:$0xf]
    %v3973 = vld [vmem:[%s7 + $0xfc] sm:$0xf]
    %v3974 = vld [vmem:[%s7 + $0x100] sm:$0xf]
    %v3975 = vld [vmem:[%s7 + $0x104] sm:$0xf]
    %v3976 = vld [vmem:[%s7 + $0x108] sm:$0xf]
    %v3977 = vld [vmem:[%s7 + $0x10c] sm:$0xf]
    %v3978 = vld [vmem:[%s7 + $0x110] sm:$0xf]
    %v3979 = vld [vmem:[%s7 + $0x114] sm:$0xf]
    %v3980 = vld [vmem:[%s7 + $0x118] sm:$0xf]
    %v3981 = vld [vmem:[%s7 + $0x11c] sm:$0xf]
    %v3982 = vld [vmem:[%s7 + $0x120] sm:$0xf]
    %v3983 = vld [vmem:[%s7 + $0x124] sm:$0xf]
    %v3984 = vld [vmem:[%s7 + $0x128] sm:$0xf]
    %v3985 = vld [vmem:[%s7 + $0x12c] sm:$0xf]
    %v3986 = vld [vmem:[%s7 + $0x130] sm:$0xf]
    %v3987 = vld [vmem:[%s7 + $0x134] sm:$0xf]
    %v3988 = vld [vmem:[%s7 + $0x138] sm:$0xf]
    %v3989 = vld [vmem:[%s7 + $0x13c] sm:$0xf]
    %v3990 = vld [vmem:[%s7 + $0x140] sm:$0xf]
    %v3991 = vld [vmem:[%s7 + $0x144] sm:$0xf]
    %v3992 = vld [vmem:[%s7 + $0x148] sm:$0xf]
    %v3993 = vld [vmem:[%s7 + $0x14c] sm:$0xf]
    %v3994 = vld [vmem:[%s7 + $0x150] sm:$0xf]
    %v3995 = vld [vmem:[%s7 + $0x154] sm:$0xf]
    %v3996 = vld [vmem:[%s7 + $0x158] sm:$0xf]
    %v3997 = vld [vmem:[%s7 + $0x15c] sm:$0xf]
    %v3998 = vld [vmem:[%s7 + $0x160] sm:$0xf]
    %v3999 = vld [vmem:[%s7 + $0x164] sm:$0xf]
    %v4000 = vld [vmem:[%s7 + $0x168] sm:$0xf]
    %v4001 = vld [vmem:[%s7 + $0x16c] sm:$0xf]
    %v4002 = vld [vmem:[%s7 + $0x170] sm:$0xf]
    %v4003 = vld [vmem:[%s7 + $0x174] sm:$0xf]
    %v4004 = vld [vmem:[%s7 + $0x178] sm:$0xf]
    %v4005 = vld [vmem:[%s7 + $0x17c] sm:$0xf]
    %v4006 = vld [vmem:[%s7 + $0x180] sm:$0xf]
    %v4007 = vld [vmem:[%s7 + $0x184] sm:$0xf]
    %v4008 = vld [vmem:[%s7 + $0x188] sm:$0xf]
    %v4009 = vld [vmem:[%s7 + $0x18c] sm:$0xf]
    %v4010 = vld [vmem:[%s7 + $0x190] sm:$0xf]
    %v4011 = vld [vmem:[%s7 + $0x194] sm:$0xf]
    %v4012 = vld [vmem:[%s7 + $0x198] sm:$0xf]
    %v4013 = vld [vmem:[%s7 + $0x19c] sm:$0xf]
    %v4014 = vld [vmem:[%s7 + $0x1a0] sm:$0xf]
    %v4015 = vld [vmem:[%s7 + $0x1a4] sm:$0xf]
    %v4016 = vld [vmem:[%s7 + $0x1a8] sm:$0xf]
    %v4017 = vld [vmem:[%s7 + $0x1ac] sm:$0xf]
    %v4018 = vld [vmem:[%s7 + $0x1b0] sm:$0xf]
    %v4019 = vld [vmem:[%s7 + $0x1b4] sm:$0xf]
    %v4020 = vld [vmem:[%s7 + $0x1b8] sm:$0xf]
    %v4021 = vld [vmem:[%s7 + $0x1bc] sm:$0xf]
    %v4022 = vld [vmem:[%s7 + $0x1c0] sm:$0xf]
    %v4023 = vld [vmem:[%s7 + $0x1c4] sm:$0xf]
    %v4024 = vld [vmem:[%s7 + $0x1c8] sm:$0xf]
    %v4025 = vld [vmem:[%s7 + $0x1cc] sm:$0xf]
    %v4026 = vld [vmem:[%s7 + $0x1d0] sm:$0xf]
    %v4027 = vld [vmem:[%s7 + $0x1d4] sm:$0xf]
    %v4028 = vld [vmem:[%s7 + $0x1d8] sm:$0xf]
    %v4029 = vld [vmem:[%s7 + $0x1dc] sm:$0xf]
    %v4030 = vld [vmem:[%s7 + $0x1e0] sm:$0xf]
    %v4031 = vld [vmem:[%s7 + $0x1e4] sm:$0xf]
    %v4032 = vld [vmem:[%s7 + $0x1e8] sm:$0xf]
    %v4033 = vld [vmem:[%s7 + $0x1ec] sm:$0xf]
    %v4034 = vld [vmem:[%s7 + $0x1f0] sm:$0xf]
    %v4035 = vld [vmem:[%s7 + $0x1f4] sm:$0xf]
    %v4036 = vld [vmem:[%s7 + $0x1f8] sm:$0xf]
    %v4037 = vld [vmem:[%s7 + $0x1fc] sm:$0xf]
    %v4038 = vld [vmem:[%s7 + $0x200] sm:$0xf]
    %v4039 = vld [vmem:[%s7 + $0x204] sm:$0xf]
    %v4040 = vld [vmem:[%s7 + $0x208] sm:$0xf]
    %v4041 = vld [vmem:[%s7 + $0x20c] sm:$0xf]
    %v4042 = vld [vmem:[%s7 + $0x210] sm:$0xf]
    %v4043 = vld [vmem:[%s7 + $0x214] sm:$0xf]
    %v4044 = vld [vmem:[%s7 + $0x218] sm:$0xf]
    %v4045 = vld [vmem:[%s7 + $0x21c] sm:$0xf]
    %v4046 = vld [vmem:[%s7 + $0x220] sm:$0xf]
    %v4047 = vld [vmem:[%s7 + $0x224] sm:$0xf]
    %v4048 = vld [vmem:[%s7 + $0x228] sm:$0xf]
    %v4049 = vld [vmem:[%s7 + $0x22c] sm:$0xf]
    %v4050 = vld [vmem:[%s7 + $0x230] sm:$0xf]
    %v4051 = vld [vmem:[%s7 + $0x234] sm:$0xf]
    %v4052 = vld [vmem:[%s7 + $0x238] sm:$0xf]
    %v4053 = vld [vmem:[%s7 + $0x23c] sm:$0xf]
    %v4054 = vld [vmem:[#allocation12] sm:$0x1]
    %v4056 = vlaneseq
    %v4057 = vshrl.u32 %v4056, 7
    %v4058 = vsub.s32 0, %v4057
    %v4059 = vrot.slane %v4054, %v4058
    %v4205 = vunpack.c.l.b16 %v3910
    %v4206 = vunpack.c.l.b16 %v3911
    %v4207 = vunpack.c.l.b16 %v3912
    %v4208 = vunpack.c.l.b16 %v3913
    %v4209 = vunpack.c.l.b16 %v3914
    %v4210 = vunpack.c.l.b16 %v3915
    %v4211 = vunpack.c.l.b16 %v3916
    %v4212 = vunpack.c.l.b16 %v3917
    %v4213 = vunpack.c.l.b16 %v3918
    %v4214 = vunpack.c.l.b16 %v3919
    %v4215 = vunpack.c.l.b16 %v3920
    %v4216 = vunpack.c.l.b16 %v3921
    %v4217 = vunpack.c.l.b16 %v3922
    %v4218 = vunpack.c.l.b16 %v3923
    %v4219 = vunpack.c.l.b16 %v3924
    %v4220 = vunpack.c.l.b16 %v3925
    %v4221 = vunpack.c.l.b16 %v3926
    %v4222 = vunpack.c.l.b16 %v3927
    %v4223 = vunpack.c.l.b16 %v3928
    %v4224 = vunpack.c.l.b16 %v3929
    %v4225 = vunpack.c.l.b16 %v3930
    %v4226 = vunpack.c.l.b16 %v3931
    %v4227 = vunpack.c.l.b16 %v3932
    %v4228 = vunpack.c.l.b16 %v3933
    %v4229 = vunpack.c.l.b16 %v3934
    %v4230 = vunpack.c.l.b16 %v3935
    %v4231 = vunpack.c.l.b16 %v3936
    %v4232 = vunpack.c.l.b16 %v3937
    %v4233 = vunpack.c.l.b16 %v3938
    %v4234 = vunpack.c.l.b16 %v3939
    %v4235 = vunpack.c.l.b16 %v3940
    %v4236 = vunpack.c.l.b16 %v3941
    %v4237 = vunpack.c.l.b16 %v3942
    %v4238 = vunpack.c.l.b16 %v3943
    %v4239 = vunpack.c.l.b16 %v3944
    %v4240 = vunpack.c.l.b16 %v3945
    %v4241 = vunpack.c.l.b16 %v3946
    %v4242 = vunpack.c.l.b16 %v3947
    %v4243 = vunpack.c.l.b16 %v3948
    %v4244 = vunpack.c.l.b16 %v3949
    %v4245 = vunpack.c.l.b16 %v3950
    %v4246 = vunpack.c.l.b16 %v3951
    %v4247 = vunpack.c.l.b16 %v3952
    %v4248 = vunpack.c.l.b16 %v3953
    %v4249 = vunpack.c.l.b16 %v3954
    %v4250 = vunpack.c.l.b16 %v3955
    %v4251 = vunpack.c.l.b16 %v3956
    %v4252 = vunpack.c.l.b16 %v3957
    %v4253 = vunpack.c.l.b16 %v3958
    %v4254 = vunpack.c.l.b16 %v3959
    %v4255 = vunpack.c.l.b16 %v3960
    %v4256 = vunpack.c.l.b16 %v3961
    %v4257 = vunpack.c.l.b16 %v3962
    %v4258 = vunpack.c.l.b16 %v3963
    %v4259 = vunpack.c.l.b16 %v3964
    %v4260 = vunpack.c.l.b16 %v3965
    %v4261 = vunpack.c.l.b16 %v3966
    %v4262 = vunpack.c.l.b16 %v3967
    %v4263 = vunpack.c.l.b16 %v3968
    %v4264 = vunpack.c.l.b16 %v3969
    %v4265 = vunpack.c.l.b16 %v3970
    %v4266 = vunpack.c.l.b16 %v3971
    %v4267 = vunpack.c.l.b16 %v3972
    %v4268 = vunpack.c.l.b16 %v3973
    %v4269 = vunpack.c.l.b16 %v3974
    %v4270 = vunpack.c.l.b16 %v3975
    %v4271 = vunpack.c.l.b16 %v3976
    %v4272 = vunpack.c.l.b16 %v3977
    %v4273 = vunpack.c.l.b16 %v3978
    %v4274 = vunpack.c.l.b16 %v3979
    %v4275 = vunpack.c.l.b16 %v3980
    %v4276 = vunpack.c.l.b16 %v3981
    %v4277 = vunpack.c.l.b16 %v3982
    %v4278 = vunpack.c.l.b16 %v3983
    %v4279 = vunpack.c.l.b16 %v3984
    %v4280 = vunpack.c.l.b16 %v3985
    %v4281 = vunpack.c.l.b16 %v3986
    %v4282 = vunpack.c.l.b16 %v3987
    %v4283 = vunpack.c.l.b16 %v3988
    %v4284 = vunpack.c.l.b16 %v3989
    %v4285 = vunpack.c.l.b16 %v3990
    %v4286 = vunpack.c.l.b16 %v3991
    %v4287 = vunpack.c.l.b16 %v3992
    %v4288 = vunpack.c.l.b16 %v3993
    %v4289 = vunpack.c.l.b16 %v3994
    %v4290 = vunpack.c.l.b16 %v3995
    %v4291 = vunpack.c.l.b16 %v3996
    %v4292 = vunpack.c.l.b16 %v3997
    %v4293 = vunpack.c.l.b16 %v3998
    %v4294 = vunpack.c.l.b16 %v3999
    %v4295 = vunpack.c.l.b16 %v4000
    %v4296 = vunpack.c.l.b16 %v4001
    %v4297 = vunpack.c.l.b16 %v4002
    %v4298 = vunpack.c.l.b16 %v4003
    %v4299 = vunpack.c.l.b16 %v4004
    %v4300 = vunpack.c.l.b16 %v4005
    %v4301 = vunpack.c.l.b16 %v4006
    %v4302 = vunpack.c.l.b16 %v4007
    %v4303 = vunpack.c.l.b16 %v4008
    %v4304 = vunpack.c.l.b16 %v4009
    %v4305 = vunpack.c.l.b16 %v4010
    %v4306 = vunpack.c.l.b16 %v4011
    %v4307 = vunpack.c.l.b16 %v4012
    %v4308 = vunpack.c.l.b16 %v4013
    %v4309 = vunpack.c.l.b16 %v4014
    %v4310 = vunpack.c.l.b16 %v4015
    %v4311 = vunpack.c.l.b16 %v4016
    %v4312 = vunpack.c.l.b16 %v4017
    %v4313 = vunpack.c.l.b16 %v4018
    %v4314 = vunpack.c.l.b16 %v4019
    %v4315 = vunpack.c.l.b16 %v4020
    %v4316 = vunpack.c.l.b16 %v4021
    %v4317 = vunpack.c.l.b16 %v4022
    %v4318 = vunpack.c.l.b16 %v4023
    %v4319 = vunpack.c.l.b16 %v4024
    %v4320 = vunpack.c.l.b16 %v4025
    %v4321 = vunpack.c.l.b16 %v4026
    %v4322 = vunpack.c.l.b16 %v4027
    %v4323 = vunpack.c.l.b16 %v4028
    %v4324 = vunpack.c.l.b16 %v4029
    %v4325 = vunpack.c.l.b16 %v4030
    %v4326 = vunpack.c.l.b16 %v4031
    %v4327 = vunpack.c.l.b16 %v4032
    %v4328 = vunpack.c.l.b16 %v4033
    %v4329 = vunpack.c.l.b16 %v4034
    %v4330 = vunpack.c.l.b16 %v4035
    %v4331 = vunpack.c.l.b16 %v4036
    %v4332 = vunpack.c.l.b16 %v4037
    %v4333 = vunpack.c.l.b16 %v4038
    %v4334 = vunpack.c.l.b16 %v4039
    %v4335 = vunpack.c.l.b16 %v4040
    %v4336 = vunpack.c.l.b16 %v4041
    %v4337 = vunpack.c.l.b16 %v4042
    %v4338 = vunpack.c.l.b16 %v4043
    %v4339 = vunpack.c.l.b16 %v4044
    %v4340 = vunpack.c.l.b16 %v4045
    %v4341 = vunpack.c.l.b16 %v4046
    %v4342 = vunpack.c.l.b16 %v4047
    %v4343 = vunpack.c.l.b16 %v4048
    %v4344 = vunpack.c.l.b16 %v4049
    %v4345 = vunpack.c.l.b16 %v4050
    %v4346 = vunpack.c.l.b16 %v4051
    %v4347 = vunpack.c.l.b16 %v4052
    %v4348 = vunpack.c.l.b16 %v4053
    %v4349 = vpack.c.b16 %v4206, %v4205
    %v4350 = vpack.c.b16 %v4208, %v4207
    %v4351 = vpack.c.b16 %v4210, %v4209
    %v4352 = vpack.c.b16 %v4212, %v4211
    %v4353 = vpack.c.b16 %v4214, %v4213
    %v4354 = vpack.c.b16 %v4216, %v4215
    %v4355 = vpack.c.b16 %v4218, %v4217
    %v4356 = vpack.c.b16 %v4220, %v4219
    %v4357 = vpack.c.b16 %v4222, %v4221
    %v4358 = vpack.c.b16 %v4224, %v4223
    %v4359 = vpack.c.b16 %v4226, %v4225
    %v4360 = vpack.c.b16 %v4228, %v4227
    %v4361 = vpack.c.b16 %v4230, %v4229
    %v4362 = vpack.c.b16 %v4232, %v4231
    %v4363 = vpack.c.b16 %v4234, %v4233
    %v4364 = vpack.c.b16 %v4236, %v4235
    %v4365 = vpack.c.b16 %v4238, %v4237
    %v4366 = vpack.c.b16 %v4240, %v4239
    %v4367 = vpack.c.b16 %v4242, %v4241
    %v4368 = vpack.c.b16 %v4244, %v4243
    %v4369 = vpack.c.b16 %v4246, %v4245
    %v4370 = vpack.c.b16 %v4248, %v4247
    %v4371 = vpack.c.b16 %v4250, %v4249
    %v4372 = vpack.c.b16 %v4252, %v4251
    %v4373 = vpack.c.b16 %v4254, %v4253
    %v4374 = vpack.c.b16 %v4256, %v4255
    %v4375 = vpack.c.b16 %v4258, %v4257
    %v4376 = vpack.c.b16 %v4260, %v4259
    %v4377 = vpack.c.b16 %v4262, %v4261
    %v4378 = vpack.c.b16 %v4264, %v4263
    %v4379 = vpack.c.b16 %v4266, %v4265
    %v4380 = vpack.c.b16 %v4268, %v4267
    %v4381 = vpack.c.b16 %v4270, %v4269
    %v4382 = vpack.c.b16 %v4272, %v4271
    %v4383 = vpack.c.b16 %v4274, %v4273
    %v4384 = vpack.c.b16 %v4276, %v4275
    %v4385 = vpack.c.b16 %v4278, %v4277
    %v4386 = vpack.c.b16 %v4280, %v4279
    %v4387 = vpack.c.b16 %v4282, %v4281
    %v4388 = vpack.c.b16 %v4284, %v4283
    %v4389 = vpack.c.b16 %v4286, %v4285
    %v4390 = vpack.c.b16 %v4288, %v4287
    %v4391 = vpack.c.b16 %v4290, %v4289
    %v4392 = vpack.c.b16 %v4292, %v4291
    %v4393 = vpack.c.b16 %v4294, %v4293
    %v4394 = vpack.c.b16 %v4296, %v4295
    %v4395 = vpack.c.b16 %v4298, %v4297
    %v4396 = vpack.c.b16 %v4300, %v4299
    %v4397 = vpack.c.b16 %v4302, %v4301
    %v4398 = vpack.c.b16 %v4304, %v4303
    %v4399 = vpack.c.b16 %v4306, %v4305
    %v4400 = vpack.c.b16 %v4308, %v4307
    %v4401 = vpack.c.b16 %v4310, %v4309
    %v4402 = vpack.c.b16 %v4312, %v4311
    %v4403 = vpack.c.b16 %v4314, %v4313
    %v4404 = vpack.c.b16 %v4316, %v4315
    %v4405 = vpack.c.b16 %v4318, %v4317
    %v4406 = vpack.c.b16 %v4320, %v4319
    %v4407 = vpack.c.b16 %v4322, %v4321
    %v4408 = vpack.c.b16 %v4324, %v4323
    %v4409 = vpack.c.b16 %v4326, %v4325
    %v4410 = vpack.c.b16 %v4328, %v4327
    %v4411 = vpack.c.b16 %v4330, %v4329
    %v4412 = vpack.c.b16 %v4332, %v4331
    %v4413 = vpack.c.b16 %v4334, %v4333
    %v4414 = vpack.c.b16 %v4336, %v4335
    %v4415 = vpack.c.b16 %v4338, %v4337
    %v4416 = vpack.c.b16 %v4340, %v4339
    %v4417 = vpack.c.b16 %v4342, %v4341
    %v4418 = vpack.c.b16 %v4344, %v4343
    %v4419 = vpack.c.b16 %v4346, %v4345
    %v4420 = vpack.c.b16 %v4348, %v4347
    %4493 = vmatprep.subr.bf16.mxu0 0
    %4494 = vmatpush1.bf16.msra.mxu0 %v4356
    %4495 = vmatprep.subr.bf16.mxu0 0
    %4496 = vmatpush1.bf16.msra.mxu0 %v4355
    %4497 = vmatprep.subr.bf16.mxu0 0
    %4498 = vmatpush1.bf16.msra.mxu0 %v4354
    %4499 = vmatprep.subr.bf16.mxu0 0
    %4500 = vmatpush1.bf16.msra.mxu0 %v4353
    %4501 = vmatprep.subr.bf16.mxu0 0
    %4502 = vmatpush1.bf16.msra.mxu0 %v4352
    %4503 = vmatprep.subr.bf16.mxu0 0
    %4504 = vmatpush1.bf16.msra.mxu0 %v4351
    %4505 = vmatprep.subr.bf16.mxu0 0
    %4506 = vmatpush1.bf16.msra.mxu0 %v4350
    %4507 = vmatprep.subr.bf16.mxu0 0
    %4508 = vmatpush1.bf16.msra.mxu0 %v4349
    %4509 = vmatprep.subr.bf16.mxu0 0
    %4510 = vmatpush2.bf16.msra.mxu0 %v4364
    %4511 = vmatprep.subr.bf16.mxu0 0
    %4512 = vmatpush2.bf16.msra.mxu0 %v4363
    %4513 = vmatprep.subr.bf16.mxu0 0
    %4514 = vmatpush2.bf16.msra.mxu0 %v4362
    %4515 = vmatprep.subr.bf16.mxu0 0
    %4516 = vmatpush2.bf16.msra.mxu0 %v4361
    %4517 = vmatprep.subr.bf16.mxu0 0
    %4518 = vmatpush2.bf16.msra.mxu0 %v4360
    %4519 = vmatprep.subr.bf16.mxu0 0
    %4520 = vmatpush2.bf16.msra.mxu0 %v4359
    %4521 = vmatprep.subr.bf16.mxu0 0
    %4522 = vmatpush2.bf16.msra.mxu0 %v4358
    %4523 = vmatprep.subr.bf16.mxu0 0
    %4524 = vmatpush2.bf16.msra.mxu0 %v4357
    %4525 = vmatprep.mubr.bf16.mxu0 %v3902
    %4526 = vmatmul.mubr.bf16.gmra.mxu0 %v3901
    %v4527 = vpop.f32.mrf.mxu0
    %v4528 = vadd.f32 %v4059, %v4527
    %v4529 = vpop.f32.mrf.mxu0
    %v4530 = vpop.f32.mrf.mxu0
    %v4531 = vadd.f32 %v4059, %v4530
    %v4532 = vpop.f32.mrf.mxu0
    %4533 = vdwg.mxu0
    %4534 = vmatprep.subr.bf16.mxu0 0
    %4535 = vmatpush1.bf16.msra.mxu0 %v4372
    %4536 = vmatprep.subr.bf16.mxu0 0
    %4537 = vmatpush1.bf16.msra.mxu0 %v4371
    %4538 = vmatprep.subr.bf16.mxu0 0
    %4539 = vmatpush1.bf16.msra.mxu0 %v4370
    %4540 = vmatprep.subr.bf16.mxu0 0
    %4541 = vmatpush1.bf16.msra.mxu0 %v4369
    %4542 = vmatprep.subr.bf16.mxu0 0
    %4543 = vmatpush1.bf16.msra.mxu0 %v4368
    %4544 = vmatprep.subr.bf16.mxu0 0
    %4545 = vmatpush1.bf16.msra.mxu0 %v4367
    %4546 = vmatprep.subr.bf16.mxu0 0
    %4547 = vmatpush1.bf16.msra.mxu0 %v4366
    %4548 = vmatprep.subr.bf16.mxu0 0
    %4549 = vmatpush1.bf16.msra.mxu0 %v4365
    %4550 = vmatprep.subr.bf16.mxu0 0
    %4551 = vmatpush2.bf16.msra.mxu0 %v4380
    %4552 = vmatprep.subr.bf16.mxu0 0
    %4553 = vmatpush2.bf16.msra.mxu0 %v4379
    %4554 = vmatprep.subr.bf16.mxu0 0
    %4555 = vmatpush2.bf16.msra.mxu0 %v4378
    %4556 = vmatprep.subr.bf16.mxu0 0
    %4557 = vmatpush2.bf16.msra.mxu0 %v4377
    %4558 = vmatprep.subr.bf16.mxu0 0
    %4559 = vmatpush2.bf16.msra.mxu0 %v4376
    %4560 = vmatprep.subr.bf16.mxu0 0
    %4561 = vmatpush2.bf16.msra.mxu0 %v4375
    %4562 = vmatprep.subr.bf16.mxu0 0
    %4563 = vmatpush2.bf16.msra.mxu0 %v4374
    %4564 = vmatprep.subr.bf16.mxu0 0
    %4565 = vmatpush2.bf16.msra.mxu0 %v4373
    %4566 = vmatprep.mubr.bf16.mxu0 %v3904
    %4567 = vmatmul.mubr.bf16.gmra.mxu0 %v3903
    %v4568 = vpop.f32.mrf.mxu0
    %v4569 = vadd.f32 %v4528, %v4568
    %v4570 = vpop.f32.mrf.mxu0
    %v4571 = vpop.f32.mrf.mxu0
    %v4572 = vadd.f32 %v4531, %v4571
    %v4573 = vpop.f32.mrf.mxu0
    %4574 = vdwg.mxu0
    %4575 = vmatprep.subr.bf16.mxu0 0
    %4576 = vmatpush1.bf16.msra.mxu0 %v4388
    %4577 = vmatprep.subr.bf16.mxu0 0
    %4578 = vmatpush1.bf16.msra.mxu0 %v4387
    %4579 = vmatprep.subr.bf16.mxu0 0
    %4580 = vmatpush1.bf16.msra.mxu0 %v4386
    %4581 = vmatprep.subr.bf16.mxu0 0
    %4582 = vmatpush1.bf16.msra.mxu0 %v4385
    %4583 = vmatprep.subr.bf16.mxu0 0
    %4584 = vmatpush1.bf16.msra.mxu0 %v4384
    %4585 = vmatprep.subr.bf16.mxu0 0
    %4586 = vmatpush1.bf16.msra.mxu0 %v4383
    %4587 = vmatprep.subr.bf16.mxu0 0
    %4588 = vmatpush1.bf16.msra.mxu0 %v4382
    %4589 = vmatprep.subr.bf16.mxu0 0
    %4590 = vmatpush1.bf16.msra.mxu0 %v4381
    %4591 = vmatprep.subr.bf16.mxu0 0
    %4592 = vmatpush2.bf16.msra.mxu0 %v4396
    %4593 = vmatprep.subr.bf16.mxu0 0
    %4594 = vmatpush2.bf16.msra.mxu0 %v4395
    %4595 = vmatprep.subr.bf16.mxu0 0
    %4596 = vmatpush2.bf16.msra.mxu0 %v4394
    %4597 = vmatprep.subr.bf16.mxu0 0
    %4598 = vmatpush2.bf16.msra.mxu0 %v4393
    %4599 = vmatprep.subr.bf16.mxu0 0
    %4600 = vmatpush2.bf16.msra.mxu0 %v4392
    %4601 = vmatprep.subr.bf16.mxu0 0
    %4602 = vmatpush2.bf16.msra.mxu0 %v4391
    %4603 = vmatprep.subr.bf16.mxu0 0
    %4604 = vmatpush2.bf16.msra.mxu0 %v4390
    %4605 = vmatprep.subr.bf16.mxu0 0
    %4606 = vmatpush2.bf16.msra.mxu0 %v4389
    %4607 = vmatprep.mubr.bf16.mxu0 %v3906
    %4608 = vmatmul.mubr.bf16.gmra.mxu0 %v3905
    %v4609 = vpop.f32.mrf.mxu0
    %v4610 = vadd.f32 %v4569, %v4609
    %v4611 = vpop.f32.mrf.mxu0
    %v4612 = vpop.f32.mrf.mxu0
    %v4613 = vadd.f32 %v4572, %v4612
    %v4614 = vpop.f32.mrf.mxu0
    %4615 = vdwg.mxu0
    %4616 = vmatprep.subr.bf16.mxu0 0
    %4617 = vmatpush1.bf16.msra.mxu0 %v4404
    %4618 = vmatprep.subr.bf16.mxu0 0
    %4619 = vmatpush1.bf16.msra.mxu0 %v4403
    %4620 = vmatprep.subr.bf16.mxu0 0
    %4621 = vmatpush1.bf16.msra.mxu0 %v4402
    %4622 = vmatprep.subr.bf16.mxu0 0
    %4623 = vmatpush1.bf16.msra.mxu0 %v4401
    %4624 = vmatprep.subr.bf16.mxu0 0
    %4625 = vmatpush1.bf16.msra.mxu0 %v4400
    %4626 = vmatprep.subr.bf16.mxu0 0
    %4627 = vmatpush1.bf16.msra.mxu0 %v4399
    %4628 = vmatprep.subr.bf16.mxu0 0
    %4629 = vmatpush1.bf16.msra.mxu0 %v4398
    %4630 = vmatprep.subr.bf16.mxu0 0
    %4631 = vmatpush1.bf16.msra.mxu0 %v4397
    %4632 = vmatprep.subr.bf16.mxu0 0
    %4633 = vmatpush2.bf16.msra.mxu0 %v4412
    %4634 = vmatprep.subr.bf16.mxu0 0
    %4635 = vmatpush2.bf16.msra.mxu0 %v4411
    %4636 = vmatprep.subr.bf16.mxu0 0
    %4637 = vmatpush2.bf16.msra.mxu0 %v4410
    %4638 = vmatprep.subr.bf16.mxu0 0
    %4639 = vmatpush2.bf16.msra.mxu0 %v4409
    %4640 = vmatprep.subr.bf16.mxu0 0
    %4641 = vmatpush2.bf16.msra.mxu0 %v4408
    %4642 = vmatprep.subr.bf16.mxu0 0
    %4643 = vmatpush2.bf16.msra.mxu0 %v4407
    %4644 = vmatprep.subr.bf16.mxu0 0
    %4645 = vmatpush2.bf16.msra.mxu0 %v4406
    %4646 = vmatprep.subr.bf16.mxu0 0
    %4647 = vmatpush2.bf16.msra.mxu0 %v4405
    %4648 = vmatprep.mubr.bf16.mxu0 %v3908
    %4649 = vmatmul.mubr.bf16.gmra.mxu0 %v3907
    %v4650 = vpop.f32.mrf.mxu0
    %v4651 = vadd.f32 %v4610, %v4650
    %v4652 = vpop.f32.mrf.mxu0
    %v4653 = vpop.f32.mrf.mxu0
    %v4654 = vadd.f32 %v4613, %v4653
    %v4655 = vpop.f32.mrf.mxu0
    %4656 = vdwg.mxu0
    %4657 = vmatprep.subr.bf16.mxu0 0
    %4658 = vmatpush1.bf16.msra.mxu0 %v4420
    %4659 = vmatprep.subr.bf16.mxu0 0
    %4660 = vmatpush1.bf16.msra.mxu0 %v4419
    %4661 = vmatprep.subr.bf16.mxu0 0
    %4662 = vmatpush1.bf16.msra.mxu0 %v4418
    %4663 = vmatprep.subr.bf16.mxu0 0
    %4664 = vmatpush1.bf16.msra.mxu0 %v4417
    %4665 = vmatprep.subr.bf16.mxu0 0
    %4666 = vmatpush1.bf16.msra.mxu0 %v4416
    %4667 = vmatprep.subr.bf16.mxu0 0
    %4668 = vmatpush1.bf16.msra.mxu0 %v4415
    %4669 = vmatprep.subr.bf16.mxu0 0
    %4670 = vmatpush1.bf16.msra.mxu0 %v4414
    %4671 = vmatprep.subr.bf16.mxu0 0
    %4672 = vmatpush1.bf16.msra.mxu0 %v4413
    %4673 = vmatprep.subr.bf16.mxu0 0
    %4674 = vmatpush2.bf16.msra.mxu0 0
    %4675 = vmatprep.subr.bf16.mxu0 0
    %4676 = vmatpush2.bf16.msra.mxu0 0
    %4677 = vmatprep.subr.bf16.mxu0 0
    %4678 = vmatpush2.bf16.msra.mxu0 0
    %4679 = vmatprep.subr.bf16.mxu0 0
    %4680 = vmatpush2.bf16.msra.mxu0 0
    %4681 = vmatprep.subr.bf16.mxu0 0
    %4682 = vmatpush2.bf16.msra.mxu0 0
    %4683 = vmatprep.subr.bf16.mxu0 0
    %4684 = vmatpush2.bf16.msra.mxu0 0
    %4685 = vmatprep.subr.bf16.mxu0 0
    %4686 = vmatpush2.bf16.msra.mxu0 0
    %4687 = vmatprep.subr.bf16.mxu0 0
    %4688 = vmatpush2.bf16.msra.mxu0 0
    %4689 = vmatprep.mubr.bf16.mxu0 0
    %4690 = vmatmul.mubr.bf16.gmra.mxu0 %v3909
    %v4691 = vpop.f32.mrf.mxu0
    %v4692 = vadd.f32 %v4651, %v4691
    %v4693 = vpop.f32.mrf.mxu0
    %v4694 = vpop.f32.mrf.mxu0
    %v4695 = vadd.f32 %v4654, %v4694
    %v4696 = vpop.f32.mrf.mxu0
    %4697 = vdwg.mxu0
    %v4698 = vmax.f32 %v4692, 0.0
    %v4699 = vmax.f32 %v4695, 0.0
    %v4700 = vpack.c.bf16 %v4699, %v4698
    %v4701 = vld [vmem:[%s9] sm:$0xf]
    %v4702 = vld [vmem:[%s9 + $0x4] sm:$0xf]
    %v4703 = vld [vmem:[%s9 + $0x8] sm:$0xf]
    %v4704 = vld [vmem:[%s9 + $0xc] sm:$0xf]
    %v4705 = vld [vmem:[%s9 + $0x10] sm:$0xf]
    %v4706 = vld [vmem:[%s9 + $0x14] sm:$0xf]
    %v4707 = vld [vmem:[%s9 + $0x18] sm:$0xf]
    %v4708 = vld [vmem:[%s9 + $0x1c] sm:$0xf]
    %v4709 = vld [vmem:[%s9 + $0x20] sm:$0xf]
    %v4710 = vld [vmem:[#allocation13] sm:$0x1]
    %v4712 = vlaneseq
    %v4713 = vshrl.u32 %v4712, 7
    %v4714 = vsub.s32 0, %v4713
    %v4715 = vrot.slane %v4710, %v4714
    %v4726 = vunpack.c.l.b16 %v4701
    %v4727 = vunpack.c.l.b16 %v4702
    %v4728 = vunpack.c.l.b16 %v4703
    %v4729 = vunpack.c.l.b16 %v4704
    %v4730 = vunpack.c.l.b16 %v4705
    %v4731 = vunpack.c.l.b16 %v4706
    %v4732 = vunpack.c.l.b16 %v4707
    %v4733 = vunpack.c.l.b16 %v4708
    %v4734 = vunpack.c.l.b16 %v4709
    %v4735 = vpack.c.b16 %v4727, %v4726
    %v4736 = vpack.c.b16 %v4729, %v4728
    %v4737 = vpack.c.b16 %v4731, %v4730
    %v4738 = vpack.c.b16 %v4733, %v4732
    %v4739 = vpack.c.b16 %v4734, %v4734
    %vm4744 = vcmask 588800
    %v4746 = vsel %vm4744, %v4700, 0
    %vm4748 = vcmask 1043456
    %v4750 = vsel %vm4748, %v4739, 0
    %4752 = vmatprep.subr.bf16.mxu0 0
    %4753 = vmatpush1.bf16.msra.mxu0 0
    %4754 = vmatprep.subr.bf16.mxu0 0
    %4755 = vmatpush1.bf16.msra.mxu0 0
    %4756 = vmatprep.subr.bf16.mxu0 0
    %4757 = vmatpush1.bf16.msra.mxu0 0
    %4758 = vmatprep.subr.bf16.mxu0 0
    %4759 = vmatpush1.bf16.msra.mxu0 %v4750
    %4760 = vmatprep.subr.bf16.mxu0 0
    %4761 = vmatpush1.bf16.msra.mxu0 %v4738
    %4762 = vmatprep.subr.bf16.mxu0 0
    %4763 = vmatpush1.bf16.msra.mxu0 %v4737
    %4764 = vmatprep.subr.bf16.mxu0 0
    %4765 = vmatpush1.bf16.msra.mxu0 %v4736
    %4766 = vmatprep.subr.bf16.mxu0 0
    %4767 = vmatpush1.bf16.msra.mxu0 %v4735
    %4768 = vmatprep.subr.bf16.mxu0 0
    %4769 = vmatpush2.bf16.msra.mxu0 0
    %4770 = vmatprep.subr.bf16.mxu0 0
    %4771 = vmatpush2.bf16.msra.mxu0 0
    %4772 = vmatprep.subr.bf16.mxu0 0
    %4773 = vmatpush2.bf16.msra.mxu0 0
    %4774 = vmatprep.subr.bf16.mxu0 0
    %4775 = vmatpush2.bf16.msra.mxu0 0
    %4776 = vmatprep.subr.bf16.mxu0 0
    %4777 = vmatpush2.bf16.msra.mxu0 0
    %4778 = vmatprep.subr.bf16.mxu0 0
    %4779 = vmatpush2.bf16.msra.mxu0 0
    %4780 = vmatprep.subr.bf16.mxu0 0
    %4781 = vmatpush2.bf16.msra.mxu0 0
    %4782 = vmatprep.subr.bf16.mxu0 0
    %4783 = vmatpush2.bf16.msra.mxu0 0
    %4784 = vmatprep.mubr.bf16.mxu0 0
    %4785 = vmatmul.mubr.bf16.gmra.mxu0 %v4746
    %v4786 = vpop.f32.mrf.mxu0
    %v4787 = vadd.f32 %v4715, %v4786
    %v4788 = vpop.f32.mrf.mxu0
    %v4789 = vpop.f32.mrf.mxu0
    %v4790 = vadd.f32 %v4715, %v4789
    %v4791 = vpop.f32.mrf.mxu0
    %4792 = vdwg.mxu0
    %v4793 = vlaneseq
    %v4794 = vand.u32 %v4793, 127
    %vm4795 = vcmp.lt.s32.totalorder %v4794, 9
    %v4796 = vsel %vm4795, %v4787, -inf
    %v4797 = vsel %vm4795, %v4790, -inf
    %vm4798 = vcmask 130048
    %v4799 = vsel %vm4798, %v4796, -inf
    %4800 = vmax.xlane.f32.xlu0 %v4799
    %v4801 = vpop.xlane.xlu0 %4800
    %v4802 = vsel %vm4798, %v4797, -inf
    %4803 = vmax.xlane.f32.xlu0 %v4802
    %v4804 = vpop.xlane.xlu0 %4803
    %v4805 = vsub.f32 %v4796, %v4801
    %v4806 = vsub.f32 %v4797, %v4804
    %v4807 = vmul.f32 %v4805, 1.442695
    %v4808 = vpow.pop %v4807
    %v4809 = vmul.f32 %v4806, 1.442695
    %v4810 = vpow.pop %v4809
    %v4811 = vsel %vm4798, %v4808, 0.0
    %4812 = vadd.xlane.f32.xlu0 %v4811
    %v4813 = vpop.xlane.xlu0 %4812
    %v4814 = vsel %vm4798, %v4810, 0.0
    %4815 = vadd.xlane.f32.xlu0 %v4814
    %v4816 = vpop.xlane.xlu0 %4815
    %v4817 = vrcp.pop %v4813
    %v4818 = vrcp.pop %v4816
    %v4819 = vmul.f32 %v4808, %v4817
    %v4820 = vmul.f32 %v4810, %v4818
    %v4821 = vsel %vm4795, %v4819, %v4787
    %v4822 = vsel %vm4795, %v4820, %v4790
    %4823 = vst.msk [vmem:[%s11] sm:$0xff] %vm4798, %v4821
    %4824 = vst.msk [vmem:[%s11 + $0x8] sm:$0xff] %vm4798, %v4822
    // Predicated region
    $region78: #{net_forward.1} parent=1 // pred_check
      _
    $region79: #{net_forward.1} parent=1 // pred_check_branch
      %4826 = sbr.rel (0) target = $region81
    $region80: #{net_forward.1} parent=1 // pred_region
      _
    $region81: #{net_forward.1} parent=1 // pred_fallthru
      _
    // Predicated region
    $region82: #{net_forward.1} parent=1 // pred_check
      _
    $region83: #{net_forward.1} parent=1 // pred_check_branch
      %4828 = sbr.rel (0) target = $region85
    $region84: #{net_forward.1} parent=1 // pred_region
      _
    $region85: #{net_forward.1} parent=1 // pred_fallthru
      _
    %4829 = vsyncpa [#allocation3], 1
    %4830 = vsyncpa [#allocation5], 1
    %4831 = vsyncpa [#allocation8], 1
    %4832 = vsyncpa [#allocation11], 1
    %4833 = vsyncpa [#allocation14], 1

</llo_original>
